<compile_context>
chip_gen: v7x
topology: tpu7x:2x2x1
jax: 0.10.0
libtpu: 0.0.40
codegen_flags: <defaults>
</compile_context>

<pallas_src>
import math

import jax
import jax.numpy as jnp
from jax import lax
from jax.experimental import pallas as pl
from jax.experimental.pallas import tpu as pltpu

# ----------------------------------------------------------------------------
# Scaled-down stand-in for ViTConfig('microsoft/BiomedCLIP-..._vit_base_patch16_224')
# (real: hidden=768, 12 layers, 12 heads, image 224, patch 16, 196 patches).
# ----------------------------------------------------------------------------
B        = 2
IMG_C    = 3
IMG_HW   = 16
PATCH    = 4
N_PATCH  = (IMG_HW // PATCH) ** 2      # 16 patch tokens
N_CLS    = 7                           # num_cls_tokens
SEQ      = N_PATCH + N_CLS             # 23 tokens total
SEQ_PAD  = 32                          # padded token rows (sublane/MXU friendly)
D        = 128                         # hidden_size (lane-dense stand-in for 768)
HEADS    = 4                           # stand-in for 12 heads
HD       = D // HEADS                  # 32
MLP_H    = 4 * D                       # intermediate_size
N_LAYERS = 2                           # TODO(synk): real config has 12 encoder layers
CPP      = IMG_C * PATCH * PATCH       # flattened patch length (48)
CPP_PAD  = 128                         # lane-dense padded patch feature dim
LN_EPS   = 1e-12                       # ViTConfig.layer_norm_eps
NEG_INF  = -1e9


# ----------------------------------------------------------------------------
# In-kernel helpers (traced inside the Pallas kernel).
# ----------------------------------------------------------------------------
def _layernorm(x, gamma, beta, eps=LN_EPS):
    mu = jnp.mean(x, axis=-1, keepdims=True)
    var = jnp.mean(jnp.square(x - mu), axis=-1, keepdims=True)
    return (x - mu) * lax.rsqrt(var + eps) * gamma + beta


def _erf(x):
    """erf via Abramowitz-Stegun 7.1.26 (|err| < 1.5e-7): exp + VPU polynomials only."""
    s = jnp.where(x >= 0.0, 1.0, -1.0)
    ax = x * s
    t = 1.0 / (1.0 + 0.3275911 * ax)
    poly = ((((1.061405429 * t - 1.453152027) * t + 1.421413741) * t
             - 0.284496736) * t + 0.254829592) * t
    return s * (1.0 - poly * jnp.exp(-ax * ax))


def _gelu_exact(x):
    # HF ViT uses exact (erf) GELU; reproduced here to ~1e-7 without lax.erf.
    return 0.5 * x * (1.0 + _erf(x * 0.7071067811865476))


# ----------------------------------------------------------------------------
# Fused per-(image, layer) kernel.  grid = (B, N_LAYERS):
#   * batch axis "parallel" (v7x second TensorCore), layer axis "arbitrary";
#   * per-layer weights streamed via BlockSpec (DMA overlaps previous layer);
#   * the (SEQ_PAD, D) activation slab lives in the output block, which is
#     resident in VMEM across the whole layer sweep of each image.
# ----------------------------------------------------------------------------
def multicls_vit_kernel(tok_ref, add_ref, pw_ref, ln_ref,
                        wq_ref, wk_ref, wv_ref, bqkv_ref, wo_ref, bo_ref,
                        w1_ref, b1_ref, w2_ref, b2_ref, out_ref):
    layer = pl.program_id(1)

    # Patch embedding (Conv2d-as-matmul) + cls/pos/bias additive slab, once per
    # image (layer 0).  CLS and pad rows of `tok` are zero; their content comes
    # entirely from `add` (cls_token + pos for CLS rows, conv bias + pos for
    # patch rows, zeros for padding rows).
    @pl.when(layer == 0)
    def _():
        emb = jnp.dot(tok_ref[...].astype(jnp.bfloat16), pw_ref[...],
                      preferred_element_type=jnp.float32)
        out_ref[...] = emb + add_ref[...]

    x = out_ref[...]                                     # (SEQ_PAD, D) f32, resident

    # Key-padding mask built in-kernel (iota + compare on an idle VALU slot);
    # real query rows never attend to the padded rows >= SEQ.
    col = lax.broadcasted_iota(jnp.int32, (SEQ_PAD, SEQ_PAD), 1)
    kmask = jnp.where(col < SEQ, 0.0, NEG_INF)

    lnp = ln_ref[...]                                    # (4, D) f32
    y = _layernorm(x, lnp[0:1], lnp[1:2]).astype(jnp.bfloat16)

    # Multi-head self-attention with per-head weight slabs: every contraction
    # is exactly D (projections) or HD (QK^T, PV, output proj) wide -- no
    # redundant full-D per-head work and no reshapes/transposes.
    scale = 1.0 / math.sqrt(HD)
    attn = jnp.zeros((SEQ_PAD, D), jnp.float32)
    for h in range(HEADS):                               # small static unroll
        q = jnp.dot(y, wq_ref[h], preferred_element_type=jnp.float32) + bqkv_ref[0, h]
        k = jnp.dot(y, wk_ref[h], preferred_element_type=jnp.float32) + bqkv_ref[1, h]
        v = jnp.dot(y, wv_ref[h], preferred_element_type=jnp.float32) + bqkv_ref[2, h]
        s = lax.dot_general(q.astype(jnp.bfloat16), k.astype(jnp.bfloat16),
                            (((1,), (1,)), ((), ())),
                            preferred_element_type=jnp.float32) * scale + kmask
        s = s - jnp.max(s, axis=-1, keepdims=True)
        e = jnp.exp(s)
        den = jnp.sum(e, axis=-1, keepdims=True)
        r = pl.reciprocal(den, approx=True)
        r = r * (2.0 - den * r)                          # one Newton step -> ~exact
        p = (e * r).astype(jnp.bfloat16)
        ctx = jnp.dot(p, v.astype(jnp.bfloat16), preferred_element_type=jnp.float32)
        # Summing per-head ctx_h @ Wo_h over heads == concat(ctx) @ Wo.
        attn = attn + jnp.dot(ctx.astype(jnp.bfloat16), wo_ref[h],
                              preferred_element_type=jnp.float32)
    x = x + attn + bo_ref[...]

    # MLP block (pre-LN), exact GELU, bf16 matmul operands / f32 accumulate.
    y2 = _layernorm(x, lnp[2:3], lnp[3:4]).astype(jnp.bfloat16)
    hmid = _gelu_exact(jnp.dot(y2, w1_ref[...],
                               preferred_element_type=jnp.float32) + b1_ref[...])
    x = x + jnp.dot(hmid.astype(jnp.bfloat16), w2_ref[...],
                    preferred_element_type=jnp.float32) + b2_ref[...]

    out_ref[...] = x                                     # lane-dense (32, 128) store


# ----------------------------------------------------------------------------
# Plain-JAX glue (layout / constant preparation only).
# ----------------------------------------------------------------------------
def patchify(imgs, p):
    b, c, hh, ww = imgs.shape
    nh, nw = hh // p, ww // p
    x = imgs.reshape(b, c, nh, p, nw, p)
    x = x.transpose(0, 2, 4, 1, 3, 5)                    # (B, nh, nw, C, p, p)
    return x.reshape(b, nh * nw, c * p * p)


def multicls_vit_forward(pixel_values, p):
    # Patch extraction is pure layout; the conv-as-matmul itself runs in-kernel.
    patches = patchify(pixel_values, PATCH)                              # (B, N_PATCH, CPP)
    # Rows for the 7 CLS tokens and the padding rows are zero in the matmul
    # input; the feature dim is zero-padded 48 -> 128 for a lane-dense matmul.
    tok = jnp.zeros((B, SEQ_PAD, CPP_PAD), jnp.float32)
    tok = tok.at[:, N_CLS:N_CLS + N_PATCH, :CPP].set(patches)
    # TODO(synk): the reference forward applies a second .transpose(1, 2) right
    # before the CLS concat, which is shape-inconsistent with the subsequent
    # position-embedding add; the intended (B, tokens, hidden) layout is used.
    # Additive slab, passed ONCE as (SEQ_PAD, D) and shared by every batch grid
    # step: cls_token + pos for CLS rows, conv bias + pos for patch rows.
    add = jnp.zeros((SEQ_PAD, D), jnp.float32)
    add = add.at[:N_CLS].set((p["cls_tok"] + p["pos"][:, :N_CLS])[0])
    add = add.at[N_CLS:SEQ].set((p["pos"][:, N_CLS:] + p["patch_b"])[0])

    # Advisory cost estimate (helps XLA schedule around the custom call).
    per_layer_flops = (3 * 2 * SEQ_PAD * D * D            # q/k/v projections
                       + 2 * 2 * SEQ_PAD * SEQ_PAD * D    # QK^T + PV (over all heads)
                       + 2 * SEQ_PAD * D * D              # output projection
                       + 2 * 2 * SEQ_PAD * D * MLP_H)     # MLP
    flops = B * (N_LAYERS * per_layer_flops + 2 * SEQ_PAD * CPP_PAD * D)
    transcendentals = B * N_LAYERS * (HEADS * SEQ_PAD * SEQ_PAD + SEQ_PAD * MLP_H)
    w_bytes_layer = ((3 * HEADS * D * HD + HEADS * HD * D + 2 * D * MLP_H) * 2
                     + (4 * D + 3 * HEADS * HD + 2 * D + MLP_H) * 4)
    bytes_accessed = (B * N_LAYERS * w_bytes_layer
                      + B * SEQ_PAD * CPP_PAD * 4 + SEQ_PAD * D * 4
                      + CPP_PAD * D * 2 + B * SEQ_PAD * D * 4)

    out = pl.pallas_call(
        multicls_vit_kernel,
        out_shape=jax.ShapeDtypeStruct((B, SEQ_PAD, D), jnp.float32),
        grid_spec=pltpu.PrefetchScalarGridSpec(
            num_scalar_prefetch=0,
            grid=(B, N_LAYERS),
            in_specs=[
                pl.BlockSpec((None, SEQ_PAD, CPP_PAD), lambda b, l: (b, 0, 0)),     # tok
                pl.BlockSpec((SEQ_PAD, D),             lambda b, l: (0, 0)),        # add
                pl.BlockSpec((CPP_PAD, D),             lambda b, l: (0, 0)),        # patch_w
                pl.BlockSpec((None, 4, D),             lambda b, l: (l, 0, 0)),     # ln
                pl.BlockSpec((None, HEADS, D, HD),     lambda b, l: (l, 0, 0, 0)),  # wq
                pl.BlockSpec((None, HEADS, D, HD),     lambda b, l: (l, 0, 0, 0)),  # wk
                pl.BlockSpec((None, HEADS, D, HD),     lambda b, l: (l, 0, 0, 0)),  # wv
                pl.BlockSpec((None, 3, HEADS, 1, HD),  lambda b, l: (l, 0, 0, 0, 0)),  # bqkv
                pl.BlockSpec((None, HEADS, HD, D),     lambda b, l: (l, 0, 0, 0)),  # wo
                pl.BlockSpec((None, 1, D),             lambda b, l: (l, 0, 0)),     # bo
                pl.BlockSpec((None, D, MLP_H),         lambda b, l: (l, 0, 0)),     # w1
                pl.BlockSpec((None, 1, MLP_H),         lambda b, l: (l, 0, 0)),     # b1
                pl.BlockSpec((None, MLP_H, D),         lambda b, l: (l, 0, 0)),     # w2
                pl.BlockSpec((None, 1, D),             lambda b, l: (l, 0, 0)),     # b2
            ],
            out_specs=pl.BlockSpec((None, SEQ_PAD, D), lambda b, l: (b, 0, 0)),
        ),
        compiler_params=pltpu.CompilerParams(
            dimension_semantics=("parallel", "arbitrary"),
            vmem_limit_bytes=32 * 1024 * 1024,
        ),
        cost_estimate=pl.CostEstimate(flops=flops,
                                      transcendentals=transcendentals,
                                      bytes_accessed=bytes_accessed),
    )(tok, add, p["patch_w"], p["ln"],
      p["wq"], p["wk"], p["wv"], p["bqkv"], p["wo"], p["bo"],
      p["w1"], p["b1"], p["w2"], p["b2"])
    return out[:, :SEQ, :]                               # last_hidden_state (B, SEQ, D)


# ----------------------------------------------------------------------------
# Deterministic synthetic parameter init (shapes follow the module __init__;
# matmul weights stored bf16 in "x @ W" column form, per-head slabs).
# ----------------------------------------------------------------------------
def init_params(key):
    keys = iter(jax.random.split(key, 16))

    def nrm(shape, dtype=jnp.float32, scale=0.02):
        return (scale * jax.random.normal(next(keys), shape)).astype(dtype)

    p = {}
    # vit.embeddings.patch_embeddings.projection (Conv2d C->D, kernel=stride=P),
    # zero-padded along the flattened-patch axis to CPP_PAD lanes.
    pw = jnp.zeros((CPP_PAD, D), jnp.float32)
    p["patch_w"] = pw.at[:CPP].set(nrm((CPP, D))).astype(jnp.bfloat16)
    p["patch_b"] = nrm((1, 1, D))
    # self.cls_tokens, trunc_normal_(std=0.02) stand-in.
    p["cls_tok"] = nrm((1, N_CLS, D))
    # self.position_embeddings = cat([pos[:, :1].repeat(1, 7, 1), pos[:, 1:N+1]]).
    base_pos = nrm((1, N_PATCH + 1, D))
    p["pos"] = jnp.concatenate(
        [jnp.broadcast_to(base_pos[:, :1], (1, N_CLS, D)),
         base_pos[:, 1:N_PATCH + 1]], axis=1)
    # Encoder layers, stacked over the layer axis; per-head Q/K/V/O slabs.
    p["wq"] = nrm((N_LAYERS, HEADS, D, HD), jnp.bfloat16)
    p["wk"] = nrm((N_LAYERS, HEADS, D, HD), jnp.bfloat16)
    p["wv"] = nrm((N_LAYERS, HEADS, D, HD), jnp.bfloat16)
    p["bqkv"] = jnp.zeros((N_LAYERS, 3, HEADS, 1, HD), jnp.float32)
    p["wo"] = nrm((N_LAYERS, HEADS, HD, D), jnp.bfloat16)
    p["bo"] = jnp.zeros((N_LAYERS, 1, D), jnp.float32)
    ones = jnp.ones((N_LAYERS, 1, D), jnp.float32)
    zeros = jnp.zeros((N_LAYERS, 1, D), jnp.float32)
    p["ln"] = jnp.concatenate([ones, zeros, ones, zeros], axis=1)  # [g1,b1,g2,b2]
    p["w1"] = nrm((N_LAYERS, D, MLP_H), jnp.bfloat16)
    p["b1"] = jnp.zeros((N_LAYERS, 1, MLP_H), jnp.float32)
    p["w2"] = nrm((N_LAYERS, MLP_H, D), jnp.bfloat16)
    p["b2"] = jnp.zeros((N_LAYERS, 1, D), jnp.float32)
    return p


if __name__ == "__main__":
    key = jax.random.PRNGKey(0)
    k_img, k_par = jax.random.split(key)
    pixel_values = jax.random.normal(k_img, (B, IMG_C, IMG_HW, IMG_HW), dtype=jnp.float32)
    params = init_params(k_par)

    fwd = jax.jit(multicls_vit_forward)
    last_hidden_state = fwd(pixel_values, params)
    jax.block_until_ready(last_hidden_state)

    assert last_hidden_state.shape == (B, SEQ, D)
    assert bool(jnp.all(jnp.isfinite(last_hidden_state)))
    print("KERNEL_OK")
</pallas_src>

<mosaic_0001>
module attributes {stable_mosaic.version = 11 : i64} {
  func.func @multicls_vit_kernel(%arg0: i32, %arg1: i32, %arg2: memref<1x32x128xf32, #tpu.memory_space<vmem>>, %arg3: memref<32x128xf32, #tpu.memory_space<vmem>>, %arg4: memref<128x128xbf16, #tpu.memory_space<vmem>>, %arg5: memref<1x4x128xf32, #tpu.memory_space<vmem>>, %arg6: memref<1x4x128x32xbf16, #tpu.memory_space<vmem>>, %arg7: memref<1x4x128x32xbf16, #tpu.memory_space<vmem>>, %arg8: memref<1x4x128x32xbf16, #tpu.memory_space<vmem>>, %arg9: memref<1x3x4x1x32xf32, #tpu.memory_space<vmem>>, %arg10: memref<1x4x32x128xbf16, #tpu.memory_space<vmem>>, %arg11: memref<1x1x128xf32, #tpu.memory_space<vmem>>, %arg12: memref<1x128x512xbf16, #tpu.memory_space<vmem>>, %arg13: memref<1x1x512xf32, #tpu.memory_space<vmem>>, %arg14: memref<1x512x128xbf16, #tpu.memory_space<vmem>>, %arg15: memref<1x1x128xf32, #tpu.memory_space<vmem>>, %arg16: memref<1x32x128xf32, #tpu.memory_space<vmem>>) attributes {dimension_semantics = [#tpu.dimension_semantics<parallel>, #tpu.dimension_semantics<arbitrary>], iteration_bounds = array<i64: 2, 2>, scalar_prefetch = 0 : i64, scratch_operands = 0 : i64, tpu.core_type = #tpu.core_type<tc>, window_params = [{transform_indices = @transform_0, window_bounds = array<i64: 1, 32, 128>}, {pipeline_mode = #tpu.pipeline_mode<synchronous>, transform_indices = @transform_1, window_bounds = array<i64: 32, 128>}, {pipeline_mode = #tpu.pipeline_mode<synchronous>, transform_indices = @transform_2, window_bounds = array<i64: 128, 128>}, {transform_indices = @transform_3, window_bounds = array<i64: 1, 4, 128>}, {transform_indices = @transform_4, window_bounds = array<i64: 1, 4, 128, 32>}, {transform_indices = @transform_5, window_bounds = array<i64: 1, 4, 128, 32>}, {transform_indices = @transform_6, window_bounds = array<i64: 1, 4, 128, 32>}, {transform_indices = @transform_7, window_bounds = array<i64: 1, 3, 4, 1, 32>}, {transform_indices = @transform_8, window_bounds = array<i64: 1, 4, 32, 128>}, {transform_indices = @transform_9, window_bounds = array<i64: 1, 1, 128>}, {transform_indices = @transform_10, window_bounds = array<i64: 1, 128, 512>}, {transform_indices = @transform_11, window_bounds = array<i64: 1, 1, 512>}, {transform_indices = @transform_12, window_bounds = array<i64: 1, 512, 128>}, {transform_indices = @transform_13, window_bounds = array<i64: 1, 1, 128>}, {transform_indices = @transform_14, window_bounds = array<i64: 1, 32, 128>}]} {
    %c0_i32 = arith.constant 0 : i32
    %0 = arith.cmpi eq, %arg1, %c0_i32 : i32
    %1 = arith.extui %0 : i1 to i32
    %c0_i32_0 = arith.constant 0 : i32
    %2 = arith.cmpi ne, %1, %c0_i32_0 : i32
    scf.if %2 {
      %c0_215 = arith.constant 0 : index
      %c0_216 = arith.constant 0 : index
      %c0_217 = arith.constant 0 : index
      %325 = vector.load %arg2[%c0_215, %c0_216, %c0_217] : memref<1x32x128xf32, #tpu.memory_space<vmem>>, vector<1x32x128xf32>
      %326 = vector.shape_cast %325 : vector<1x32x128xf32> to vector<32x128xf32>
      %327 = arith.truncf %326 : vector<32x128xf32> to vector<32x128xbf16>
      %c0_218 = arith.constant 0 : index
      %c0_219 = arith.constant 0 : index
      %328 = vector.load %arg4[%c0_218, %c0_219] : memref<128x128xbf16, #tpu.memory_space<vmem>>, vector<128x128xbf16>
      %cst_220 = arith.constant dense<0.000000e+00> : vector<32x128xf32>
      %329 = tpu.matmul %327, %328, %cst_220 {dimension_numbers = #tpu.dot_dimension_numbers<[1], [0], [0], [1], [0, 0, 1, 1], [], []>} : vector<32x128xbf16>, vector<128x128xbf16>, vector<32x128xf32> -> vector<32x128xf32>
      %c0_221 = arith.constant 0 : index
      %c0_222 = arith.constant 0 : index
      %330 = vector.load %arg3[%c0_221, %c0_222] : memref<32x128xf32, #tpu.memory_space<vmem>>, vector<32x128xf32>
      %331 = arith.addf %329, %330 : vector<32x128xf32>
      %c0_223 = arith.constant 0 : index
      %c0_224 = arith.constant 0 : index
      %c0_225 = arith.constant 0 : index
      %332 = vector.load %arg16[%c0_223, %c0_224, %c0_225] : memref<1x32x128xf32, #tpu.memory_space<vmem>>, vector<1x32x128xf32>
      %333 = vector.shape_cast %332 : vector<1x32x128xf32> to vector<32x128xf32>
      %334 = vector.shape_cast %331 : vector<32x128xf32> to vector<1x32x128xf32>
      tpu.vector_store %arg16[%c0_223, %c0_224, %c0_225], %334 {strides = array<i32>} : memref<1x32x128xf32, #tpu.memory_space<vmem>>, vector<1x32x128xf32>,
    } else {
    }
    %c0 = arith.constant 0 : index
    %c0_1 = arith.constant 0 : index
    %c0_2 = arith.constant 0 : index
    %3 = vector.load %arg16[%c0, %c0_1, %c0_2] : memref<1x32x128xf32, #tpu.memory_space<vmem>>, vector<1x32x128xf32>
    %4 = vector.shape_cast %3 : vector<1x32x128xf32> to vector<32x128xf32>
    %5 = tpu.iota {dimensions = array<i32: 1>} : vector<32x32xi32>
    %c23_i32 = arith.constant 23 : i32
    %6 = vector.broadcast %c23_i32 : i32 to vector<32x32xi32>
    %7 = arith.cmpi slt, %5, %6 : vector<32x32xi32>
    %cst = arith.constant 0.000000e+00 : f32
    %cst_3 = arith.constant -1.000000e+09 : f32
    %8 = vector.broadcast %cst : f32 to vector<32x32xf32>
    %9 = vector.broadcast %cst_3 : f32 to vector<32x32xf32>
    %10 = arith.select %7, %8, %9 : vector<32x32xi1>, vector<32x32xf32>
    %c0_4 = arith.constant 0 : index
    %c0_5 = arith.constant 0 : index
    %c0_6 = arith.constant 0 : index
    %11 = vector.load %arg5[%c0_4, %c0_5, %c0_6] : memref<1x4x128xf32, #tpu.memory_space<vmem>>, vector<1x4x128xf32>
    %12 = vector.shape_cast %11 : vector<1x4x128xf32> to vector<4x128xf32>
    %13 = vector.extract_strided_slice %12 {offsets = [0, 0], sizes = [1, 128], strides = [1, 1]} : vector<4x128xf32> to vector<1x128xf32>
    %14 = vector.extract_strided_slice %12 {offsets = [1, 0], sizes = [1, 128], strides = [1, 1]} : vector<4x128xf32> to vector<1x128xf32>
    %cst_7 = arith.constant dense<0.000000e+00> : vector<32xf32>
    %15 = vector.multi_reduction <add>, %4, %cst_7 [1] : vector<32x128xf32> to vector<32xf32>
    %16 = vector.shape_cast %15 : vector<32xf32> to vector<32x1xf32>
    %cst_8 = arith.constant 1.280000e+02 : f32
    %17 = vector.broadcast %cst_8 : f32 to vector<32x1xf32>
    %18 = arith.divf %16, %17 : vector<32x1xf32>
    %19 = vector.broadcast %18 : vector<32x1xf32> to vector<32x128xf32>
    %20 = arith.subf %4, %19 : vector<32x128xf32>
    %21 = arith.mulf %20, %20 : vector<32x128xf32>
    %cst_9 = arith.constant dense<0.000000e+00> : vector<32xf32>
    %22 = vector.multi_reduction <add>, %21, %cst_9 [1] : vector<32x128xf32> to vector<32xf32>
    %23 = vector.shape_cast %22 : vector<32xf32> to vector<32x1xf32>
    %cst_10 = arith.constant 1.280000e+02 : f32
    %24 = vector.broadcast %cst_10 : f32 to vector<32x1xf32>
    %25 = arith.divf %23, %24 : vector<32x1xf32>
    %26 = vector.broadcast %18 : vector<32x1xf32> to vector<32x128xf32>
    %27 = arith.subf %4, %26 : vector<32x128xf32>
    %cst_11 = arith.constant 9.99999996E-13 : f32
    %28 = vector.broadcast %cst_11 : f32 to vector<32x1xf32>
    %29 = arith.addf %25, %28 : vector<32x1xf32>
    %30 = math.rsqrt %29 : vector<32x1xf32>
    %31 = vector.broadcast %30 : vector<32x1xf32> to vector<32x128xf32>
    %32 = arith.mulf %27, %31 : vector<32x128xf32>
    %33 = vector.broadcast %13 : vector<1x128xf32> to vector<32x128xf32>
    %34 = arith.mulf %32, %33 : vector<32x128xf32>
    %35 = vector.broadcast %14 : vector<1x128xf32> to vector<32x128xf32>
    %36 = arith.addf %34, %35 : vector<32x128xf32>
    %37 = arith.truncf %36 : vector<32x128xf32> to vector<32x128xbf16>
    %cst_12 = arith.constant 0.000000e+00 : f32
    %38 = vector.broadcast %cst_12 : f32 to vector<32x128xf32>
    %c0_13 = arith.constant 0 : index
    %c0_14 = arith.constant 0 : index
    %c0_15 = arith.constant 0 : index
    %c0_16 = arith.constant 0 : index
    %39 = vector.load %arg6[%c0_13, %c0_14, %c0_15, %c0_16] : memref<1x4x128x32xbf16, #tpu.memory_space<vmem>>, vector<1x1x128x32xbf16>
    %40 = vector.shape_cast %39 : vector<1x1x128x32xbf16> to vector<128x32xbf16>
    %cst_17 = arith.constant dense<0.000000e+00> : vector<32x32xf32>
    %41 = tpu.matmul %37, %40, %cst_17 {dimension_numbers = #tpu.dot_dimension_numbers<[1], [0], [0], [1], [0, 0, 1, 1], [], []>} : vector<32x128xbf16>, vector<128x32xbf16>, vector<32x32xf32> -> vector<32x32xf32>
    %c0_18 = arith.constant 0 : index
    %c0_19 = arith.constant 0 : index
    %c0_20 = arith.constant 0 : index
    %c0_21 = arith.constant 0 : index
    %c0_22 = arith.constant 0 : index
    %42 = vector.load %arg9[%c0_18, %c0_19, %c0_20, %c0_21, %c0_22] : memref<1x3x4x1x32xf32, #tpu.memory_space<vmem>>, vector<1x1x1x1x32xf32>
    %43 = vector.shape_cast %42 : vector<1x1x1x1x32xf32> to vector<1x32xf32>
    %44 = vector.broadcast %43 : vector<1x32xf32> to vector<32x32xf32>
    %45 = arith.addf %41, %44 : vector<32x32xf32>
    %c0_23 = arith.constant 0 : index
    %c0_24 = arith.constant 0 : index
    %c0_25 = arith.constant 0 : index
    %c0_26 = arith.constant 0 : index
    %46 = vector.load %arg7[%c0_23, %c0_24, %c0_25, %c0_26] : memref<1x4x128x32xbf16, #tpu.memory_space<vmem>>, vector<1x1x128x32xbf16>
    %47 = vector.shape_cast %46 : vector<1x1x128x32xbf16> to vector<128x32xbf16>
    %cst_27 = arith.constant dense<0.000000e+00> : vector<32x32xf32>
    %48 = tpu.matmul %37, %47, %cst_27 {dimension_numbers = #tpu.dot_dimension_numbers<[1], [0], [0], [1], [0, 0, 1, 1], [], []>} : vector<32x128xbf16>, vector<128x32xbf16>, vector<32x32xf32> -> vector<32x32xf32>
    %c0_28 = arith.constant 0 : index
    %c1 = arith.constant 1 : index
    %c0_29 = arith.constant 0 : index
    %c0_30 = arith.constant 0 : index
    %c0_31 = arith.constant 0 : index
    %49 = vector.load %arg9[%c0_28, %c1, %c0_29, %c0_30, %c0_31] : memref<1x3x4x1x32xf32, #tpu.memory_space<vmem>>, vector<1x1x1x1x32xf32>
    %50 = vector.shape_cast %49 : vector<1x1x1x1x32xf32> to vector<1x32xf32>
    %51 = vector.broadcast %50 : vector<1x32xf32> to vector<32x32xf32>
    %52 = arith.addf %48, %51 : vector<32x32xf32>
    %c0_32 = arith.constant 0 : index
    %c0_33 = arith.constant 0 : index
    %c0_34 = arith.constant 0 : index
    %c0_35 = arith.constant 0 : index
    %53 = vector.load %arg8[%c0_32, %c0_33, %c0_34, %c0_35] : memref<1x4x128x32xbf16, #tpu.memory_space<vmem>>, vector<1x1x128x32xbf16>
    %54 = vector.shape_cast %53 : vector<1x1x128x32xbf16> to vector<128x32xbf16>
    %cst_36 = arith.constant dense<0.000000e+00> : vector<32x32xf32>
    %55 = tpu.matmul %37, %54, %cst_36 {dimension_numbers = #tpu.dot_dimension_numbers<[1], [0], [0], [1], [0, 0, 1, 1], [], []>} : vector<32x128xbf16>, vector<128x32xbf16>, vector<32x32xf32> -> vector<32x32xf32>
    %c0_37 = arith.constant 0 : index
    %c2 = arith.constant 2 : index
    %c0_38 = arith.constant 0 : index
    %c0_39 = arith.constant 0 : index
    %c0_40 = arith.constant 0 : index
    %56 = vector.load %arg9[%c0_37, %c2, %c0_38, %c0_39, %c0_40] : memref<1x3x4x1x32xf32, #tpu.memory_space<vmem>>, vector<1x1x1x1x32xf32>
    %57 = vector.shape_cast %56 : vector<1x1x1x1x32xf32> to vector<1x32xf32>
    %58 = vector.broadcast %57 : vector<1x32xf32> to vector<32x32xf32>
    %59 = arith.addf %55, %58 : vector<32x32xf32>
    %60 = arith.truncf %45 : vector<32x32xf32> to vector<32x32xbf16>
    %61 = arith.truncf %52 : vector<32x32xf32> to vector<32x32xbf16>
    %cst_41 = arith.constant dense<0.000000e+00> : vector<32x32xf32>
    %62 = tpu.matmul %60, %61, %cst_41 {dimension_numbers = #tpu.dot_dimension_numbers<[1], [1], [0], [0], [0, 0, 1, 0], [], []>} : vector<32x32xbf16>, vector<32x32xbf16>, vector<32x32xf32> -> vector<32x32xf32>
    %cst_42 = arith.constant 0.176776692 : f32
    %63 = vector.broadcast %cst_42 : f32 to vector<32x32xf32>
    %64 = arith.mulf %62, %63 : vector<32x32xf32>
    %65 = arith.addf %64, %10 : vector<32x32xf32>
    %cst_43 = arith.constant dense<0xFF800000> : vector<32xf32>
    %66 = vector.multi_reduction <maximumf>, %65, %cst_43 [1] : vector<32x32xf32> to vector<32xf32>
    %67 = vector.shape_cast %66 : vector<32xf32> to vector<32x1xf32>
    %68 = vector.broadcast %67 : vector<32x1xf32> to vector<32x32xf32>
    %69 = arith.subf %65, %68 : vector<32x32xf32>
    %70 = math.exp %69 : vector<32x32xf32>
    %cst_44 = arith.constant dense<0.000000e+00> : vector<32xf32>
    %71 = vector.multi_reduction <add>, %70, %cst_44 [1] : vector<32x32xf32> to vector<32xf32>
    %72 = vector.shape_cast %71 : vector<32xf32> to vector<32x1xf32>
    %73 = tpu.reciprocal %72 {approx = true} : vector<32x1xf32> -> vector<32x1xf32>
    %74 = arith.mulf %72, %73 : vector<32x1xf32>
    %cst_45 = arith.constant 2.000000e+00 : f32
    %75 = vector.broadcast %cst_45 : f32 to vector<32x1xf32>
    %76 = arith.subf %75, %74 : vector<32x1xf32>
    %77 = arith.mulf %73, %76 : vector<32x1xf32>
    %78 = vector.broadcast %77 : vector<32x1xf32> to vector<32x32xf32>
    %79 = arith.mulf %70, %78 : vector<32x32xf32>
    %80 = arith.truncf %79 : vector<32x32xf32> to vector<32x32xbf16>
    %81 = arith.truncf %59 : vector<32x32xf32> to vector<32x32xbf16>
    %cst_46 = arith.constant dense<0.000000e+00> : vector<32x32xf32>
    %82 = tpu.matmul %80, %81, %cst_46 {dimension_numbers = #tpu.dot_dimension_numbers<[1], [0], [0], [1], [0, 0, 1, 1], [], []>} : vector<32x32xbf16>, vector<32x32xbf16>, vector<32x32xf32> -> vector<32x32xf32>
    %83 = arith.truncf %82 : vector<32x32xf32> to vector<32x32xbf16>
    %c0_47 = arith.constant 0 : index
    %c0_48 = arith.constant 0 : index
    %c0_49 = arith.constant 0 : index
    %c0_50 = arith.constant 0 : index
    %84 = vector.load %arg10[%c0_47, %c0_48, %c0_49, %c0_50] : memref<1x4x32x128xbf16, #tpu.memory_space<vmem>>, vector<1x1x32x128xbf16>
    %85 = vector.shape_cast %84 : vector<1x1x32x128xbf16> to vector<32x128xbf16>
    %cst_51 = arith.constant dense<0.000000e+00> : vector<32x128xf32>
    %86 = tpu.matmul %83, %85, %cst_51 {dimension_numbers = #tpu.dot_dimension_numbers<[1], [0], [0], [1], [0, 0, 1, 1], [], []>} : vector<32x32xbf16>, vector<32x128xbf16>, vector<32x128xf32> -> vector<32x128xf32>
    %87 = arith.addf %38, %86 : vector<32x128xf32>
    %c0_52 = arith.constant 0 : index
    %c1_53 = arith.constant 1 : index
    %c0_54 = arith.constant 0 : index
    %c0_55 = arith.constant 0 : index
    %88 = vector.load %arg6[%c0_52, %c1_53, %c0_54, %c0_55] : memref<1x4x128x32xbf16, #tpu.memory_space<vmem>>, vector<1x1x128x32xbf16>
    %89 = vector.shape_cast %88 : vector<1x1x128x32xbf16> to vector<128x32xbf16>
    %cst_56 = arith.constant dense<0.000000e+00> : vector<32x32xf32>
    %90 = tpu.matmul %37, %89, %cst_56 {dimension_numbers = #tpu.dot_dimension_numbers<[1], [0], [0], [1], [0, 0, 1, 1], [], []>} : vector<32x128xbf16>, vector<128x32xbf16>, vector<32x32xf32> -> vector<32x32xf32>
    %c0_57 = arith.constant 0 : index
    %c0_58 = arith.constant 0 : index
    %c1_59 = arith.constant 1 : index
    %c0_60 = arith.constant 0 : index
    %c0_61 = arith.constant 0 : index
    %91 = vector.load %arg9[%c0_57, %c0_58, %c1_59, %c0_60, %c0_61] : memref<1x3x4x1x32xf32, #tpu.memory_space<vmem>>, vector<1x1x1x1x32xf32>
    %92 = vector.shape_cast %91 : vector<1x1x1x1x32xf32> to vector<1x32xf32>
    %93 = vector.broadcast %92 : vector<1x32xf32> to vector<32x32xf32>
    %94 = arith.addf %90, %93 : vector<32x32xf32>
    %c0_62 = arith.constant 0 : index
    %c1_63 = arith.constant 1 : index
    %c0_64 = arith.constant 0 : index
    %c0_65 = arith.constant 0 : index
    %95 = vector.load %arg7[%c0_62, %c1_63, %c0_64, %c0_65] : memref<1x4x128x32xbf16, #tpu.memory_space<vmem>>, vector<1x1x128x32xbf16>
    %96 = vector.shape_cast %95 : vector<1x1x128x32xbf16> to vector<128x32xbf16>
    %cst_66 = arith.constant dense<0.000000e+00> : vector<32x32xf32>
    %97 = tpu.matmul %37, %96, %cst_66 {dimension_numbers = #tpu.dot_dimension_numbers<[1], [0], [0], [1], [0, 0, 1, 1], [], []>} : vector<32x128xbf16>, vector<128x32xbf16>, vector<32x32xf32> -> vector<32x32xf32>
    %c0_67 = arith.constant 0 : index
    %c1_68 = arith.constant 1 : index
    %c1_69 = arith.constant 1 : index
    %c0_70 = arith.constant 0 : index
    %c0_71 = arith.constant 0 : index
    %98 = vector.load %arg9[%c0_67, %c1_68, %c1_69, %c0_70, %c0_71] : memref<1x3x4x1x32xf32, #tpu.memory_space<vmem>>, vector<1x1x1x1x32xf32>
    %99 = vector.shape_cast %98 : vector<1x1x1x1x32xf32> to vector<1x32xf32>
    %100 = vector.broadcast %99 : vector<1x32xf32> to vector<32x32xf32>
    %101 = arith.addf %97, %100 : vector<32x32xf32>
    %c0_72 = arith.constant 0 : index
    %c1_73 = arith.constant 1 : index
    %c0_74 = arith.constant 0 : index
    %c0_75 = arith.constant 0 : index
    %102 = vector.load %arg8[%c0_72, %c1_73, %c0_74, %c0_75] : memref<1x4x128x32xbf16, #tpu.memory_space<vmem>>, vector<1x1x128x32xbf16>
    %103 = vector.shape_cast %102 : vector<1x1x128x32xbf16> to vector<128x32xbf16>
    %cst_76 = arith.constant dense<0.000000e+00> : vector<32x32xf32>
    %104 = tpu.matmul %37, %103, %cst_76 {dimension_numbers = #tpu.dot_dimension_numbers<[1], [0], [0], [1], [0, 0, 1, 1], [], []>} : vector<32x128xbf16>, vector<128x32xbf16>, vector<32x32xf32> -> vector<32x32xf32>
    %c0_77 = arith.constant 0 : index
    %c2_78 = arith.constant 2 : index
    %c1_79 = arith.constant 1 : index
    %c0_80 = arith.constant 0 : index
    %c0_81 = arith.constant 0 : index
    %105 = vector.load %arg9[%c0_77, %c2_78, %c1_79, %c0_80, %c0_81] : memref<1x3x4x1x32xf32, #tpu.memory_space<vmem>>, vector<1x1x1x1x32xf32>
    %106 = vector.shape_cast %105 : vector<1x1x1x1x32xf32> to vector<1x32xf32>
    %107 = vector.broadcast %106 : vector<1x32xf32> to vector<32x32xf32>
    %108 = arith.addf %104, %107 : vector<32x32xf32>
    %109 = arith.truncf %94 : vector<32x32xf32> to vector<32x32xbf16>
    %110 = arith.truncf %101 : vector<32x32xf32> to vector<32x32xbf16>
    %cst_82 = arith.constant dense<0.000000e+00> : vector<32x32xf32>
    %111 = tpu.matmul %109, %110, %cst_82 {dimension_numbers = #tpu.dot_dimension_numbers<[1], [1], [0], [0], [0, 0, 1, 0], [], []>} : vector<32x32xbf16>, vector<32x32xbf16>, vector<32x32xf32> -> vector<32x32xf32>
    %cst_83 = arith.constant 0.176776692 : f32
    %112 = vector.broadcast %cst_83 : f32 to vector<32x32xf32>
    %113 = arith.mulf %111, %112 : vector<32x32xf32>
    %114 = arith.addf %113, %10 : vector<32x32xf32>
    %cst_84 = arith.constant dense<0xFF800000> : vector<32xf32>
    %115 = vector.multi_reduction <maximumf>, %114, %cst_84 [1] : vector<32x32xf32> to vector<32xf32>
    %116 = vector.shape_cast %115 : vector<32xf32> to vector<32x1xf32>
    %117 = vector.broadcast %116 : vector<32x1xf32> to vector<32x32xf32>
    %118 = arith.subf %114, %117 : vector<32x32xf32>
    %119 = math.exp %118 : vector<32x32xf32>
    %cst_85 = arith.constant dense<0.000000e+00> : vector<32xf32>
    %120 = vector.multi_reduction <add>, %119, %cst_85 [1] : vector<32x32xf32> to vector<32xf32>
    %121 = vector.shape_cast %120 : vector<32xf32> to vector<32x1xf32>
    %122 = tpu.reciprocal %121 {approx = true} : vector<32x1xf32> -> vector<32x1xf32>
    %123 = arith.mulf %121, %122 : vector<32x1xf32>
    %cst_86 = arith.constant 2.000000e+00 : f32
    %124 = vector.broadcast %cst_86 : f32 to vector<32x1xf32>
    %125 = arith.subf %124, %123 : vector<32x1xf32>
    %126 = arith.mulf %122, %125 : vector<32x1xf32>
    %127 = vector.broadcast %126 : vector<32x1xf32> to vector<32x32xf32>
    %128 = arith.mulf %119, %127 : vector<32x32xf32>
    %129 = arith.truncf %128 : vector<32x32xf32> to vector<32x32xbf16>
    %130 = arith.truncf %108 : vector<32x32xf32> to vector<32x32xbf16>
    %cst_87 = arith.constant dense<0.000000e+00> : vector<32x32xf32>
    %131 = tpu.matmul %129, %130, %cst_87 {dimension_numbers = #tpu.dot_dimension_numbers<[1], [0], [0], [1], [0, 0, 1, 1], [], []>} : vector<32x32xbf16>, vector<32x32xbf16>, vector<32x32xf32> -> vector<32x32xf32>
    %132 = arith.truncf %131 : vector<32x32xf32> to vector<32x32xbf16>
    %c0_88 = arith.constant 0 : index
    %c1_89 = arith.constant 1 : index
    %c0_90 = arith.constant 0 : index
    %c0_91 = arith.constant 0 : index
    %133 = vector.load %arg10[%c0_88, %c1_89, %c0_90, %c0_91] : memref<1x4x32x128xbf16, #tpu.memory_space<vmem>>, vector<1x1x32x128xbf16>
    %134 = vector.shape_cast %133 : vector<1x1x32x128xbf16> to vector<32x128xbf16>
    %cst_92 = arith.constant dense<0.000000e+00> : vector<32x128xf32>
    %135 = tpu.matmul %132, %134, %cst_92 {dimension_numbers = #tpu.dot_dimension_numbers<[1], [0], [0], [1], [0, 0, 1, 1], [], []>} : vector<32x32xbf16>, vector<32x128xbf16>, vector<32x128xf32> -> vector<32x128xf32>
    %136 = arith.addf %87, %135 : vector<32x128xf32>
    %c0_93 = arith.constant 0 : index
    %c2_94 = arith.constant 2 : index
    %c0_95 = arith.constant 0 : index
    %c0_96 = arith.constant 0 : index
    %137 = vector.load %arg6[%c0_93, %c2_94, %c0_95, %c0_96] : memref<1x4x128x32xbf16, #tpu.memory_space<vmem>>, vector<1x1x128x32xbf16>
    %138 = vector.shape_cast %137 : vector<1x1x128x32xbf16> to vector<128x32xbf16>
    %cst_97 = arith.constant dense<0.000000e+00> : vector<32x32xf32>
    %139 = tpu.matmul %37, %138, %cst_97 {dimension_numbers = #tpu.dot_dimension_numbers<[1], [0], [0], [1], [0, 0, 1, 1], [], []>} : vector<32x128xbf16>, vector<128x32xbf16>, vector<32x32xf32> -> vector<32x32xf32>
    %c0_98 = arith.constant 0 : index
    %c0_99 = arith.constant 0 : index
    %c2_100 = arith.constant 2 : index
    %c0_101 = arith.constant 0 : index
    %c0_102 = arith.constant 0 : index
    %140 = vector.load %arg9[%c0_98, %c0_99, %c2_100, %c0_101, %c0_102] : memref<1x3x4x1x32xf32, #tpu.memory_space<vmem>>, vector<1x1x1x1x32xf32>
    %141 = vector.shape_cast %140 : vector<1x1x1x1x32xf32> to vector<1x32xf32>
    %142 = vector.broadcast %141 : vector<1x32xf32> to vector<32x32xf32>
    %143 = arith.addf %139, %142 : vector<32x32xf32>
    %c0_103 = arith.constant 0 : index
    %c2_104 = arith.constant 2 : index
    %c0_105 = arith.constant 0 : index
    %c0_106 = arith.constant 0 : index
    %144 = vector.load %arg7[%c0_103, %c2_104, %c0_105, %c0_106] : memref<1x4x128x32xbf16, #tpu.memory_space<vmem>>, vector<1x1x128x32xbf16>
    %145 = vector.shape_cast %144 : vector<1x1x128x32xbf16> to vector<128x32xbf16>
    %cst_107 = arith.constant dense<0.000000e+00> : vector<32x32xf32>
    %146 = tpu.matmul %37, %145, %cst_107 {dimension_numbers = #tpu.dot_dimension_numbers<[1], [0], [0], [1], [0, 0, 1, 1], [], []>} : vector<32x128xbf16>, vector<128x32xbf16>, vector<32x32xf32> -> vector<32x32xf32>
    %c0_108 = arith.constant 0 : index
    %c1_109 = arith.constant 1 : index
    %c2_110 = arith.constant 2 : index
    %c0_111 = arith.constant 0 : index
    %c0_112 = arith.constant 0 : index
    %147 = vector.load %arg9[%c0_108, %c1_109, %c2_110, %c0_111, %c0_112] : memref<1x3x4x1x32xf32, #tpu.memory_space<vmem>>, vector<1x1x1x1x32xf32>
    %148 = vector.shape_cast %147 : vector<1x1x1x1x32xf32> to vector<1x32xf32>
    %149 = vector.broadcast %148 : vector<1x32xf32> to vector<32x32xf32>
    %150 = arith.addf %146, %149 : vector<32x32xf32>
    %c0_113 = arith.constant 0 : index
    %c2_114 = arith.constant 2 : index
    %c0_115 = arith.constant 0 : index
    %c0_116 = arith.constant 0 : index
    %151 = vector.load %arg8[%c0_113, %c2_114, %c0_115, %c0_116] : memref<1x4x128x32xbf16, #tpu.memory_space<vmem>>, vector<1x1x128x32xbf16>
    %152 = vector.shape_cast %151 : vector<1x1x128x32xbf16> to vector<128x32xbf16>
    %cst_117 = arith.constant dense<0.000000e+00> : vector<32x32xf32>
    %153 = tpu.matmul %37, %152, %cst_117 {dimension_numbers = #tpu.dot_dimension_numbers<[1], [0], [0], [1], [0, 0, 1, 1], [], []>} : vector<32x128xbf16>, vector<128x32xbf16>, vector<32x32xf32> -> vector<32x32xf32>
    %c0_118 = arith.constant 0 : index
    %c2_119 = arith.constant 2 : index
    %c2_120 = arith.constant 2 : index
    %c0_121 = arith.constant 0 : index
    %c0_122 = arith.constant 0 : index
    %154 = vector.load %arg9[%c0_118, %c2_119, %c2_120, %c0_121, %c0_122] : memref<1x3x4x1x32xf32, #tpu.memory_space<vmem>>, vector<1x1x1x1x32xf32>
    %155 = vector.shape_cast %154 : vector<1x1x1x1x32xf32> to vector<1x32xf32>
    %156 = vector.broadcast %155 : vector<1x32xf32> to vector<32x32xf32>
    %157 = arith.addf %153, %156 : vector<32x32xf32>
    %158 = arith.truncf %143 : vector<32x32xf32> to vector<32x32xbf16>
    %159 = arith.truncf %150 : vector<32x32xf32> to vector<32x32xbf16>
    %cst_123 = arith.constant dense<0.000000e+00> : vector<32x32xf32>
    %160 = tpu.matmul %158, %159, %cst_123 {dimension_numbers = #tpu.dot_dimension_numbers<[1], [1], [0], [0], [0, 0, 1, 0], [], []>} : vector<32x32xbf16>, vector<32x32xbf16>, vector<32x32xf32> -> vector<32x32xf32>
    %cst_124 = arith.constant 0.176776692 : f32
    %161 = vector.broadcast %cst_124 : f32 to vector<32x32xf32>
    %162 = arith.mulf %160, %161 : vector<32x32xf32>
    %163 = arith.addf %162, %10 : vector<32x32xf32>
    %cst_125 = arith.constant dense<0xFF800000> : vector<32xf32>
    %164 = vector.multi_reduction <maximumf>, %163, %cst_125 [1] : vector<32x32xf32> to vector<32xf32>
    %165 = vector.shape_cast %164 : vector<32xf32> to vector<32x1xf32>
    %166 = vector.broadcast %165 : vector<32x1xf32> to vector<32x32xf32>
    %167 = arith.subf %163, %166 : vector<32x32xf32>
    %168 = math.exp %167 : vector<32x32xf32>
    %cst_126 = arith.constant dense<0.000000e+00> : vector<32xf32>
    %169 = vector.multi_reduction <add>, %168, %cst_126 [1] : vector<32x32xf32> to vector<32xf32>
    %170 = vector.shape_cast %169 : vector<32xf32> to vector<32x1xf32>
    %171 = tpu.reciprocal %170 {approx = true} : vector<32x1xf32> -> vector<32x1xf32>
    %172 = arith.mulf %170, %171 : vector<32x1xf32>
    %cst_127 = arith.constant 2.000000e+00 : f32
    %173 = vector.broadcast %cst_127 : f32 to vector<32x1xf32>
    %174 = arith.subf %173, %172 : vector<32x1xf32>
    %175 = arith.mulf %171, %174 : vector<32x1xf32>
    %176 = vector.broadcast %175 : vector<32x1xf32> to vector<32x32xf32>
    %177 = arith.mulf %168, %176 : vector<32x32xf32>
    %178 = arith.truncf %177 : vector<32x32xf32> to vector<32x32xbf16>
    %179 = arith.truncf %157 : vector<32x32xf32> to vector<32x32xbf16>
    %cst_128 = arith.constant dense<0.000000e+00> : vector<32x32xf32>
    %180 = tpu.matmul %178, %179, %cst_128 {dimension_numbers = #tpu.dot_dimension_numbers<[1], [0], [0], [1], [0, 0, 1, 1], [], []>} : vector<32x32xbf16>, vector<32x32xbf16>, vector<32x32xf32> -> vector<32x32xf32>
    %181 = arith.truncf %180 : vector<32x32xf32> to vector<32x32xbf16>
    %c0_129 = arith.constant 0 : index
    %c2_130 = arith.constant 2 : index
    %c0_131 = arith.constant 0 : index
    %c0_132 = arith.constant 0 : index
    %182 = vector.load %arg10[%c0_129, %c2_130, %c0_131, %c0_132] : memref<1x4x32x128xbf16, #tpu.memory_space<vmem>>, vector<1x1x32x128xbf16>
    %183 = vector.shape_cast %182 : vector<1x1x32x128xbf16> to vector<32x128xbf16>
    %cst_133 = arith.constant dense<0.000000e+00> : vector<32x128xf32>
    %184 = tpu.matmul %181, %183, %cst_133 {dimension_numbers = #tpu.dot_dimension_numbers<[1], [0], [0], [1], [0, 0, 1, 1], [], []>} : vector<32x32xbf16>, vector<32x128xbf16>, vector<32x128xf32> -> vector<32x128xf32>
    %185 = arith.addf %136, %184 : vector<32x128xf32>
    %c0_134 = arith.constant 0 : index
    %c3 = arith.constant 3 : index
    %c0_135 = arith.constant 0 : index
    %c0_136 = arith.constant 0 : index
    %186 = vector.load %arg6[%c0_134, %c3, %c0_135, %c0_136] : memref<1x4x128x32xbf16, #tpu.memory_space<vmem>>, vector<1x1x128x32xbf16>
    %187 = vector.shape_cast %186 : vector<1x1x128x32xbf16> to vector<128x32xbf16>
    %cst_137 = arith.constant dense<0.000000e+00> : vector<32x32xf32>
    %188 = tpu.matmul %37, %187, %cst_137 {dimension_numbers = #tpu.dot_dimension_numbers<[1], [0], [0], [1], [0, 0, 1, 1], [], []>} : vector<32x128xbf16>, vector<128x32xbf16>, vector<32x32xf32> -> vector<32x32xf32>
    %c0_138 = arith.constant 0 : index
    %c0_139 = arith.constant 0 : index
    %c3_140 = arith.constant 3 : index
    %c0_141 = arith.constant 0 : index
    %c0_142 = arith.constant 0 : index
    %189 = vector.load %arg9[%c0_138, %c0_139, %c3_140, %c0_141, %c0_142] : memref<1x3x4x1x32xf32, #tpu.memory_space<vmem>>, vector<1x1x1x1x32xf32>
    %190 = vector.shape_cast %189 : vector<1x1x1x1x32xf32> to vector<1x32xf32>
    %191 = vector.broadcast %190 : vector<1x32xf32> to vector<32x32xf32>
    %192 = arith.addf %188, %191 : vector<32x32xf32>
    %c0_143 = arith.constant 0 : index
    %c3_144 = arith.constant 3 : index
    %c0_145 = arith.constant 0 : index
    %c0_146 = arith.constant 0 : index
    %193 = vector.load %arg7[%c0_143, %c3_144, %c0_145, %c0_146] : memref<1x4x128x32xbf16, #tpu.memory_space<vmem>>, vector<1x1x128x32xbf16>
    %194 = vector.shape_cast %193 : vector<1x1x128x32xbf16> to vector<128x32xbf16>
    %cst_147 = arith.constant dense<0.000000e+00> : vector<32x32xf32>
    %195 = tpu.matmul %37, %194, %cst_147 {dimension_numbers = #tpu.dot_dimension_numbers<[1], [0], [0], [1], [0, 0, 1, 1], [], []>} : vector<32x128xbf16>, vector<128x32xbf16>, vector<32x32xf32> -> vector<32x32xf32>
    %c0_148 = arith.constant 0 : index
    %c1_149 = arith.constant 1 : index
    %c3_150 = arith.constant 3 : index
    %c0_151 = arith.constant 0 : index
    %c0_152 = arith.constant 0 : index
    %196 = vector.load %arg9[%c0_148, %c1_149, %c3_150, %c0_151, %c0_152] : memref<1x3x4x1x32xf32, #tpu.memory_space<vmem>>, vector<1x1x1x1x32xf32>
    %197 = vector.shape_cast %196 : vector<1x1x1x1x32xf32> to vector<1x32xf32>
    %198 = vector.broadcast %197 : vector<1x32xf32> to vector<32x32xf32>
    %199 = arith.addf %195, %198 : vector<32x32xf32>
    %c0_153 = arith.constant 0 : index
    %c3_154 = arith.constant 3 : index
    %c0_155 = arith.constant 0 : index
    %c0_156 = arith.constant 0 : index
    %200 = vector.load %arg8[%c0_153, %c3_154, %c0_155, %c0_156] : memref<1x4x128x32xbf16, #tpu.memory_space<vmem>>, vector<1x1x128x32xbf16>
    %201 = vector.shape_cast %200 : vector<1x1x128x32xbf16> to vector<128x32xbf16>
    %cst_157 = arith.constant dense<0.000000e+00> : vector<32x32xf32>
    %202 = tpu.matmul %37, %201, %cst_157 {dimension_numbers = #tpu.dot_dimension_numbers<[1], [0], [0], [1], [0, 0, 1, 1], [], []>} : vector<32x128xbf16>, vector<128x32xbf16>, vector<32x32xf32> -> vector<32x32xf32>
    %c0_158 = arith.constant 0 : index
    %c2_159 = arith.constant 2 : index
    %c3_160 = arith.constant 3 : index
    %c0_161 = arith.constant 0 : index
    %c0_162 = arith.constant 0 : index
    %203 = vector.load %arg9[%c0_158, %c2_159, %c3_160, %c0_161, %c0_162] : memref<1x3x4x1x32xf32, #tpu.memory_space<vmem>>, vector<1x1x1x1x32xf32>
    %204 = vector.shape_cast %203 : vector<1x1x1x1x32xf32> to vector<1x32xf32>
    %205 = vector.broadcast %204 : vector<1x32xf32> to vector<32x32xf32>
    %206 = arith.addf %202, %205 : vector<32x32xf32>
    %207 = arith.truncf %192 : vector<32x32xf32> to vector<32x32xbf16>
    %208 = arith.truncf %199 : vector<32x32xf32> to vector<32x32xbf16>
    %cst_163 = arith.constant dense<0.000000e+00> : vector<32x32xf32>
    %209 = tpu.matmul %207, %208, %cst_163 {dimension_numbers = #tpu.dot_dimension_numbers<[1], [1], [0], [0], [0, 0, 1, 0], [], []>} : vector<32x32xbf16>, vector<32x32xbf16>, vector<32x32xf32> -> vector<32x32xf32>
    %cst_164 = arith.constant 0.176776692 : f32
    %210 = vector.broadcast %cst_164 : f32 to vector<32x32xf32>
    %211 = arith.mulf %209, %210 : vector<32x32xf32>
    %212 = arith.addf %211, %10 : vector<32x32xf32>
    %cst_165 = arith.constant dense<0xFF800000> : vector<32xf32>
    %213 = vector.multi_reduction <maximumf>, %212, %cst_165 [1] : vector<32x32xf32> to vector<32xf32>
    %214 = vector.shape_cast %213 : vector<32xf32> to vector<32x1xf32>
    %215 = vector.broadcast %214 : vector<32x1xf32> to vector<32x32xf32>
    %216 = arith.subf %212, %215 : vector<32x32xf32>
    %217 = math.exp %216 : vector<32x32xf32>
    %cst_166 = arith.constant dense<0.000000e+00> : vector<32xf32>
    %218 = vector.multi_reduction <add>, %217, %cst_166 [1] : vector<32x32xf32> to vector<32xf32>
    %219 = vector.shape_cast %218 : vector<32xf32> to vector<32x1xf32>
    %220 = tpu.reciprocal %219 {approx = true} : vector<32x1xf32> -> vector<32x1xf32>
    %221 = arith.mulf %219, %220 : vector<32x1xf32>
    %cst_167 = arith.constant 2.000000e+00 : f32
    %222 = vector.broadcast %cst_167 : f32 to vector<32x1xf32>
    %223 = arith.subf %222, %221 : vector<32x1xf32>
    %224 = arith.mulf %220, %223 : vector<32x1xf32>
    %225 = vector.broadcast %224 : vector<32x1xf32> to vector<32x32xf32>
    %226 = arith.mulf %217, %225 : vector<32x32xf32>
    %227 = arith.truncf %226 : vector<32x32xf32> to vector<32x32xbf16>
    %228 = arith.truncf %206 : vector<32x32xf32> to vector<32x32xbf16>
    %cst_168 = arith.constant dense<0.000000e+00> : vector<32x32xf32>
    %229 = tpu.matmul %227, %228, %cst_168 {dimension_numbers = #tpu.dot_dimension_numbers<[1], [0], [0], [1], [0, 0, 1, 1], [], []>} : vector<32x32xbf16>, vector<32x32xbf16>, vector<32x32xf32> -> vector<32x32xf32>
    %230 = arith.truncf %229 : vector<32x32xf32> to vector<32x32xbf16>
    %c0_169 = arith.constant 0 : index
    %c3_170 = arith.constant 3 : index
    %c0_171 = arith.constant 0 : index
    %c0_172 = arith.constant 0 : index
    %231 = vector.load %arg10[%c0_169, %c3_170, %c0_171, %c0_172] : memref<1x4x32x128xbf16, #tpu.memory_space<vmem>>, vector<1x1x32x128xbf16>
    %232 = vector.shape_cast %231 : vector<1x1x32x128xbf16> to vector<32x128xbf16>
    %cst_173 = arith.constant dense<0.000000e+00> : vector<32x128xf32>
    %233 = tpu.matmul %230, %232, %cst_173 {dimension_numbers = #tpu.dot_dimension_numbers<[1], [0], [0], [1], [0, 0, 1, 1], [], []>} : vector<32x32xbf16>, vector<32x128xbf16>, vector<32x128xf32> -> vector<32x128xf32>
    %234 = arith.addf %185, %233 : vector<32x128xf32>
    %235 = arith.addf %4, %234 : vector<32x128xf32>
    %c0_174 = arith.constant 0 : index
    %c0_175 = arith.constant 0 : index
    %c0_176 = arith.constant 0 : index
    %236 = vector.load %arg11[%c0_174, %c0_175, %c0_176] : memref<1x1x128xf32, #tpu.memory_space<vmem>>, vector<1x1x128xf32>
    %237 = vector.shape_cast %236 : vector<1x1x128xf32> to vector<1x128xf32>
    %238 = vector.broadcast %237 : vector<1x128xf32> to vector<32x128xf32>
    %239 = arith.addf %235, %238 : vector<32x128xf32>
    %240 = vector.extract_strided_slice %12 {offsets = [2, 0], sizes = [1, 128], strides = [1, 1]} : vector<4x128xf32> to vector<1x128xf32>
    %241 = vector.extract_strided_slice %12 {offsets = [3, 0], sizes = [1, 128], strides = [1, 1]} : vector<4x128xf32> to vector<1x128xf32>
    %cst_177 = arith.constant dense<0.000000e+00> : vector<32xf32>
    %242 = vector.multi_reduction <add>, %239, %cst_177 [1] : vector<32x128xf32> to vector<32xf32>
    %243 = vector.shape_cast %242 : vector<32xf32> to vector<32x1xf32>
    %cst_178 = arith.constant 1.280000e+02 : f32
    %244 = vector.broadcast %cst_178 : f32 to vector<32x1xf32>
    %245 = arith.divf %243, %244 : vector<32x1xf32>
    %246 = vector.broadcast %245 : vector<32x1xf32> to vector<32x128xf32>
    %247 = arith.subf %239, %246 : vector<32x128xf32>
    %248 = arith.mulf %247, %247 : vector<32x128xf32>
    %cst_179 = arith.constant dense<0.000000e+00> : vector<32xf32>
    %249 = vector.multi_reduction <add>, %248, %cst_179 [1] : vector<32x128xf32> to vector<32xf32>
    %250 = vector.shape_cast %249 : vector<32xf32> to vector<32x1xf32>
    %cst_180 = arith.constant 1.280000e+02 : f32
    %251 = vector.broadcast %cst_180 : f32 to vector<32x1xf32>
    %252 = arith.divf %250, %251 : vector<32x1xf32>
    %253 = vector.broadcast %245 : vector<32x1xf32> to vector<32x128xf32>
    %254 = arith.subf %239, %253 : vector<32x128xf32>
    %cst_181 = arith.constant 9.99999996E-13 : f32
    %255 = vector.broadcast %cst_181 : f32 to vector<32x1xf32>
    %256 = arith.addf %252, %255 : vector<32x1xf32>
    %257 = math.rsqrt %256 : vector<32x1xf32>
    %258 = vector.broadcast %257 : vector<32x1xf32> to vector<32x128xf32>
    %259 = arith.mulf %254, %258 : vector<32x128xf32>
    %260 = vector.broadcast %240 : vector<1x128xf32> to vector<32x128xf32>
    %261 = arith.mulf %259, %260 : vector<32x128xf32>
    %262 = vector.broadcast %241 : vector<1x128xf32> to vector<32x128xf32>
    %263 = arith.addf %261, %262 : vector<32x128xf32>
    %264 = arith.truncf %263 : vector<32x128xf32> to vector<32x128xbf16>
    %c0_182 = arith.constant 0 : index
    %c0_183 = arith.constant 0 : index
    %c0_184 = arith.constant 0 : index
    %265 = vector.load %arg12[%c0_182, %c0_183, %c0_184] : memref<1x128x512xbf16, #tpu.memory_space<vmem>>, vector<1x128x512xbf16>
    %266 = vector.shape_cast %265 : vector<1x128x512xbf16> to vector<128x512xbf16>
    %cst_185 = arith.constant dense<0.000000e+00> : vector<32x512xf32>
    %267 = tpu.matmul %264, %266, %cst_185 {dimension_numbers = #tpu.dot_dimension_numbers<[1], [0], [0], [1], [0, 0, 1, 1], [], []>} : vector<32x128xbf16>, vector<128x512xbf16>, vector<32x512xf32> -> vector<32x512xf32>
    %c0_186 = arith.constant 0 : index
    %c0_187 = arith.constant 0 : index
    %c0_188 = arith.constant 0 : index
    %268 = vector.load %arg13[%c0_186, %c0_187, %c0_188] : memref<1x1x512xf32, #tpu.memory_space<vmem>>, vector<1x1x512xf32>
    %269 = vector.shape_cast %268 : vector<1x1x512xf32> to vector<1x512xf32>
    %270 = vector.broadcast %269 : vector<1x512xf32> to vector<32x512xf32>
    %271 = arith.addf %267, %270 : vector<32x512xf32>
    %cst_189 = arith.constant 5.000000e-01 : f32
    %272 = vector.broadcast %cst_189 : f32 to vector<32x512xf32>
    %273 = arith.mulf %272, %271 : vector<32x512xf32>
    %cst_190 = arith.constant 0.707106769 : f32
    %274 = vector.broadcast %cst_190 : f32 to vector<32x512xf32>
    %275 = arith.mulf %271, %274 : vector<32x512xf32>
    %cst_191 = arith.constant 0.000000e+00 : f32
    %276 = vector.broadcast %cst_191 : f32 to vector<32x512xf32>
    %277 = arith.cmpf oge, %275, %276 : vector<32x512xf32>
    %cst_192 = arith.constant 1.000000e+00 : f32
    %cst_193 = arith.constant -1.000000e+00 : f32
    %278 = vector.broadcast %cst_192 : f32 to vector<32x512xf32>
    %279 = vector.broadcast %cst_193 : f32 to vector<32x512xf32>
    %280 = arith.select %277, %278, %279 : vector<32x512xi1>, vector<32x512xf32>
    %281 = arith.mulf %275, %280 : vector<32x512xf32>
    %cst_194 = arith.constant 0.327591091 : f32
    %282 = vector.broadcast %cst_194 : f32 to vector<32x512xf32>
    %283 = arith.mulf %282, %281 : vector<32x512xf32>
    %cst_195 = arith.constant 1.000000e+00 : f32
    %284 = vector.broadcast %cst_195 : f32 to vector<32x512xf32>
    %285 = arith.addf %284, %283 : vector<32x512xf32>
    %cst_196 = arith.constant 1.000000e+00 : f32
    %286 = vector.broadcast %cst_196 : f32 to vector<32x512xf32>
    %287 = arith.divf %286, %285 : vector<32x512xf32>
    %cst_197 = arith.constant 1.06140542 : f32
    %288 = vector.broadcast %cst_197 : f32 to vector<32x512xf32>
    %289 = arith.mulf %288, %287 : vector<32x512xf32>
    %cst_198 = arith.constant 1.45315206 : f32
    %290 = vector.broadcast %cst_198 : f32 to vector<32x512xf32>
    %291 = arith.subf %289, %290 : vector<32x512xf32>
    %292 = arith.mulf %291, %287 : vector<32x512xf32>
    %cst_199 = arith.constant 1.42141378 : f32
    %293 = vector.broadcast %cst_199 : f32 to vector<32x512xf32>
    %294 = arith.addf %292, %293 : vector<32x512xf32>
    %295 = arith.mulf %294, %287 : vector<32x512xf32>
    %cst_200 = arith.constant 0.284496725 : f32
    %296 = vector.broadcast %cst_200 : f32 to vector<32x512xf32>
    %297 = arith.subf %295, %296 : vector<32x512xf32>
    %298 = arith.mulf %297, %287 : vector<32x512xf32>
    %cst_201 = arith.constant 0.254829586 : f32
    %299 = vector.broadcast %cst_201 : f32 to vector<32x512xf32>
    %300 = arith.addf %298, %299 : vector<32x512xf32>
    %301 = arith.mulf %300, %287 : vector<32x512xf32>
    %cst_202 = arith.constant 0.000000e+00 : f32
    %302 = vector.broadcast %cst_202 : f32 to vector<32x512xf32>
    %303 = arith.subf %302, %281 : vector<32x512xf32>
    %304 = arith.mulf %303, %281 : vector<32x512xf32>
    %305 = math.exp %304 : vector<32x512xf32>
    %306 = arith.mulf %301, %305 : vector<32x512xf32>
    %cst_203 = arith.constant 1.000000e+00 : f32
    %307 = vector.broadcast %cst_203 : f32 to vector<32x512xf32>
    %308 = arith.subf %307, %306 : vector<32x512xf32>
    %309 = arith.mulf %280, %308 : vector<32x512xf32>
    %cst_204 = arith.constant 1.000000e+00 : f32
    %310 = vector.broadcast %cst_204 : f32 to vector<32x512xf32>
    %311 = arith.addf %310, %309 : vector<32x512xf32>
    %312 = arith.mulf %273, %311 : vector<32x512xf32>
    %313 = arith.truncf %312 : vector<32x512xf32> to vector<32x512xbf16>
    %c0_205 = arith.constant 0 : index
    %c0_206 = arith.constant 0 : index
    %c0_207 = arith.constant 0 : index
    %314 = vector.load %arg14[%c0_205, %c0_206, %c0_207] : memref<1x512x128xbf16, #tpu.memory_space<vmem>>, vector<1x512x128xbf16>
    %315 = vector.shape_cast %314 : vector<1x512x128xbf16> to vector<512x128xbf16>
    %cst_208 = arith.constant dense<0.000000e+00> : vector<32x128xf32>
    %316 = tpu.matmul %313, %315, %cst_208 {dimension_numbers = #tpu.dot_dimension_numbers<[1], [0], [0], [1], [0, 0, 1, 1], [], []>} : vector<32x512xbf16>, vector<512x128xbf16>, vector<32x128xf32> -> vector<32x128xf32>
    %317 = arith.addf %239, %316 : vector<32x128xf32>
    %c0_209 = arith.constant 0 : index
    %c0_210 = arith.constant 0 : index
    %c0_211 = arith.constant 0 : index
    %318 = vector.load %arg15[%c0_209, %c0_210, %c0_211] : memref<1x1x128xf32, #tpu.memory_space<vmem>>, vector<1x1x128xf32>
    %319 = vector.shape_cast %318 : vector<1x1x128xf32> to vector<1x128xf32>
    %320 = vector.broadcast %319 : vector<1x128xf32> to vector<32x128xf32>
    %321 = arith.addf %317, %320 : vector<32x128xf32>
    %c0_212 = arith.constant 0 : index
    %c0_213 = arith.constant 0 : index
    %c0_214 = arith.constant 0 : index
    %322 = vector.load %arg16[%c0_212, %c0_213, %c0_214] : memref<1x32x128xf32, #tpu.memory_space<vmem>>, vector<1x32x128xf32>
    %323 = vector.shape_cast %322 : vector<1x32x128xf32> to vector<32x128xf32>
    %324 = vector.shape_cast %321 : vector<32x128xf32> to vector<1x32x128xf32>
    tpu.vector_store %arg16[%c0_212, %c0_213, %c0_214], %324 {strides = array<i32>} : memref<1x32x128xf32, #tpu.memory_space<vmem>>, vector<1x32x128xf32>,
    return
  }
  func.func @transform_0(%arg0: i32, %arg1: i32) -> (i32, i32, i32) {
    %c0_i32 = arith.constant 0 : i32
    %c0_i32_0 = arith.constant 0 : i32
    %c0_i32_1 = arith.constant 0 : i32
    return %arg0, %c0_i32, %c0_i32_0 : i32, i32, i32
  }
  func.func @transform_1(%arg0: i32, %arg1: i32) -> (i32, i32) {
    %c0_i32 = arith.constant 0 : i32
    %c0_i32_0 = arith.constant 0 : i32
    %c0_i32_1 = arith.constant 0 : i32
    return %c0_i32, %c0_i32_0 : i32, i32
  }
  func.func @transform_2(%arg0: i32, %arg1: i32) -> (i32, i32) {
    %c0_i32 = arith.constant 0 : i32
    %c0_i32_0 = arith.constant 0 : i32
    %c0_i32_1 = arith.constant 0 : i32
    return %c0_i32, %c0_i32_0 : i32, i32
  }
  func.func @transform_3(%arg0: i32, %arg1: i32) -> (i32, i32, i32) {
    %c0_i32 = arith.constant 0 : i32
    %c0_i32_0 = arith.constant 0 : i32
    %c0_i32_1 = arith.constant 0 : i32
    return %arg1, %c0_i32, %c0_i32_0 : i32, i32, i32
  }
  func.func @transform_4(%arg0: i32, %arg1: i32) -> (i32, i32, i32, i32) {
    %c0_i32 = arith.constant 0 : i32
    %c0_i32_0 = arith.constant 0 : i32
    %c0_i32_1 = arith.constant 0 : i32
    %c0_i32_2 = arith.constant 0 : i32
    return %arg1, %c0_i32, %c0_i32_0, %c0_i32_1 : i32, i32, i32, i32
  }
  func.func @transform_5(%arg0: i32, %arg1: i32) -> (i32, i32, i32, i32) {
    %c0_i32 = arith.constant 0 : i32
    %c0_i32_0 = arith.constant 0 : i32
    %c0_i32_1 = arith.constant 0 : i32
    %c0_i32_2 = arith.constant 0 : i32
    return %arg1, %c0_i32, %c0_i32_0, %c0_i32_1 : i32, i32, i32, i32
  }
  func.func @transform_6(%arg0: i32, %arg1: i32) -> (i32, i32, i32, i32) {
    %c0_i32 = arith.constant 0 : i32
    %c0_i32_0 = arith.constant 0 : i32
    %c0_i32_1 = arith.constant 0 : i32
    %c0_i32_2 = arith.constant 0 : i32
    return %arg1, %c0_i32, %c0_i32_0, %c0_i32_1 : i32, i32, i32, i32
  }
  func.func @transform_7(%arg0: i32, %arg1: i32) -> (i32, i32, i32, i32, i32) {
    %c0_i32 = arith.constant 0 : i32
    %c0_i32_0 = arith.constant 0 : i32
    %c0_i32_1 = arith.constant 0 : i32
    %c0_i32_2 = arith.constant 0 : i32
    %c0_i32_3 = arith.constant 0 : i32
    return %arg1, %c0_i32, %c0_i32_0, %c0_i32_1, %c0_i32_2 : i32, i32, i32, i32, i32
  }
  func.func @transform_8(%arg0: i32, %arg1: i32) -> (i32, i32, i32, i32) {
    %c0_i32 = arith.constant 0 : i32
    %c0_i32_0 = arith.constant 0 : i32
    %c0_i32_1 = arith.constant 0 : i32
    %c0_i32_2 = arith.constant 0 : i32
    return %arg1, %c0_i32, %c0_i32_0, %c0_i32_1 : i32, i32, i32, i32
  }
  func.func @transform_9(%arg0: i32, %arg1: i32) -> (i32, i32, i32) {
    %c0_i32 = arith.constant 0 : i32
    %c0_i32_0 = arith.constant 0 : i32
    %c0_i32_1 = arith.constant 0 : i32
    return %arg1, %c0_i32, %c0_i32_0 : i32, i32, i32
  }
  func.func @transform_10(%arg0: i32, %arg1: i32) -> (i32, i32, i32) {
    %c0_i32 = arith.constant 0 : i32
    %c0_i32_0 = arith.constant 0 : i32
    %c0_i32_1 = arith.constant 0 : i32
    return %arg1, %c0_i32, %c0_i32_0 : i32, i32, i32
  }
  func.func @transform_11(%arg0: i32, %arg1: i32) -> (i32, i32, i32) {
    %c0_i32 = arith.constant 0 : i32
    %c0_i32_0 = arith.constant 0 : i32
    %c0_i32_1 = arith.constant 0 : i32
    return %arg1, %c0_i32, %c0_i32_0 : i32, i32, i32
  }
  func.func @transform_12(%arg0: i32, %arg1: i32) -> (i32, i32, i32) {
    %c0_i32 = arith.constant 0 : i32
    %c0_i32_0 = arith.constant 0 : i32
    %c0_i32_1 = arith.constant 0 : i32
    return %arg1, %c0_i32, %c0_i32_0 : i32, i32, i32
  }
  func.func @transform_13(%arg0: i32, %arg1: i32) -> (i32, i32, i32) {
    %c0_i32 = arith.constant 0 : i32
    %c0_i32_0 = arith.constant 0 : i32
    %c0_i32_1 = arith.constant 0 : i32
    return %arg1, %c0_i32, %c0_i32_0 : i32, i32, i32
  }
  func.func @transform_14(%arg0: i32, %arg1: i32) -> (i32, i32, i32) {
    %c0_i32 = arith.constant 0 : i32
    %c0_i32_0 = arith.constant 0 : i32
    %c0_i32_1 = arith.constant 0 : i32
    return %arg0, %c0_i32, %c0_i32_0 : i32, i32, i32
  }
}

</mosaic_0001>

<llo_original>
// kernel: multicls_vit_forward.1
$region0: #{multicls_vit_forward.1}
  #allocation0 [shape = 'u32[]', space=smem, size = 0x4, offset = 0x4, fixed_abs, tag = 'smem constant byte address 0x4 - core index']
  #allocation1 [shape = 'u32[144,128]{1,0:T(1,128)}', space=vmem, size = 0x12000, scoped, tag = 'internal scratch']
  %s0 = inlined_call_operand.vmem [shape: f32[2,32,128], index: 0, kind: input, shape index: {}]
  %s1 = inlined_call_operand.vmem [shape: f32[32,128], index: 1, kind: input, shape index: {}]
  %s2 = inlined_call_operand.vmem [shape: bf16[128,128], index: 2, kind: input, shape index: {}]
  %s3 = inlined_call_operand.vmem [shape: f32[2,4,128], index: 3, kind: input, shape index: {}]
  %s4 = inlined_call_operand.vmem [shape: bf16[2,4,128,32], index: 4, kind: input, shape index: {}]
  %s5 = inlined_call_operand.vmem [shape: bf16[2,4,128,32], index: 5, kind: input, shape index: {}]
  %s6 = inlined_call_operand.vmem [shape: bf16[2,4,128,32], index: 6, kind: input, shape index: {}]
  %s7 = inlined_call_operand.vmem [shape: f32[2,3,4,1,32], index: 7, kind: input, shape index: {}]
  %s8 = inlined_call_operand.vmem [shape: bf16[2,4,32,128], index: 8, kind: input, shape index: {}]
  %s9 = inlined_call_operand.vmem [shape: f32[2,1,128], index: 9, kind: input, shape index: {}]
  %s10 = inlined_call_operand.vmem [shape: bf16[2,128,512], index: 10, kind: input, shape index: {}]
  %s11 = inlined_call_operand.vmem [shape: f32[2,1,512], index: 11, kind: input, shape index: {}]
  %s12 = inlined_call_operand.vmem [shape: bf16[2,512,128], index: 12, kind: input, shape index: {}]
  %s13 = inlined_call_operand.vmem [shape: f32[2,1,128], index: 13, kind: input, shape index: {}]
  %s14 = inlined_call_operand.vmem [shape: f32[2,32,128], index: 14, kind: output, shape index: {}]
  %s15 = sld [smem:[#allocation0]]
  $region93: #{multicls_vit_forward.1} parent=0
    _
  %s17 = ssub.s32 1, %s15
  %s18 = scalar_select 0, %s17, %s15
  loop: start=0, step=1, limit=6
  $region2: #{multicls_vit_forward.1} parent=0 // loop_pre_header
    _
  $region3: #{multicls_vit_forward.1} parent=0 // loop_header
    %s20 = sphi 0, %s24
    %p21 = scmp.ge.s32.totalorder %s20, 6
    %s27 = sphi 0, %s39
    %s28 = sphi 0, %s35
    %s29 = sphi 0, %s27
    %s30 = sphi 0, %s28
    %s31 = sphi 0, %s29
    %s32 = sphi 0, %s30
    %s42 = sphi 0, %s44
    %s45 = sphi 0, %s42
    %s46 = sphi 0, %s45
    %s62 = sphi 0, %s46
    %s66 = sphi 0, %s66
    %s68 = sphi 0, %s66
    %s69 = sphi 0, %s68
    %s83 = sphi 0, %s69
    %s87 = sphi 0, %s87
    %s89 = sphi 0, %s87
    %s90 = sphi 0, %s89
    %s104 = sphi 0, %s90
    %s110 = sphi 0, %s112
    %s113 = sphi 0, %s110
    %s114 = sphi 0, %s113
    %s130 = sphi 0, %s114
    %s136 = sphi 0, %s138
    %s139 = sphi 0, %s136
    %s140 = sphi 0, %s139
    %s156 = sphi 0, %s140
    %s162 = sphi 0, %s164
    %s165 = sphi 0, %s162
    %s166 = sphi 0, %s165
    %s182 = sphi 0, %s166
    %s188 = sphi 0, %s190
    %s191 = sphi 0, %s188
    %s192 = sphi 0, %s191
    %s208 = sphi 0, %s192
    %s214 = sphi 0, %s216
    %s217 = sphi 0, %s214
    %s218 = sphi 0, %s217
    %s234 = sphi 0, %s218
    %s240 = sphi 0, %s242
    %s243 = sphi 0, %s240
    %s244 = sphi 0, %s243
    %s260 = sphi 0, %s244
    %s266 = sphi 0, %s268
    %s269 = sphi 0, %s266
    %s270 = sphi 0, %s269
    %s286 = sphi 0, %s270
    %s292 = sphi 0, %s294
    %s295 = sphi 0, %s292
    %s296 = sphi 0, %s295
    %s312 = sphi 0, %s296
    %s318 = sphi 0, %s320
    %s321 = sphi 0, %s318
    %s322 = sphi 0, %s321
    %s338 = sphi 0, %s322
    %s344 = sphi 0, %s346
    %s347 = sphi 0, %s344
    %s348 = sphi 0, %s347
    %s364 = sphi 0, %s348
    %s370 = sphi 0, %s372
    %s373 = sphi 0, %s370
    %s374 = sphi 0, %s373
    %s390 = sphi 0, %s374
    %s396 = sphi 0, %s398
    %s399 = sphi 0, %s396
    %s400 = sphi 0, %s399
    %s416 = sphi 0, %s400
  $region4: #{multicls_vit_forward.1} parent=0 // loop_header_branch
    %23 = sbr.rel (%p21) target = $region8
  $region5: #{multicls_vit_forward.1} parent=0 // loop_body
    %s25 = ssub.s32 %s20, 1
    %s26 = ssub.s32 %s20, 2
    %s33 = sadd.s32 1, %s28
    %p34 = scmp.ge.s32.totalorder %s33, 2
    %s35 = scalar_select %p34, 0, %s33
    %s36 = sadd.s32 1, %s27
    %s37 = scalar_select %p34, %s36, %s27
    %p38 = scmp.ge.s32.totalorder %s37, 2
    %s39 = scalar_select %p38, 0, %s37
    %s40 = ssub.s32 %s27, %s39
    %p41 = scmp.eq.s32.totalorder %s40, 0
    %s43 = sadd.s32 %s42, 1
    %s44 = scalar_select %p41, %s42, %s43
    %p47 = pneg %p41
    %p48 = scmp.eq.s32.totalorder %s20, 3
    %p49 = por %p47, %p48
    %p50 = scmp.ne.s32.totalorder %s42, %s45
    %p51 = scmp.eq.s32.totalorder %s20, 0
    %p52 = por %p50, %p51
    %p53 = scmp.ne.s32.totalorder %s42, %s45
    %p54 = scmp.eq.s32.totalorder %s25, 3
    %p55 = por %p53, %p54
    %p56 = scmp.ne.s32.totalorder %s45, %s46
    %p57 = scmp.eq.s32.totalorder %s25, 0
    %p58 = por %p56, %p57
    %p59 = scmp.ne.s32.totalorder %s45, %s46
    %p60 = scmp.eq.s32.totalorder %s26, 3
    %p61 = por %p59, %p60
    %p63 = scmp.ne.s32.totalorder %s46, %s62
    %p64 = scmp.eq.s32.totalorder %s26, 0
    %p65 = por %p63, %p64
    %s67 = sadd.s32 %s66, 1
    %p70 = scmp.eq.s32.totalorder %s20, 3
    %p71 = scmp.ne.s32.totalorder %s66, %s68
    %p72 = scmp.eq.s32.totalorder %s20, 0
    %p73 = por %p71, %p72
    %p74 = scmp.ne.s32.totalorder %s66, %s68
    %p75 = scmp.eq.s32.totalorder %s25, 3
    %p76 = por %p74, %p75
    %p77 = scmp.ne.s32.totalorder %s68, %s69
    %p78 = scmp.eq.s32.totalorder %s25, 0
    %p79 = por %p77, %p78
    %p80 = scmp.ne.s32.totalorder %s68, %s69
    %p81 = scmp.eq.s32.totalorder %s26, 3
    %p82 = por %p80, %p81
    %p84 = scmp.ne.s32.totalorder %s69, %s83
    %p85 = scmp.eq.s32.totalorder %s26, 0
    %p86 = por %p84, %p85
    %s88 = sadd.s32 %s87, 1
    %p91 = scmp.eq.s32.totalorder %s20, 3
    %p92 = scmp.ne.s32.totalorder %s87, %s89
    %p93 = scmp.eq.s32.totalorder %s20, 0
    %p94 = por %p92, %p93
    %p95 = scmp.ne.s32.totalorder %s87, %s89
    %p96 = scmp.eq.s32.totalorder %s25, 3
    %p97 = por %p95, %p96
    %p98 = scmp.ne.s32.totalorder %s89, %s90
    %p99 = scmp.eq.s32.totalorder %s25, 0
    %p100 = por %p98, %p99
    %p101 = scmp.ne.s32.totalorder %s89, %s90
    %p102 = scmp.eq.s32.totalorder %s26, 3
    %p103 = por %p101, %p102
    %p105 = scmp.ne.s32.totalorder %s90, %s104
    %p106 = scmp.eq.s32.totalorder %s26, 0
    %p107 = por %p105, %p106
    %s108 = ssub.s32 %s28, %s35
    %p109 = scmp.eq.s32.totalorder %s108, 0
    %s111 = sadd.s32 %s110, 1
    %s112 = scalar_select %p109, %s110, %s111
    %p115 = pneg %p109
    %p116 = scmp.eq.s32.totalorder %s20, 3
    %p117 = por %p115, %p116
    %p118 = scmp.ne.s32.totalorder %s110, %s113
    %p119 = scmp.eq.s32.totalorder %s20, 0
    %p120 = por %p118, %p119
    %p121 = scmp.ne.s32.totalorder %s110, %s113
    %p122 = scmp.eq.s32.totalorder %s25, 3
    %p123 = por %p121, %p122
    %p124 = scmp.ne.s32.totalorder %s113, %s114
    %p125 = scmp.eq.s32.totalorder %s25, 0
    %p126 = por %p124, %p125
    %p127 = scmp.ne.s32.totalorder %s113, %s114
    %p128 = scmp.eq.s32.totalorder %s26, 3
    %p129 = por %p127, %p128
    %p131 = scmp.ne.s32.totalorder %s114, %s130
    %p132 = scmp.eq.s32.totalorder %s26, 0
    %p133 = por %p131, %p132
    %s134 = ssub.s32 %s28, %s35
    %p135 = scmp.eq.s32.totalorder %s134, 0
    %s137 = sadd.s32 %s136, 1
    %s138 = scalar_select %p135, %s136, %s137
    %p141 = pneg %p135
    %p142 = scmp.eq.s32.totalorder %s20, 3
    %p143 = por %p141, %p142
    %p144 = scmp.ne.s32.totalorder %s136, %s139
    %p145 = scmp.eq.s32.totalorder %s20, 0
    %p146 = por %p144, %p145
    %p147 = scmp.ne.s32.totalorder %s136, %s139
    %p148 = scmp.eq.s32.totalorder %s25, 3
    %p149 = por %p147, %p148
    %p150 = scmp.ne.s32.totalorder %s139, %s140
    %p151 = scmp.eq.s32.totalorder %s25, 0
    %p152 = por %p150, %p151
    %p153 = scmp.ne.s32.totalorder %s139, %s140
    %p154 = scmp.eq.s32.totalorder %s26, 3
    %p155 = por %p153, %p154
    %p157 = scmp.ne.s32.totalorder %s140, %s156
    %p158 = scmp.eq.s32.totalorder %s26, 0
    %p159 = por %p157, %p158
    %s160 = ssub.s32 %s28, %s35
    %p161 = scmp.eq.s32.totalorder %s160, 0
    %s163 = sadd.s32 %s162, 1
    %s164 = scalar_select %p161, %s162, %s163
    %p167 = pneg %p161
    %p168 = scmp.eq.s32.totalorder %s20, 3
    %p169 = por %p167, %p168
    %p170 = scmp.ne.s32.totalorder %s162, %s165
    %p171 = scmp.eq.s32.totalorder %s20, 0
    %p172 = por %p170, %p171
    %p173 = scmp.ne.s32.totalorder %s162, %s165
    %p174 = scmp.eq.s32.totalorder %s25, 3
    %p175 = por %p173, %p174
    %p176 = scmp.ne.s32.totalorder %s165, %s166
    %p177 = scmp.eq.s32.totalorder %s25, 0
    %p178 = por %p176, %p177
    %p179 = scmp.ne.s32.totalorder %s165, %s166
    %p180 = scmp.eq.s32.totalorder %s26, 3
    %p181 = por %p179, %p180
    %p183 = scmp.ne.s32.totalorder %s166, %s182
    %p184 = scmp.eq.s32.totalorder %s26, 0
    %p185 = por %p183, %p184
    %s186 = ssub.s32 %s28, %s35
    %p187 = scmp.eq.s32.totalorder %s186, 0
    %s189 = sadd.s32 %s188, 1
    %s190 = scalar_select %p187, %s188, %s189
    %p193 = pneg %p187
    %p194 = scmp.eq.s32.totalorder %s20, 3
    %p195 = por %p193, %p194
    %p196 = scmp.ne.s32.totalorder %s188, %s191
    %p197 = scmp.eq.s32.totalorder %s20, 0
    %p198 = por %p196, %p197
    %p199 = scmp.ne.s32.totalorder %s188, %s191
    %p200 = scmp.eq.s32.totalorder %s25, 3
    %p201 = por %p199, %p200
    %p202 = scmp.ne.s32.totalorder %s191, %s192
    %p203 = scmp.eq.s32.totalorder %s25, 0
    %p204 = por %p202, %p203
    %p205 = scmp.ne.s32.totalorder %s191, %s192
    %p206 = scmp.eq.s32.totalorder %s26, 3
    %p207 = por %p205, %p206
    %p209 = scmp.ne.s32.totalorder %s192, %s208
    %p210 = scmp.eq.s32.totalorder %s26, 0
    %p211 = por %p209, %p210
    %s212 = ssub.s32 %s28, %s35
    %p213 = scmp.eq.s32.totalorder %s212, 0
    %s215 = sadd.s32 %s214, 1
    %s216 = scalar_select %p213, %s214, %s215
    %p219 = pneg %p213
    %p220 = scmp.eq.s32.totalorder %s20, 3
    %p221 = por %p219, %p220
    %p222 = scmp.ne.s32.totalorder %s214, %s217
    %p223 = scmp.eq.s32.totalorder %s20, 0
    %p224 = por %p222, %p223
    %p225 = scmp.ne.s32.totalorder %s214, %s217
    %p226 = scmp.eq.s32.totalorder %s25, 3
    %p227 = por %p225, %p226
    %p228 = scmp.ne.s32.totalorder %s217, %s218
    %p229 = scmp.eq.s32.totalorder %s25, 0
    %p230 = por %p228, %p229
    %p231 = scmp.ne.s32.totalorder %s217, %s218
    %p232 = scmp.eq.s32.totalorder %s26, 3
    %p233 = por %p231, %p232
    %p235 = scmp.ne.s32.totalorder %s218, %s234
    %p236 = scmp.eq.s32.totalorder %s26, 0
    %p237 = por %p235, %p236
    %s238 = ssub.s32 %s28, %s35
    %p239 = scmp.eq.s32.totalorder %s238, 0
    %s241 = sadd.s32 %s240, 1
    %s242 = scalar_select %p239, %s240, %s241
    %p245 = pneg %p239
    %p246 = scmp.eq.s32.totalorder %s20, 3
    %p247 = por %p245, %p246
    %p248 = scmp.ne.s32.totalorder %s240, %s243
    %p249 = scmp.eq.s32.totalorder %s20, 0
    %p250 = por %p248, %p249
    %p251 = scmp.ne.s32.totalorder %s240, %s243
    %p252 = scmp.eq.s32.totalorder %s25, 3
    %p253 = por %p251, %p252
    %p254 = scmp.ne.s32.totalorder %s243, %s244
    %p255 = scmp.eq.s32.totalorder %s25, 0
    %p256 = por %p254, %p255
    %p257 = scmp.ne.s32.totalorder %s243, %s244
    %p258 = scmp.eq.s32.totalorder %s26, 3
    %p259 = por %p257, %p258
    %p261 = scmp.ne.s32.totalorder %s244, %s260
    %p262 = scmp.eq.s32.totalorder %s26, 0
    %p263 = por %p261, %p262
    %s264 = ssub.s32 %s28, %s35
    %p265 = scmp.eq.s32.totalorder %s264, 0
    %s267 = sadd.s32 %s266, 1
    %s268 = scalar_select %p265, %s266, %s267
    %p271 = pneg %p265
    %p272 = scmp.eq.s32.totalorder %s20, 3
    %p273 = por %p271, %p272
    %p274 = scmp.ne.s32.totalorder %s266, %s269
    %p275 = scmp.eq.s32.totalorder %s20, 0
    %p276 = por %p274, %p275
    %p277 = scmp.ne.s32.totalorder %s266, %s269
    %p278 = scmp.eq.s32.totalorder %s25, 3
    %p279 = por %p277, %p278
    %p280 = scmp.ne.s32.totalorder %s269, %s270
    %p281 = scmp.eq.s32.totalorder %s25, 0
    %p282 = por %p280, %p281
    %p283 = scmp.ne.s32.totalorder %s269, %s270
    %p284 = scmp.eq.s32.totalorder %s26, 3
    %p285 = por %p283, %p284
    %p287 = scmp.ne.s32.totalorder %s270, %s286
    %p288 = scmp.eq.s32.totalorder %s26, 0
    %p289 = por %p287, %p288
    %s290 = ssub.s32 %s28, %s35
    %p291 = scmp.eq.s32.totalorder %s290, 0
    %s293 = sadd.s32 %s292, 1
    %s294 = scalar_select %p291, %s292, %s293
    %p297 = pneg %p291
    %p298 = scmp.eq.s32.totalorder %s20, 3
    %p299 = por %p297, %p298
    %p300 = scmp.ne.s32.totalorder %s292, %s295
    %p301 = scmp.eq.s32.totalorder %s20, 0
    %p302 = por %p300, %p301
    %p303 = scmp.ne.s32.totalorder %s292, %s295
    %p304 = scmp.eq.s32.totalorder %s25, 3
    %p305 = por %p303, %p304
    %p306 = scmp.ne.s32.totalorder %s295, %s296
    %p307 = scmp.eq.s32.totalorder %s25, 0
    %p308 = por %p306, %p307
    %p309 = scmp.ne.s32.totalorder %s295, %s296
    %p310 = scmp.eq.s32.totalorder %s26, 3
    %p311 = por %p309, %p310
    %p313 = scmp.ne.s32.totalorder %s296, %s312
    %p314 = scmp.eq.s32.totalorder %s26, 0
    %p315 = por %p313, %p314
    %s316 = ssub.s32 %s28, %s35
    %p317 = scmp.eq.s32.totalorder %s316, 0
    %s319 = sadd.s32 %s318, 1
    %s320 = scalar_select %p317, %s318, %s319
    %p323 = pneg %p317
    %p324 = scmp.eq.s32.totalorder %s20, 3
    %p325 = por %p323, %p324
    %p326 = scmp.ne.s32.totalorder %s318, %s321
    %p327 = scmp.eq.s32.totalorder %s20, 0
    %p328 = por %p326, %p327
    %p329 = scmp.ne.s32.totalorder %s318, %s321
    %p330 = scmp.eq.s32.totalorder %s25, 3
    %p331 = por %p329, %p330
    %p332 = scmp.ne.s32.totalorder %s321, %s322
    %p333 = scmp.eq.s32.totalorder %s25, 0
    %p334 = por %p332, %p333
    %p335 = scmp.ne.s32.totalorder %s321, %s322
    %p336 = scmp.eq.s32.totalorder %s26, 3
    %p337 = por %p335, %p336
    %p339 = scmp.ne.s32.totalorder %s322, %s338
    %p340 = scmp.eq.s32.totalorder %s26, 0
    %p341 = por %p339, %p340
    %s342 = ssub.s32 %s28, %s35
    %p343 = scmp.eq.s32.totalorder %s342, 0
    %s345 = sadd.s32 %s344, 1
    %s346 = scalar_select %p343, %s344, %s345
    %p349 = pneg %p343
    %p350 = scmp.eq.s32.totalorder %s20, 3
    %p351 = por %p349, %p350
    %p352 = scmp.ne.s32.totalorder %s344, %s347
    %p353 = scmp.eq.s32.totalorder %s20, 0
    %p354 = por %p352, %p353
    %p355 = scmp.ne.s32.totalorder %s344, %s347
    %p356 = scmp.eq.s32.totalorder %s25, 3
    %p357 = por %p355, %p356
    %p358 = scmp.ne.s32.totalorder %s347, %s348
    %p359 = scmp.eq.s32.totalorder %s25, 0
    %p360 = por %p358, %p359
    %p361 = scmp.ne.s32.totalorder %s347, %s348
    %p362 = scmp.eq.s32.totalorder %s26, 3
    %p363 = por %p361, %p362
    %p365 = scmp.ne.s32.totalorder %s348, %s364
    %p366 = scmp.eq.s32.totalorder %s26, 0
    %p367 = por %p365, %p366
    %s368 = ssub.s32 %s28, %s35
    %p369 = scmp.eq.s32.totalorder %s368, 0
    %s371 = sadd.s32 %s370, 1
    %s372 = scalar_select %p369, %s370, %s371
    %p375 = pneg %p369
    %p376 = scmp.eq.s32.totalorder %s20, 3
    %p377 = por %p375, %p376
    %p378 = scmp.ne.s32.totalorder %s370, %s373
    %p379 = scmp.eq.s32.totalorder %s20, 0
    %p380 = por %p378, %p379
    %p381 = scmp.ne.s32.totalorder %s370, %s373
    %p382 = scmp.eq.s32.totalorder %s25, 3
    %p383 = por %p381, %p382
    %p384 = scmp.ne.s32.totalorder %s373, %s374
    %p385 = scmp.eq.s32.totalorder %s25, 0
    %p386 = por %p384, %p385
    %p387 = scmp.ne.s32.totalorder %s373, %s374
    %p388 = scmp.eq.s32.totalorder %s26, 3
    %p389 = por %p387, %p388
    %p391 = scmp.ne.s32.totalorder %s374, %s390
    %p392 = scmp.eq.s32.totalorder %s26, 0
    %p393 = por %p391, %p392
    %s394 = ssub.s32 %s27, %s39
    %p395 = scmp.eq.s32.totalorder %s394, 0
    %s397 = sadd.s32 %s396, 1
    %s398 = scalar_select %p395, %s396, %s397
    %p401 = pneg %p395
    %p402 = scmp.eq.s32.totalorder %s20, 3
    %p403 = por %p401, %p402
    %p404 = scmp.ne.s32.totalorder %s396, %s399
    %p405 = scmp.eq.s32.totalorder %s20, 0
    %p406 = por %p404, %p405
    %p407 = scmp.ne.s32.totalorder %s396, %s399
    %p408 = scmp.eq.s32.totalorder %s25, 3
    %p409 = por %p407, %p408
    %p410 = scmp.ne.s32.totalorder %s399, %s400
    %p411 = scmp.eq.s32.totalorder %s25, 0
    %p412 = por %p410, %p411
    %p413 = scmp.ne.s32.totalorder %s399, %s400
    %p414 = scmp.eq.s32.totalorder %s26, 3
    %p415 = por %p413, %p414
    %p417 = scmp.ne.s32.totalorder %s400, %s416
    %p418 = scmp.eq.s32.totalorder %s26, 0
    %p419 = por %p417, %p418
    %p420 = scmp.le.s32.totalorder 1, %s20
    %p421 = scmp.lt.s32.totalorder %s20, 5
    %p422 = pnand %p420, %p421
    %p423 = pneg %p422
    // Predicated region
    $region9: #{multicls_vit_forward.1} parent=5 // pred_check
      _
    $region10: #{multicls_vit_forward.1} parent=5 // pred_check_branch
      %425 = sbr.rel (%p422) target = $region12
    $region11: #{multicls_vit_forward.1} parent=5 // pred_region
      %s426 = ssub.s32 %s20, 1
      // Predicated region
      $region13: #{multicls_vit_forward.1} parent=11 // pred_check
        %p427 = pneg %p79
      $region14: #{multicls_vit_forward.1} parent=11 // pred_check_branch
        %429 = sbr.rel (%p427) target = $region16
      $region15: #{multicls_vit_forward.1} parent=11 // pred_region
        _
      $region16: #{multicls_vit_forward.1} parent=11 // pred_fallthru
        _
      // Predicated region
      $region17: #{multicls_vit_forward.1} parent=11 // pred_check
        %p430 = pneg %p100
      $region18: #{multicls_vit_forward.1} parent=11 // pred_check_branch
        %432 = sbr.rel (%p430) target = $region20
      $region19: #{multicls_vit_forward.1} parent=11 // pred_region
        _
      $region20: #{multicls_vit_forward.1} parent=11 // pred_fallthru
        _
    $region12: #{multicls_vit_forward.1} parent=5 // pred_fallthru
      _
    %p433 = scmp.lt.s32.totalorder %s20, 4
    // Predicated region
    $region21: #{multicls_vit_forward.1} parent=5 // pred_check
      %p434 = pneg %p433
    $region22: #{multicls_vit_forward.1} parent=5 // pred_check_branch
      %436 = sbr.rel (%p434) target = $region24
    $region23: #{multicls_vit_forward.1} parent=5 // pred_region
      // Predicated region
      $region25: #{multicls_vit_forward.1} parent=23 // pred_check
        %p437 = pneg %p52
      $region26: #{multicls_vit_forward.1} parent=23 // pred_check_branch
        %439 = sbr.rel (%p437) target = $region28
      $region27: #{multicls_vit_forward.1} parent=23 // pred_region
        %p440 = scmp.lt.s32.totalorder %s27, 1
        %s441 = scalar_select %p440, %s27, 1
        %s442 = smul.addr %s441, 4
        %s443 = smul.addr %s442, 8
        %s444 = scalar_lea.vmem %s0, %s443
      $region28: #{multicls_vit_forward.1} parent=23 // pred_fallthru
        _
      // Predicated region
      $region29: #{multicls_vit_forward.1} parent=23 // pred_check
        %p445 = pneg %p120
      $region30: #{multicls_vit_forward.1} parent=23 // pred_check_branch
        %447 = sbr.rel (%p445) target = $region32
      $region31: #{multicls_vit_forward.1} parent=23 // pred_region
        %p448 = scmp.lt.s32.totalorder %s28, 1
        %s449 = scalar_select %p448, %s28, 1
        %s450 = smul.addr %s449, 4
        %s451 = scalar_lea.vmem %s3, %s450
      $region32: #{multicls_vit_forward.1} parent=23 // pred_fallthru
        _
      // Predicated region
      $region33: #{multicls_vit_forward.1} parent=23 // pred_check
        %p452 = pneg %p146
      $region34: #{multicls_vit_forward.1} parent=23 // pred_check_branch
        %454 = sbr.rel (%p452) target = $region36
      $region35: #{multicls_vit_forward.1} parent=23 // pred_region
        %p455 = scmp.lt.s32.totalorder %s28, 1
        %s456 = scalar_select %p455, %s28, 1
        %s457 = smul.addr %s456, 64
        %s458 = smul.addr %s457, 4
        %s459 = scalar_lea.vmem %s4, %s458
      $region36: #{multicls_vit_forward.1} parent=23 // pred_fallthru
        _
      // Predicated region
      $region37: #{multicls_vit_forward.1} parent=23 // pred_check
        %p460 = pneg %p172
      $region38: #{multicls_vit_forward.1} parent=23 // pred_check_branch
        %462 = sbr.rel (%p460) target = $region40
      $region39: #{multicls_vit_forward.1} parent=23 // pred_region
        %p463 = scmp.lt.s32.totalorder %s28, 1
        %s464 = scalar_select %p463, %s28, 1
        %s465 = smul.addr %s464, 64
        %s466 = smul.addr %s465, 4
        %s467 = scalar_lea.vmem %s5, %s466
      $region40: #{multicls_vit_forward.1} parent=23 // pred_fallthru
        _
      // Predicated region
      $region41: #{multicls_vit_forward.1} parent=23 // pred_check
        %p468 = pneg %p198
      $region42: #{multicls_vit_forward.1} parent=23 // pred_check_branch
        %470 = sbr.rel (%p468) target = $region44
      $region43: #{multicls_vit_forward.1} parent=23 // pred_region
        %p471 = scmp.lt.s32.totalorder %s28, 1
        %s472 = scalar_select %p471, %s28, 1
        %s473 = smul.addr %s472, 64
        %s474 = smul.addr %s473, 4
        %s475 = scalar_lea.vmem %s6, %s474
      $region44: #{multicls_vit_forward.1} parent=23 // pred_fallthru
        _
      // Predicated region
      $region45: #{multicls_vit_forward.1} parent=23 // pred_check
        %p476 = pneg %p224
      $region46: #{multicls_vit_forward.1} parent=23 // pred_check_branch
        %478 = sbr.rel (%p476) target = $region48
      $region47: #{multicls_vit_forward.1} parent=23 // pred_region
        %p479 = scmp.lt.s32.totalorder %s28, 1
        %s480 = scalar_select %p479, %s28, 1
        %s481 = smul.addr %s480, 12
        %s482 = scalar_lea.vmem %s7, %s481
      $region48: #{multicls_vit_forward.1} parent=23 // pred_fallthru
        _
      // Predicated region
      $region49: #{multicls_vit_forward.1} parent=23 // pred_check
        %p483 = pneg %p250
      $region50: #{multicls_vit_forward.1} parent=23 // pred_check_branch
        %485 = sbr.rel (%p483) target = $region52
      $region51: #{multicls_vit_forward.1} parent=23 // pred_region
        %p486 = scmp.lt.s32.totalorder %s28, 1
        %s487 = scalar_select %p486, %s28, 1
        %s488 = smul.addr %s487, 16
        %s489 = smul.addr %s488, 4
        %s490 = scalar_lea.vmem %s8, %s489
      $region52: #{multicls_vit_forward.1} parent=23 // pred_fallthru
        _
      // Predicated region
      $region53: #{multicls_vit_forward.1} parent=23 // pred_check
        %p491 = pneg %p276
      $region54: #{multicls_vit_forward.1} parent=23 // pred_check_branch
        %493 = sbr.rel (%p491) target = $region56
      $region55: #{multicls_vit_forward.1} parent=23 // pred_region
        %p494 = scmp.lt.s32.totalorder %s28, 1
        %s495 = scalar_select %p494, %s28, 1
        %s496 = scalar_lea.vmem %s9, %s495
      $region56: #{multicls_vit_forward.1} parent=23 // pred_fallthru
        _
      // Predicated region
      $region57: #{multicls_vit_forward.1} parent=23 // pred_check
        %p497 = pneg %p302
      $region58: #{multicls_vit_forward.1} parent=23 // pred_check_branch
        %499 = sbr.rel (%p497) target = $region60
      $region59: #{multicls_vit_forward.1} parent=23 // pred_region
        %p500 = scmp.lt.s32.totalorder %s28, 1
        %s501 = scalar_select %p500, %s28, 1
        %s502 = smul.addr %s501, 64
        %s503 = smul.addr %s502, 4
        %s504 = scalar_lea.vmem %s10, %s503
      $region60: #{multicls_vit_forward.1} parent=23 // pred_fallthru
        _
      // Predicated region
      $region61: #{multicls_vit_forward.1} parent=23 // pred_check
        %p505 = pneg %p328
      $region62: #{multicls_vit_forward.1} parent=23 // pred_check_branch
        %507 = sbr.rel (%p505) target = $region64
      $region63: #{multicls_vit_forward.1} parent=23 // pred_region
        %p508 = scmp.lt.s32.totalorder %s28, 1
        %s509 = scalar_select %p508, %s28, 1
        %s510 = smul.addr %s509, 4
        %s511 = scalar_lea.vmem %s11, %s510
      $region64: #{multicls_vit_forward.1} parent=23 // pred_fallthru
        _
      // Predicated region
      $region65: #{multicls_vit_forward.1} parent=23 // pred_check
        %p512 = pneg %p354
      $region66: #{multicls_vit_forward.1} parent=23 // pred_check_branch
        %514 = sbr.rel (%p512) target = $region68
      $region67: #{multicls_vit_forward.1} parent=23 // pred_region
        %p515 = scmp.lt.s32.totalorder %s28, 1
        %s516 = scalar_select %p515, %s28, 1
        %s517 = smul.addr %s516, 64
        %s518 = smul.addr %s517, 4
        %s519 = scalar_lea.vmem %s12, %s518
      $region68: #{multicls_vit_forward.1} parent=23 // pred_fallthru
        _
      // Predicated region
      $region69: #{multicls_vit_forward.1} parent=23 // pred_check
        %p520 = pneg %p380
      $region70: #{multicls_vit_forward.1} parent=23 // pred_check_branch
        %522 = sbr.rel (%p520) target = $region72
      $region71: #{multicls_vit_forward.1} parent=23 // pred_region
        %p523 = scmp.lt.s32.totalorder %s28, 1
        %s524 = scalar_select %p523, %s28, 1
        %s525 = scalar_lea.vmem %s13, %s524
      $region72: #{multicls_vit_forward.1} parent=23 // pred_fallthru
        _
    $region24: #{multicls_vit_forward.1} parent=5 // pred_fallthru
      _
    %p526 = scmp.le.s32.totalorder 1, %s20
    %p527 = scmp.lt.s32.totalorder %s20, 5
    %p528 = pnand %p526, %p527
    %p529 = pneg %p528
    // Predicated region
    $region73: #{multicls_vit_forward.1} parent=5 // pred_check
      _
    $region74: #{multicls_vit_forward.1} parent=5 // pred_check_branch
      %531 = sbr.rel (%p528) target = $region76
    $region75: #{multicls_vit_forward.1} parent=5 // pred_region
      %s532 = ssub.s32 %s20, 1
      %p533 = scmp.lt.s32.totalorder %s29, 1
      %s534 = scalar_select %p533, %s29, 1
      %s535 = smul.addr %s534, 4
      %s536 = smul.addr %s535, 8
      %s537 = scalar_lea.vmem %s0, %s536
      %p538 = pneg %p58
      %p539 = pneg %p55
      %p540 = pneg %p79
      %p541 = pneg %p76
      %p542 = pneg %p100
      %p543 = pneg %p97
      %p544 = scmp.lt.s32.totalorder %s30, 1
      %s545 = scalar_select %p544, %s30, 1
      %s546 = smul.addr %s545, 4
      %s547 = scalar_lea.vmem %s3, %s546
      %p548 = pneg %p126
      %p549 = pneg %p123
      %p550 = scmp.lt.s32.totalorder %s30, 1
      %s551 = scalar_select %p550, %s30, 1
      %s552 = smul.addr %s551, 64
      %s553 = smul.addr %s552, 4
      %s554 = scalar_lea.vmem %s4, %s553
      %p555 = pneg %p152
      %p556 = pneg %p149
      %p557 = scmp.lt.s32.totalorder %s30, 1
      %s558 = scalar_select %p557, %s30, 1
      %s559 = smul.addr %s558, 64
      %s560 = smul.addr %s559, 4
      %s561 = scalar_lea.vmem %s5, %s560
      %p562 = pneg %p178
      %p563 = pneg %p175
      %p564 = scmp.lt.s32.totalorder %s30, 1
      %s565 = scalar_select %p564, %s30, 1
      %s566 = smul.addr %s565, 64
      %s567 = smul.addr %s566, 4
      %s568 = scalar_lea.vmem %s6, %s567
      %p569 = pneg %p204
      %p570 = pneg %p201
      %p571 = scmp.lt.s32.totalorder %s30, 1
      %s572 = scalar_select %p571, %s30, 1
      %s573 = smul.addr %s572, 12
      %s574 = scalar_lea.vmem %s7, %s573
      %p575 = pneg %p230
      %p576 = pneg %p227
      %p577 = scmp.lt.s32.totalorder %s30, 1
      %s578 = scalar_select %p577, %s30, 1
      %s579 = smul.addr %s578, 16
      %s580 = smul.addr %s579, 4
      %s581 = scalar_lea.vmem %s8, %s580
      %p582 = pneg %p256
      %p583 = pneg %p253
      %p584 = scmp.lt.s32.totalorder %s30, 1
      %s585 = scalar_select %p584, %s30, 1
      %s586 = scalar_lea.vmem %s9, %s585
      %p587 = pneg %p282
      %p588 = pneg %p279
      %p589 = scmp.lt.s32.totalorder %s30, 1
      %s590 = scalar_select %p589, %s30, 1
      %s591 = smul.addr %s590, 64
      %s592 = smul.addr %s591, 4
      %s593 = scalar_lea.vmem %s10, %s592
      %p594 = pneg %p308
      %p595 = pneg %p305
      %p596 = scmp.lt.s32.totalorder %s30, 1
      %s597 = scalar_select %p596, %s30, 1
      %s598 = smul.addr %s597, 4
      %s599 = scalar_lea.vmem %s11, %s598
      %p600 = pneg %p334
      %p601 = pneg %p331
      %p602 = scmp.lt.s32.totalorder %s30, 1
      %s603 = scalar_select %p602, %s30, 1
      %s604 = smul.addr %s603, 64
      %s605 = smul.addr %s604, 4
      %s606 = scalar_lea.vmem %s12, %s605
      %p607 = pneg %p360
      %p608 = pneg %p357
      %p609 = scmp.lt.s32.totalorder %s30, 1
      %s610 = scalar_select %p609, %s30, 1
      %s611 = scalar_lea.vmem %s13, %s610
      %p612 = pneg %p386
      %p613 = pneg %p383
      %p614 = pneg %p412
      %p615 = pneg %p409
      %p616 = scmp.lt.s32.totalorder %s29, 1
      %s617 = scalar_select %p616, %s29, 1
      %s618 = smul.addr %s617, 4
      %s619 = smul.addr %s618, 8
      %s620 = scalar_lea.vmem %s14, %s619
      %p621 = scmp.lt.s32.totalorder %s29, 1
      %s622 = scalar_select %p621, %s29, 1
      %s623 = smul.addr %s622, 4
      %s624 = smul.addr %s623, 8
      %s625 = scalar_lea.vmem %s0, %s624
      %p626 = scmp.lt.s32.totalorder %s30, 1
      %s627 = scalar_select %p626, %s30, 1
      %s628 = smul.addr %s627, 4
      %s629 = scalar_lea.vmem %s3, %s628
      %p630 = scmp.lt.s32.totalorder %s30, 1
      %s631 = scalar_select %p630, %s30, 1
      %s632 = smul.addr %s631, 64
      %s633 = smul.addr %s632, 4
      %s634 = scalar_lea.vmem %s4, %s633
      %p635 = scmp.lt.s32.totalorder %s30, 1
      %s636 = scalar_select %p635, %s30, 1
      %s637 = smul.addr %s636, 64
      %s638 = smul.addr %s637, 4
      %s639 = scalar_lea.vmem %s5, %s638
      %p640 = scmp.lt.s32.totalorder %s30, 1
      %s641 = scalar_select %p640, %s30, 1
      %s642 = smul.addr %s641, 64
      %s643 = smul.addr %s642, 4
      %s644 = scalar_lea.vmem %s6, %s643
      %p645 = scmp.lt.s32.totalorder %s30, 1
      %s646 = scalar_select %p645, %s30, 1
      %s647 = smul.addr %s646, 12
      %s648 = scalar_lea.vmem %s7, %s647
      %p649 = scmp.lt.s32.totalorder %s30, 1
      %s650 = scalar_select %p649, %s30, 1
      %s651 = smul.addr %s650, 16
      %s652 = smul.addr %s651, 4
      %s653 = scalar_lea.vmem %s8, %s652
      %p654 = scmp.lt.s32.totalorder %s30, 1
      %s655 = scalar_select %p654, %s30, 1
      %s656 = scalar_lea.vmem %s9, %s655
      %p657 = scmp.lt.s32.totalorder %s30, 1
      %s658 = scalar_select %p657, %s30, 1
      %s659 = smul.addr %s658, 64
      %s660 = smul.addr %s659, 4
      %s661 = scalar_lea.vmem %s10, %s660
      %p662 = scmp.lt.s32.totalorder %s30, 1
      %s663 = scalar_select %p662, %s30, 1
      %s664 = smul.addr %s663, 4
      %s665 = scalar_lea.vmem %s11, %s664
      %p666 = scmp.lt.s32.totalorder %s30, 1
      %s667 = scalar_select %p666, %s30, 1
      %s668 = smul.addr %s667, 64
      %s669 = smul.addr %s668, 4
      %s670 = scalar_lea.vmem %s12, %s669
      %p671 = scmp.lt.s32.totalorder %s30, 1
      %s672 = scalar_select %p671, %s30, 1
      %s673 = scalar_lea.vmem %s13, %s672
      %p674 = scmp.lt.s32.totalorder %s29, 1
      %s675 = scalar_select %p674, %s29, 1
      %s676 = smul.addr %s675, 4
      %s677 = smul.addr %s676, 8
      %s678 = scalar_lea.vmem %s14, %s677
      %p680 = scmp.eq.s32.totalorder %s30, 0
      // Predicated region
      $region77: #{multicls_vit_forward.1} parent=75 // pred_check
        %p681 = pneg %p680
      $region78: #{multicls_vit_forward.1} parent=75 // pred_check_branch
        %683 = sbr.rel (%p681) target = $region80
      $region79: #{multicls_vit_forward.1} parent=75 // pred_region
        %v684 = vld [vmem:[%s625] sm:$0xff]
        %v685 = vld [vmem:[%s625 + $0x8] sm:$0xff]
        %v686 = vld [vmem:[%s625 + $0x10] sm:$0xff]
        %v687 = vld [vmem:[%s625 + $0x18] sm:$0xff]
        %v688 = vpack.c.bf16 %v685, %v684
        %v689 = vpack.c.bf16 %v687, %v686
        %v690 = vld [vmem:[%s2] sm:$0xf]
        %v691 = vld [vmem:[%s2 + $0x4] sm:$0xf]
        %v692 = vld [vmem:[%s2 + $0x8] sm:$0xf]
        %v693 = vld [vmem:[%s2 + $0xc] sm:$0xf]
        %v694 = vld [vmem:[%s2 + $0x10] sm:$0xf]
        %v695 = vld [vmem:[%s2 + $0x14] sm:$0xf]
        %v696 = vld [vmem:[%s2 + $0x18] sm:$0xf]
        %v697 = vld [vmem:[%s2 + $0x1c] sm:$0xf]
        %v698 = vld [vmem:[%s2 + $0x20] sm:$0xf]
        %v699 = vld [vmem:[%s2 + $0x24] sm:$0xf]
        %v700 = vld [vmem:[%s2 + $0x28] sm:$0xf]
        %v701 = vld [vmem:[%s2 + $0x2c] sm:$0xf]
        %v702 = vld [vmem:[%s2 + $0x30] sm:$0xf]
        %v703 = vld [vmem:[%s2 + $0x34] sm:$0xf]
        %v704 = vld [vmem:[%s2 + $0x38] sm:$0xf]
        %v705 = vld [vmem:[%s2 + $0x3c] sm:$0xf]
        %v706 = vld [vmem:[%s1] sm:$0xff]
        %v707 = vld [vmem:[%s1 + $0x8] sm:$0xff]
        %v708 = vld [vmem:[%s1 + $0x10] sm:$0xff]
        %v709 = vld [vmem:[%s1 + $0x18] sm:$0xff]
        %v726 = vunpack.c.l.b16 %v690
        %v727 = vunpack.c.l.b16 %v691
        %v728 = vunpack.c.l.b16 %v692
        %v729 = vunpack.c.l.b16 %v693
        %v730 = vunpack.c.l.b16 %v694
        %v731 = vunpack.c.l.b16 %v695
        %v732 = vunpack.c.l.b16 %v696
        %v733 = vunpack.c.l.b16 %v697
        %v734 = vunpack.c.l.b16 %v698
        %v735 = vunpack.c.l.b16 %v699
        %v736 = vunpack.c.l.b16 %v700
        %v737 = vunpack.c.l.b16 %v701
        %v738 = vunpack.c.l.b16 %v702
        %v739 = vunpack.c.l.b16 %v703
        %v740 = vunpack.c.l.b16 %v704
        %v741 = vunpack.c.l.b16 %v705
        %v742 = vpack.c.b16 %v727, %v726
        %v743 = vpack.c.b16 %v729, %v728
        %v744 = vpack.c.b16 %v731, %v730
        %v745 = vpack.c.b16 %v733, %v732
        %v746 = vpack.c.b16 %v735, %v734
        %v747 = vpack.c.b16 %v737, %v736
        %v748 = vpack.c.b16 %v739, %v738
        %v749 = vpack.c.b16 %v741, %v740
        %758 = vmatprep.subr.bf16.mxu0 0
        %759 = vmatpush1.bf16.msra.mxu0 %v742
        %760 = vmatprep.subr.bf16.mxu0 0
        %761 = vmatpush1.bf16.msra.mxu0 %v743
        %762 = vmatprep.subr.bf16.mxu0 0
        %763 = vmatpush1.bf16.msra.mxu0 %v744
        %764 = vmatprep.subr.bf16.mxu0 0
        %765 = vmatpush1.bf16.msra.mxu0 %v745
        %766 = vmatprep.subr.bf16.mxu0 0
        %767 = vmatpush1.bf16.msra.mxu0 %v746
        %768 = vmatprep.subr.bf16.mxu0 0
        %769 = vmatpush1.bf16.msra.mxu0 %v747
        %770 = vmatprep.subr.bf16.mxu0 0
        %771 = vmatpush1.bf16.msra.mxu0 %v748
        %772 = vmatprep.subr.bf16.mxu0 0
        %773 = vmatpush1.bf16.msra.mxu0 %v749
        %774 = vmatprep.subr.bf16.mxu0 0
        %775 = vmatpush1.bf16.msra.mxu0 0
        %776 = vmatprep.subr.bf16.mxu0 0
        %777 = vmatpush1.bf16.msra.mxu0 0
        %778 = vmatprep.subr.bf16.mxu0 0
        %779 = vmatpush1.bf16.msra.mxu0 0
        %780 = vmatprep.subr.bf16.mxu0 0
        %781 = vmatpush1.bf16.msra.mxu0 0
        %782 = vmatprep.subr.bf16.mxu0 0
        %783 = vmatpush1.bf16.msra.mxu0 0
        %784 = vmatprep.subr.bf16.mxu0 0
        %785 = vmatpush1.bf16.msra.mxu0 0
        %786 = vmatprep.subr.bf16.mxu0 0
        %787 = vmatpush1.bf16.msra.mxu0 0
        %788 = vmatprep.subr.bf16.mxu0 0
        %789 = vmatpush1.bf16.msra.mxu0 0
        %790 = vmatprep.mubr.bf16.mxu0 0
        %791 = vmatmul.mubr.bf16.gmra.mrb[0].mxu0 %v688
        %v792 = vpop.f32.mrb[0].mxu0
        %v793 = vadd.f32 %v706, %v792
        %v794 = vpop.f32.mrb[0].mxu0
        %v795 = vpop.f32.mrb[0].mxu0
        %v796 = vadd.f32 %v707, %v795
        %v797 = vpop.f32.mrb[0].mxu0
        %798 = vmatprep.mubr.bf16.mxu0 0
        %799 = vmatmul.mubr.bf16.gmra.mrb[0].mxu0 %v689
        %v800 = vpop.f32.mrb[0].mxu0
        %v801 = vadd.f32 %v708, %v800
        %v802 = vpop.f32.mrb[0].mxu0
        %v803 = vpop.f32.mrb[0].mxu0
        %v804 = vadd.f32 %v709, %v803
        %v805 = vpop.f32.mrb[0].mxu0
        %806 = vdwg.mxu0
        %807 = vst [vmem:[%s678] sm:$0xff] %v793
        %808 = vst [vmem:[%s678 + $0x8] sm:$0xff] %v796
        %809 = vst [vmem:[%s678 + $0x10] sm:$0xff] %v801
        %810 = vst [vmem:[%s678 + $0x18] sm:$0xff] %v804
      $region80: #{multicls_vit_forward.1} parent=75 // pred_fallthru
        _
      %v811 = vld [vmem:[%s678] sm:$0xff]
      %v812 = vld [vmem:[%s678 + $0x8] sm:$0xff]
      %v813 = vld [vmem:[%s678 + $0x10] sm:$0xff]
      %v814 = vld [vmem:[%s678 + $0x18] sm:$0xff]
      %v815 = vlaneseq
      %v816 = vand.u32 %v815, 127
      %vm817 = vcmp.lt.s32.totalorder %v816, 23
      %v818 = vsel %vm817, 0.0, -1e+09
      %v819 = vld [vmem:[%s629] sm:$0xf]
      %820 = vadd.xlane.f32.xlu0 %v811
      %v821 = vpop.xlane.xlu0 %820
      %822 = vadd.xlane.f32.xlu0 %v812
      %v823 = vpop.xlane.xlu0 %822
      %824 = vadd.xlane.f32.xlu0 %v813
      %v825 = vpop.xlane.xlu0 %824
      %826 = vadd.xlane.f32.xlu0 %v814
      %v827 = vpop.xlane.xlu0 %826
      %v828 = vrcp.pop 128.0
      %v829 = vmul.f32 %v821, %v828
      %v830 = vmul.f32 %v823, %v828
      %v831 = vmul.f32 %v825, %v828
      %v832 = vmul.f32 %v827, %v828
      %v833 = vsub.f32 %v811, %v829
      %v834 = vsub.f32 %v812, %v830
      %v835 = vsub.f32 %v813, %v831
      %v836 = vsub.f32 %v814, %v832
      %v837 = vmul.f32 %v833, %v833
      %v838 = vmul.f32 %v834, %v834
      %v839 = vmul.f32 %v835, %v835
      %v840 = vmul.f32 %v836, %v836
      %841 = vadd.xlane.f32.xlu0 %v837
      %v842 = vpop.xlane.xlu0 %841
      %843 = vadd.xlane.f32.xlu0 %v838
      %v844 = vpop.xlane.xlu0 %843
      %845 = vadd.xlane.f32.xlu0 %v839
      %v846 = vpop.xlane.xlu0 %845
      %847 = vadd.xlane.f32.xlu0 %v840
      %v848 = vpop.xlane.xlu0 %847
      %v849 = vmul.f32 %v842, %v828
      %v850 = vmul.f32 %v844, %v828
      %v851 = vmul.f32 %v846, %v828
      %v852 = vmul.f32 %v848, %v828
      %v853 = vadd.f32 %v849, 1e-12
      %v854 = vadd.f32 %v850, 1e-12
      %v855 = vadd.f32 %v851, 1e-12
      %v856 = vadd.f32 %v852, 1e-12
      %v857 = vrsqrt.pop %v853
      %v858 = vrsqrt.pop %v854
      %v859 = vrsqrt.pop %v855
      %v860 = vrsqrt.pop %v856
      %v861 = vmul.f32 %v833, %v857
      %v862 = vmul.f32 %v834, %v858
      %v863 = vmul.f32 %v835, %v859
      %v864 = vmul.f32 %v836, %v860
      %v865 = vlaneseq
      %v866 = vshrl.u32 %v865, 7
      %v867 = vsub.s32 0, %v866
      %v868 = vrot.slane %v819, %v867
      %v869 = vmul.f32 %v861, %v868
      %v870 = vmul.f32 %v862, %v868
      %v871 = vmul.f32 %v863, %v868
      %v872 = vmul.f32 %v864, %v868
      %v873 = vlaneseq
      %v874 = vshrl.u32 %v873, 7
      %v875 = vsub.s32 1, %v874
      %v876 = vrot.slane %v819, %v875
      %v877 = vadd.f32 %v869, %v876
      %v878 = vadd.f32 %v870, %v876
      %v879 = vadd.f32 %v871, %v876
      %v880 = vadd.f32 %v872, %v876
      %v881 = vpack.c.bf16 %v878, %v877
      %v882 = vpack.c.bf16 %v880, %v879
      %v883 = vld [vmem:[%s634] sm:$0xf]
      %v884 = vld [vmem:[%s634 + $0x4] sm:$0xf]
      %v885 = vld [vmem:[%s634 + $0x8] sm:$0xf]
      %v886 = vld [vmem:[%s634 + $0xc] sm:$0xf]
      %v887 = vld [vmem:[%s634 + $0x10] sm:$0xf]
      %v888 = vld [vmem:[%s634 + $0x14] sm:$0xf]
      %v889 = vld [vmem:[%s634 + $0x18] sm:$0xf]
      %v890 = vld [vmem:[%s634 + $0x1c] sm:$0xf]
      %v891 = vld [vmem:[%s634 + $0x20] sm:$0xf]
      %v892 = vld [vmem:[%s634 + $0x24] sm:$0xf]
      %v893 = vld [vmem:[%s634 + $0x28] sm:$0xf]
      %v894 = vld [vmem:[%s634 + $0x2c] sm:$0xf]
      %v895 = vld [vmem:[%s634 + $0x30] sm:$0xf]
      %v896 = vld [vmem:[%s634 + $0x34] sm:$0xf]
      %v897 = vld [vmem:[%s634 + $0x38] sm:$0xf]
      %v898 = vld [vmem:[%s634 + $0x3c] sm:$0xf]
      %v899 = vld [vmem:[%s648] sm:$0x1]
      %v901 = vlaneseq
      %v902 = vshrl.u32 %v901, 7
      %v903 = vsub.s32 0, %v902
      %v904 = vrot.slane %v899, %v903
      %v922 = vunpack.c.l.b16 %v883
      %v923 = vunpack.c.l.b16 %v884
      %v924 = vunpack.c.l.b16 %v885
      %v925 = vunpack.c.l.b16 %v886
      %v926 = vunpack.c.l.b16 %v887
      %v927 = vunpack.c.l.b16 %v888
      %v928 = vunpack.c.l.b16 %v889
      %v929 = vunpack.c.l.b16 %v890
      %v930 = vunpack.c.l.b16 %v891
      %v931 = vunpack.c.l.b16 %v892
      %v932 = vunpack.c.l.b16 %v893
      %v933 = vunpack.c.l.b16 %v894
      %v934 = vunpack.c.l.b16 %v895
      %v935 = vunpack.c.l.b16 %v896
      %v936 = vunpack.c.l.b16 %v897
      %v937 = vunpack.c.l.b16 %v898
      %v938 = vpack.c.b16 %v923, %v922
      %v939 = vpack.c.b16 %v925, %v924
      %v940 = vpack.c.b16 %v927, %v926
      %v941 = vpack.c.b16 %v929, %v928
      %v942 = vpack.c.b16 %v931, %v930
      %v943 = vpack.c.b16 %v933, %v932
      %v944 = vpack.c.b16 %v935, %v934
      %v945 = vpack.c.b16 %v937, %v936
      %954 = vmatprep.subr.bf16.mxu0 0
      %955 = vmatpush1.bf16.msra.mxu0 %v938
      %956 = vmatprep.subr.bf16.mxu0 0
      %957 = vmatpush1.bf16.msra.mxu0 %v939
      %958 = vmatprep.subr.bf16.mxu0 0
      %959 = vmatpush1.bf16.msra.mxu0 %v940
      %960 = vmatprep.subr.bf16.mxu0 0
      %961 = vmatpush1.bf16.msra.mxu0 %v941
      %962 = vmatprep.subr.bf16.mxu0 0
      %963 = vmatpush1.bf16.msra.mxu0 %v942
      %964 = vmatprep.subr.bf16.mxu0 0
      %965 = vmatpush1.bf16.msra.mxu0 %v943
      %966 = vmatprep.subr.bf16.mxu0 0
      %967 = vmatpush1.bf16.msra.mxu0 %v944
      %968 = vmatprep.subr.bf16.mxu0 0
      %969 = vmatpush1.bf16.msra.mxu0 %v945
      %970 = vmatprep.subr.bf16.mxu0 0
      %971 = vmatpush1.bf16.msra.mxu0 0
      %972 = vmatprep.subr.bf16.mxu0 0
      %973 = vmatpush1.bf16.msra.mxu0 0
      %974 = vmatprep.subr.bf16.mxu0 0
      %975 = vmatpush1.bf16.msra.mxu0 0
      %976 = vmatprep.subr.bf16.mxu0 0
      %977 = vmatpush1.bf16.msra.mxu0 0
      %978 = vmatprep.subr.bf16.mxu0 0
      %979 = vmatpush1.bf16.msra.mxu0 0
      %980 = vmatprep.subr.bf16.mxu0 0
      %981 = vmatpush1.bf16.msra.mxu0 0
      %982 = vmatprep.subr.bf16.mxu0 0
      %983 = vmatpush1.bf16.msra.mxu0 0
      %984 = vmatprep.subr.bf16.mxu0 0
      %985 = vmatpush1.bf16.msra.mxu0 0
      %986 = vmatprep.mubr.bf16.mxu0 0
      %987 = vmatmul.mubr.bf16.gmra.mrb[0].mxu0 %v881
      %v988 = vpop.f32.mrb[0].mxu0
      %v989 = vadd.f32 %v904, %v988
      %v990 = vpop.f32.mrb[0].mxu0
      %v991 = vpop.f32.mrb[0].mxu0
      %v992 = vadd.f32 %v904, %v991
      %v993 = vpop.f32.mrb[0].mxu0
      %994 = vmatprep.mubr.bf16.mxu0 0
      %995 = vmatmul.mubr.bf16.gmra.mrb[0].mxu0 %v882
      %v996 = vpop.f32.mrb[0].mxu0
      %v997 = vadd.f32 %v904, %v996
      %v998 = vpop.f32.mrb[0].mxu0
      %v999 = vpop.f32.mrb[0].mxu0
      %v1000 = vadd.f32 %v904, %v999
      %v1001 = vpop.f32.mrb[0].mxu0
      %1002 = vdwg.mxu0
      %v1003 = vld [vmem:[%s639] sm:$0xf]
      %v1004 = vld [vmem:[%s639 + $0x4] sm:$0xf]
      %v1005 = vld [vmem:[%s639 + $0x8] sm:$0xf]
      %v1006 = vld [vmem:[%s639 + $0xc] sm:$0xf]
      %v1007 = vld [vmem:[%s639 + $0x10] sm:$0xf]
      %v1008 = vld [vmem:[%s639 + $0x14] sm:$0xf]
      %v1009 = vld [vmem:[%s639 + $0x18] sm:$0xf]
      %v1010 = vld [vmem:[%s639 + $0x1c] sm:$0xf]
      %v1011 = vld [vmem:[%s639 + $0x20] sm:$0xf]
      %v1012 = vld [vmem:[%s639 + $0x24] sm:$0xf]
      %v1013 = vld [vmem:[%s639 + $0x28] sm:$0xf]
      %v1014 = vld [vmem:[%s639 + $0x2c] sm:$0xf]
      %v1015 = vld [vmem:[%s639 + $0x30] sm:$0xf]
      %v1016 = vld [vmem:[%s639 + $0x34] sm:$0xf]
      %v1017 = vld [vmem:[%s639 + $0x38] sm:$0xf]
      %v1018 = vld [vmem:[%s639 + $0x3c] sm:$0xf]
      %s1019 = scalar_lea.vmem %s648, 4
      %v1020 = vld [vmem:[%s1019] sm:$0x1]
      %v1022 = vlaneseq
      %v1023 = vshrl.u32 %v1022, 7
      %v1024 = vsub.s32 0, %v1023
      %v1025 = vrot.slane %v1020, %v1024
      %v1043 = vunpack.c.l.b16 %v1003
      %v1044 = vunpack.c.l.b16 %v1004
      %v1045 = vunpack.c.l.b16 %v1005
      %v1046 = vunpack.c.l.b16 %v1006
      %v1047 = vunpack.c.l.b16 %v1007
      %v1048 = vunpack.c.l.b16 %v1008
      %v1049 = vunpack.c.l.b16 %v1009
      %v1050 = vunpack.c.l.b16 %v1010
      %v1051 = vunpack.c.l.b16 %v1011
      %v1052 = vunpack.c.l.b16 %v1012
      %v1053 = vunpack.c.l.b16 %v1013
      %v1054 = vunpack.c.l.b16 %v1014
      %v1055 = vunpack.c.l.b16 %v1015
      %v1056 = vunpack.c.l.b16 %v1016
      %v1057 = vunpack.c.l.b16 %v1017
      %v1058 = vunpack.c.l.b16 %v1018
      %v1059 = vpack.c.b16 %v1044, %v1043
      %v1060 = vpack.c.b16 %v1046, %v1045
      %v1061 = vpack.c.b16 %v1048, %v1047
      %v1062 = vpack.c.b16 %v1050, %v1049
      %v1063 = vpack.c.b16 %v1052, %v1051
      %v1064 = vpack.c.b16 %v1054, %v1053
      %v1065 = vpack.c.b16 %v1056, %v1055
      %v1066 = vpack.c.b16 %v1058, %v1057
      %1075 = vmatprep.subr.bf16.mxu0 0
      %1076 = vmatpush1.bf16.msra.mxu0 %v1059
      %1077 = vmatprep.subr.bf16.mxu0 0
      %1078 = vmatpush1.bf16.msra.mxu0 %v1060
      %1079 = vmatprep.subr.bf16.mxu0 0
      %1080 = vmatpush1.bf16.msra.mxu0 %v1061
      %1081 = vmatprep.subr.bf16.mxu0 0
      %1082 = vmatpush1.bf16.msra.mxu0 %v1062
      %1083 = vmatprep.subr.bf16.mxu0 0
      %1084 = vmatpush1.bf16.msra.mxu0 %v1063
      %1085 = vmatprep.subr.bf16.mxu0 0
      %1086 = vmatpush1.bf16.msra.mxu0 %v1064
      %1087 = vmatprep.subr.bf16.mxu0 0
      %1088 = vmatpush1.bf16.msra.mxu0 %v1065
      %1089 = vmatprep.subr.bf16.mxu0 0
      %1090 = vmatpush1.bf16.msra.mxu0 %v1066
      %1091 = vmatprep.subr.bf16.mxu0 0
      %1092 = vmatpush1.bf16.msra.mxu0 0
      %1093 = vmatprep.subr.bf16.mxu0 0
      %1094 = vmatpush1.bf16.msra.mxu0 0
      %1095 = vmatprep.subr.bf16.mxu0 0
      %1096 = vmatpush1.bf16.msra.mxu0 0
      %1097 = vmatprep.subr.bf16.mxu0 0
      %1098 = vmatpush1.bf16.msra.mxu0 0
      %1099 = vmatprep.subr.bf16.mxu0 0
      %1100 = vmatpush1.bf16.msra.mxu0 0
      %1101 = vmatprep.subr.bf16.mxu0 0
      %1102 = vmatpush1.bf16.msra.mxu0 0
      %1103 = vmatprep.subr.bf16.mxu0 0
      %1104 = vmatpush1.bf16.msra.mxu0 0
      %1105 = vmatprep.subr.bf16.mxu0 0
      %1106 = vmatpush1.bf16.msra.mxu0 0
      %1107 = vmatprep.mubr.bf16.mxu0 0
      %1108 = vmatmul.mubr.bf16.gmra.mrb[0].mxu0 %v881
      %v1109 = vpop.f32.mrb[0].mxu0
      %v1110 = vadd.f32 %v1025, %v1109
      %v1111 = vpop.f32.mrb[0].mxu0
      %v1112 = vpop.f32.mrb[0].mxu0
      %v1113 = vadd.f32 %v1025, %v1112
      %v1114 = vpop.f32.mrb[0].mxu0
      %1115 = vmatprep.mubr.bf16.mxu0 0
      %1116 = vmatmul.mubr.bf16.gmra.mrb[0].mxu0 %v882
      %v1117 = vpop.f32.mrb[0].mxu0
      %v1118 = vadd.f32 %v1025, %v1117
      %v1119 = vpop.f32.mrb[0].mxu0
      %v1120 = vpop.f32.mrb[0].mxu0
      %v1121 = vadd.f32 %v1025, %v1120
      %v1122 = vpop.f32.mrb[0].mxu0
      %1123 = vdwg.mxu0
      %v1124 = vld [vmem:[%s644] sm:$0xf]
      %v1125 = vld [vmem:[%s644 + $0x4] sm:$0xf]
      %v1126 = vld [vmem:[%s644 + $0x8] sm:$0xf]
      %v1127 = vld [vmem:[%s644 + $0xc] sm:$0xf]
      %v1128 = vld [vmem:[%s644 + $0x10] sm:$0xf]
      %v1129 = vld [vmem:[%s644 + $0x14] sm:$0xf]
      %v1130 = vld [vmem:[%s644 + $0x18] sm:$0xf]
      %v1131 = vld [vmem:[%s644 + $0x1c] sm:$0xf]
      %v1132 = vld [vmem:[%s644 + $0x20] sm:$0xf]
      %v1133 = vld [vmem:[%s644 + $0x24] sm:$0xf]
      %v1134 = vld [vmem:[%s644 + $0x28] sm:$0xf]
      %v1135 = vld [vmem:[%s644 + $0x2c] sm:$0xf]
      %v1136 = vld [vmem:[%s644 + $0x30] sm:$0xf]
      %v1137 = vld [vmem:[%s644 + $0x34] sm:$0xf]
      %v1138 = vld [vmem:[%s644 + $0x38] sm:$0xf]
      %v1139 = vld [vmem:[%s644 + $0x3c] sm:$0xf]
      %s1140 = scalar_lea.vmem %s648, 8
      %v1141 = vld [vmem:[%s1140] sm:$0x1]
      %v1143 = vlaneseq
      %v1144 = vshrl.u32 %v1143, 7
      %v1145 = vsub.s32 0, %v1144
      %v1146 = vrot.slane %v1141, %v1145
      %v1164 = vunpack.c.l.b16 %v1124
      %v1165 = vunpack.c.l.b16 %v1125
      %v1166 = vunpack.c.l.b16 %v1126
      %v1167 = vunpack.c.l.b16 %v1127
      %v1168 = vunpack.c.l.b16 %v1128
      %v1169 = vunpack.c.l.b16 %v1129
      %v1170 = vunpack.c.l.b16 %v1130
      %v1171 = vunpack.c.l.b16 %v1131
      %v1172 = vunpack.c.l.b16 %v1132
      %v1173 = vunpack.c.l.b16 %v1133
      %v1174 = vunpack.c.l.b16 %v1134
      %v1175 = vunpack.c.l.b16 %v1135
      %v1176 = vunpack.c.l.b16 %v1136
      %v1177 = vunpack.c.l.b16 %v1137
      %v1178 = vunpack.c.l.b16 %v1138
      %v1179 = vunpack.c.l.b16 %v1139
      %v1180 = vpack.c.b16 %v1165, %v1164
      %v1181 = vpack.c.b16 %v1167, %v1166
      %v1182 = vpack.c.b16 %v1169, %v1168
      %v1183 = vpack.c.b16 %v1171, %v1170
      %v1184 = vpack.c.b16 %v1173, %v1172
      %v1185 = vpack.c.b16 %v1175, %v1174
      %v1186 = vpack.c.b16 %v1177, %v1176
      %v1187 = vpack.c.b16 %v1179, %v1178
      %1196 = vmatprep.subr.bf16.mxu0 0
      %1197 = vmatpush1.bf16.msra.mxu0 %v1180
      %1198 = vmatprep.subr.bf16.mxu0 0
      %1199 = vmatpush1.bf16.msra.mxu0 %v1181
      %1200 = vmatprep.subr.bf16.mxu0 0
      %1201 = vmatpush1.bf16.msra.mxu0 %v1182
      %1202 = vmatprep.subr.bf16.mxu0 0
      %1203 = vmatpush1.bf16.msra.mxu0 %v1183
      %1204 = vmatprep.subr.bf16.mxu0 0
      %1205 = vmatpush1.bf16.msra.mxu0 %v1184
      %1206 = vmatprep.subr.bf16.mxu0 0
      %1207 = vmatpush1.bf16.msra.mxu0 %v1185
      %1208 = vmatprep.subr.bf16.mxu0 0
      %1209 = vmatpush1.bf16.msra.mxu0 %v1186
      %1210 = vmatprep.subr.bf16.mxu0 0
      %1211 = vmatpush1.bf16.msra.mxu0 %v1187
      %1212 = vmatprep.subr.bf16.mxu0 0
      %1213 = vmatpush1.bf16.msra.mxu0 0
      %1214 = vmatprep.subr.bf16.mxu0 0
      %1215 = vmatpush1.bf16.msra.mxu0 0
      %1216 = vmatprep.subr.bf16.mxu0 0
      %1217 = vmatpush1.bf16.msra.mxu0 0
      %1218 = vmatprep.subr.bf16.mxu0 0
      %1219 = vmatpush1.bf16.msra.mxu0 0
      %1220 = vmatprep.subr.bf16.mxu0 0
      %1221 = vmatpush1.bf16.msra.mxu0 0
      %1222 = vmatprep.subr.bf16.mxu0 0
      %1223 = vmatpush1.bf16.msra.mxu0 0
      %1224 = vmatprep.subr.bf16.mxu0 0
      %1225 = vmatpush1.bf16.msra.mxu0 0
      %1226 = vmatprep.subr.bf16.mxu0 0
      %1227 = vmatpush1.bf16.msra.mxu0 0
      %1228 = vmatprep.mubr.bf16.mxu0 0
      %1229 = vmatmul.mubr.bf16.gmra.mrb[0].mxu0 %v881
      %v1230 = vpop.f32.mrb[0].mxu0
      %v1231 = vadd.f32 %v1146, %v1230
      %v1232 = vpop.f32.mrb[0].mxu0
      %v1233 = vpop.f32.mrb[0].mxu0
      %v1234 = vadd.f32 %v1146, %v1233
      %v1235 = vpop.f32.mrb[0].mxu0
      %1236 = vmatprep.mubr.bf16.mxu0 0
      %1237 = vmatmul.mubr.bf16.gmra.mrb[0].mxu0 %v882
      %v1238 = vpop.f32.mrb[0].mxu0
      %v1239 = vadd.f32 %v1146, %v1238
      %v1240 = vpop.f32.mrb[0].mxu0
      %v1241 = vpop.f32.mrb[0].mxu0
      %v1242 = vadd.f32 %v1146, %v1241
      %v1243 = vpop.f32.mrb[0].mxu0
      %1244 = vdwg.mxu0
      %v1245 = vpack.c.bf16 %v992, %v989
      %v1246 = vpack.c.bf16 %v1000, %v997
      %v1247 = vpack.c.bf16 %v1113, %v1110
      %v1248 = vpack.c.bf16 %v1121, %v1118
      %vm1249 = vcmask 261120
      %v1251 = vsel %vm1249, %v1245, 0
      %v1254 = vsel %vm1249, %v1246, 0
      %v1257 = vsel %vm1249, %v1247, 0
      %v1260 = vsel %vm1249, %v1248, 0
      %1262 = vmatprep.subr.bf16.mxu0 0
      %1263 = vmatpush1.bf16.xpose.msra.mxu0 %v1257
      %1264 = vmatprep.subr.bf16.mxu0 0
      %1265 = vmatpush1.bf16.xpose.msra.mxu0 %v1260
      %1266 = vmatprep.subr.bf16.mxu0 0
      %1267 = vmatpush1.bf16.xpose.msra.mxu0 0
      %1268 = vmatprep.subr.bf16.mxu0 0
      %1269 = vmatpush1.bf16.xpose.msra.mxu0 0
      %1270 = vmatprep.subr.bf16.mxu0 0
      %1271 = vmatpush1.bf16.xpose.msra.mxu0 0
      %1272 = vmatprep.subr.bf16.mxu0 0
      %1273 = vmatpush1.bf16.xpose.msra.mxu0 0
      %1274 = vmatprep.subr.bf16.mxu0 0
      %1275 = vmatpush1.bf16.xpose.msra.mxu0 0
      %1276 = vmatprep.subr.bf16.mxu0 0
      %1277 = vmatpush1.bf16.xpose.msra.mxu0 0
      %1278 = vmatprep.subr.bf16.mxu0 0
      %1279 = vmatpush1.bf16.xpose.msra.mxu0 0
      %1280 = vmatprep.subr.bf16.mxu0 0
      %1281 = vmatpush1.bf16.xpose.msra.mxu0 0
      %1282 = vmatprep.subr.bf16.mxu0 0
      %1283 = vmatpush1.bf16.xpose.msra.mxu0 0
      %1284 = vmatprep.subr.bf16.mxu0 0
      %1285 = vmatpush1.bf16.xpose.msra.mxu0 0
      %1286 = vmatprep.subr.bf16.mxu0 0
      %1287 = vmatpush1.bf16.xpose.msra.mxu0 0
      %1288 = vmatprep.subr.bf16.mxu0 0
      %1289 = vmatpush1.bf16.xpose.msra.mxu0 0
      %1290 = vmatprep.subr.bf16.mxu0 0
      %1291 = vmatpush1.bf16.xpose.msra.mxu0 0
      %1292 = vmatprep.subr.bf16.mxu0 0
      %1293 = vmatpush1.bf16.xpose.msra.mxu0 0
      %1294 = vmatprep.mubr.bf16.mxu0 0
      %1295 = vmatmul.mubr.bf16.gmra.mrb[0].mxu0 %v1251
      %v1296 = vpop.f32.mrb[0].mxu0
      %v1297 = vadd.f32 0.0, %v1296
      %v1298 = vpop.f32.mrb[0].mxu0
      %v1299 = vpop.f32.mrb[0].mxu0
      %v1300 = vadd.f32 0.0, %v1299
      %v1301 = vpop.f32.mrb[0].mxu0
      %1302 = vmatprep.mubr.bf16.mxu0 0
      %1303 = vmatmul.mubr.bf16.gmra.mrb[0].mxu0 %v1254
      %v1304 = vpop.f32.mrb[0].mxu0
      %v1305 = vadd.f32 0.0, %v1304
      %v1306 = vpop.f32.mrb[0].mxu0
      %v1307 = vpop.f32.mrb[0].mxu0
      %v1308 = vadd.f32 0.0, %v1307
      %v1309 = vpop.f32.mrb[0].mxu0
      %1310 = vdwg.mxu0
      %v1311 = vmul.f32 %v1297, 0.17677669
      %v1312 = vmul.f32 %v1300, 0.17677669
      %v1313 = vmul.f32 %v1305, 0.17677669
      %v1314 = vmul.f32 %v1308, 0.17677669
      %v1315 = vadd.f32 %v1311, %v818
      %v1316 = vadd.f32 %v1312, %v818
      %v1317 = vadd.f32 %v1313, %v818
      %v1318 = vadd.f32 %v1314, %v818
      %v1319 = vsel %vm1249, %v1315, -inf
      %1320 = vmax.xlane.f32.xlu0 %v1319
      %v1321 = vpop.xlane.xlu0 %1320
      %v1322 = vsel %vm1249, %v1316, -inf
      %1323 = vmax.xlane.f32.xlu0 %v1322
      %v1324 = vpop.xlane.xlu0 %1323
      %v1325 = vsel %vm1249, %v1317, -inf
      %1326 = vmax.xlane.f32.xlu0 %v1325
      %v1327 = vpop.xlane.xlu0 %1326
      %v1328 = vsel %vm1249, %v1318, -inf
      %1329 = vmax.xlane.f32.xlu0 %v1328
      %v1330 = vpop.xlane.xlu0 %1329
      %v1331 = vsub.f32 %v1315, %v1321
      %v1332 = vsub.f32 %v1316, %v1324
      %v1333 = vsub.f32 %v1317, %v1327
      %v1334 = vsub.f32 %v1318, %v1330
      %v1335 = vmul.f32 %v1331, 1.442695
      %v1336 = vpow.pop %v1335
      %v1337 = vmul.f32 %v1332, 1.442695
      %v1338 = vpow.pop %v1337
      %v1339 = vmul.f32 %v1333, 1.442695
      %v1340 = vpow.pop %v1339
      %v1341 = vmul.f32 %v1334, 1.442695
      %v1342 = vpow.pop %v1341
      %v1343 = vsel %vm1249, %v1336, 0.0
      %1344 = vadd.xlane.f32.xlu0 %v1343
      %v1345 = vpop.xlane.xlu0 %1344
      %v1346 = vsel %vm1249, %v1338, 0.0
      %1347 = vadd.xlane.f32.xlu0 %v1346
      %v1348 = vpop.xlane.xlu0 %1347
      %v1349 = vsel %vm1249, %v1340, 0.0
      %1350 = vadd.xlane.f32.xlu0 %v1349
      %v1351 = vpop.xlane.xlu0 %1350
      %v1352 = vsel %vm1249, %v1342, 0.0
      %1353 = vadd.xlane.f32.xlu0 %v1352
      %v1354 = vpop.xlane.xlu0 %1353
      %v1355 = vrcp.pop %v1345
      %v1356 = vrcp.pop %v1348
      %v1357 = vrcp.pop %v1351
      %v1358 = vrcp.pop %v1354
      %v1359 = vmul.f32 %v1345, %v1355
      %v1360 = vmul.f32 %v1348, %v1356
      %v1361 = vmul.f32 %v1351, %v1357
      %v1362 = vmul.f32 %v1354, %v1358
      %v1363 = vsub.f32 2.0, %v1359
      %v1364 = vsub.f32 2.0, %v1360
      %v1365 = vsub.f32 2.0, %v1361
      %v1366 = vsub.f32 2.0, %v1362
      %v1367 = vmul.f32 %v1355, %v1363
      %v1368 = vmul.f32 %v1356, %v1364
      %v1369 = vmul.f32 %v1357, %v1365
      %v1370 = vmul.f32 %v1358, %v1366
      %v1371 = vmul.f32 %v1336, %v1367
      %v1372 = vmul.f32 %v1338, %v1368
      %v1373 = vmul.f32 %v1340, %v1369
      %v1374 = vmul.f32 %v1342, %v1370
      %v1375 = vpack.c.bf16 %v1372, %v1371
      %v1376 = vpack.c.bf16 %v1374, %v1373
      %v1377 = vpack.c.bf16 %v1234, %v1231
      %v1378 = vpack.c.bf16 %v1242, %v1239
      %v1380 = vsel %vm1249, %v1375, 0
      %v1383 = vsel %vm1249, %v1376, 0
      %1385 = vmatprep.subr.bf16.mxu0 0
      %1386 = vmatpush1.bf16.msra.mxu0 %v1377
      %1387 = vmatprep.subr.bf16.mxu0 0
      %1388 = vmatpush1.bf16.msra.mxu0 %v1378
      %1389 = vmatprep.subr.bf16.mxu0 0
      %1390 = vmatpush1.bf16.msra.mxu0 0
      %1391 = vmatprep.subr.bf16.mxu0 0
      %1392 = vmatpush1.bf16.msra.mxu0 0
      %1393 = vmatprep.subr.bf16.mxu0 0
      %1394 = vmatpush1.bf16.msra.mxu0 0
      %1395 = vmatprep.subr.bf16.mxu0 0
      %1396 = vmatpush1.bf16.msra.mxu0 0
      %1397 = vmatprep.subr.bf16.mxu0 0
      %1398 = vmatpush1.bf16.msra.mxu0 0
      %1399 = vmatprep.subr.bf16.mxu0 0
      %1400 = vmatpush1.bf16.msra.mxu0 0
      %1401 = vmatprep.subr.bf16.mxu0 0
      %1402 = vmatpush1.bf16.msra.mxu0 0
      %1403 = vmatprep.subr.bf16.mxu0 0
      %1404 = vmatpush1.bf16.msra.mxu0 0
      %1405 = vmatprep.subr.bf16.mxu0 0
      %1406 = vmatpush1.bf16.msra.mxu0 0
      %1407 = vmatprep.subr.bf16.mxu0 0
      %1408 = vmatpush1.bf16.msra.mxu0 0
      %1409 = vmatprep.subr.bf16.mxu0 0
      %1410 = vmatpush1.bf16.msra.mxu0 0
      %1411 = vmatprep.subr.bf16.mxu0 0
      %1412 = vmatpush1.bf16.msra.mxu0 0
      %1413 = vmatprep.subr.bf16.mxu0 0
      %1414 = vmatpush1.bf16.msra.mxu0 0
      %1415 = vmatprep.subr.bf16.mxu0 0
      %1416 = vmatpush1.bf16.msra.mxu0 0
      %1417 = vmatprep.mubr.bf16.mxu0 0
      %1418 = vmatmul.mubr.bf16.gmra.mrb[0].mxu0 %v1380
      %v1419 = vpop.f32.mrb[0].mxu0
      %v1420 = vadd.f32 0.0, %v1419
      %v1421 = vpop.f32.mrb[0].mxu0
      %v1422 = vpop.f32.mrb[0].mxu0
      %v1423 = vadd.f32 0.0, %v1422
      %v1424 = vpop.f32.mrb[0].mxu0
      %1425 = vmatprep.mubr.bf16.mxu0 0
      %1426 = vmatmul.mubr.bf16.gmra.mrb[0].mxu0 %v1383
      %v1427 = vpop.f32.mrb[0].mxu0
      %v1428 = vadd.f32 0.0, %v1427
      %v1429 = vpop.f32.mrb[0].mxu0
      %v1430 = vpop.f32.mrb[0].mxu0
      %v1431 = vadd.f32 0.0, %v1430
      %v1432 = vpop.f32.mrb[0].mxu0
      %1433 = vdwg.mxu0
      %v1434 = vpack.c.bf16 %v1423, %v1420
      %v1435 = vpack.c.bf16 %v1431, %v1428
      %v1436 = vld [vmem:[%s653] sm:$0xf]
      %v1437 = vld [vmem:[%s653 + $0x4] sm:$0xf]
      %v1438 = vld [vmem:[%s653 + $0x8] sm:$0xf]
      %v1439 = vld [vmem:[%s653 + $0xc] sm:$0xf]
      %s1440 = scalar_lea.vmem %s634, 64
      %v1441 = vld [vmem:[%s1440] sm:$0xf]
      %v1442 = vld [vmem:[%s1440 + $0x4] sm:$0xf]
      %v1443 = vld [vmem:[%s1440 + $0x8] sm:$0xf]
      %v1444 = vld [vmem:[%s1440 + $0xc] sm:$0xf]
      %v1445 = vld [vmem:[%s1440 + $0x10] sm:$0xf]
      %v1446 = vld [vmem:[%s1440 + $0x14] sm:$0xf]
      %v1447 = vld [vmem:[%s1440 + $0x18] sm:$0xf]
      %v1448 = vld [vmem:[%s1440 + $0x1c] sm:$0xf]
      %v1449 = vld [vmem:[%s1440 + $0x20] sm:$0xf]
      %v1450 = vld [vmem:[%s1440 + $0x24] sm:$0xf]
      %v1451 = vld [vmem:[%s1440 + $0x28] sm:$0xf]
      %v1452 = vld [vmem:[%s1440 + $0x2c] sm:$0xf]
      %v1453 = vld [vmem:[%s1440 + $0x30] sm:$0xf]
      %v1454 = vld [vmem:[%s1440 + $0x34] sm:$0xf]
      %v1455 = vld [vmem:[%s1440 + $0x38] sm:$0xf]
      %v1456 = vld [vmem:[%s1440 + $0x3c] sm:$0xf]
      %s1457 = scalar_lea.vmem %s648, 1
      %v1458 = vld [vmem:[%s1457] sm:$0x1]
      %v1460 = vlaneseq
      %v1461 = vshrl.u32 %v1460, 7
      %v1462 = vsub.s32 0, %v1461
      %v1463 = vrot.slane %v1458, %v1462
      %v1481 = vunpack.c.l.b16 %v1441
      %v1482 = vunpack.c.l.b16 %v1442
      %v1483 = vunpack.c.l.b16 %v1443
      %v1484 = vunpack.c.l.b16 %v1444
      %v1485 = vunpack.c.l.b16 %v1445
      %v1486 = vunpack.c.l.b16 %v1446
      %v1487 = vunpack.c.l.b16 %v1447
      %v1488 = vunpack.c.l.b16 %v1448
      %v1489 = vunpack.c.l.b16 %v1449
      %v1490 = vunpack.c.l.b16 %v1450
      %v1491 = vunpack.c.l.b16 %v1451
      %v1492 = vunpack.c.l.b16 %v1452
      %v1493 = vunpack.c.l.b16 %v1453
      %v1494 = vunpack.c.l.b16 %v1454
      %v1495 = vunpack.c.l.b16 %v1455
      %v1496 = vunpack.c.l.b16 %v1456
      %v1497 = vpack.c.b16 %v1482, %v1481
      %v1498 = vpack.c.b16 %v1484, %v1483
      %v1499 = vpack.c.b16 %v1486, %v1485
      %v1500 = vpack.c.b16 %v1488, %v1487
      %v1501 = vpack.c.b16 %v1490, %v1489
      %v1502 = vpack.c.b16 %v1492, %v1491
      %v1503 = vpack.c.b16 %v1494, %v1493
      %v1504 = vpack.c.b16 %v1496, %v1495
      %1513 = vmatprep.subr.bf16.mxu0 0
      %1514 = vmatpush1.bf16.msra.mxu0 %v1497
      %1515 = vmatprep.subr.bf16.mxu0 0
      %1516 = vmatpush1.bf16.msra.mxu0 %v1498
      %1517 = vmatprep.subr.bf16.mxu0 0
      %1518 = vmatpush1.bf16.msra.mxu0 %v1499
      %1519 = vmatprep.subr.bf16.mxu0 0
      %1520 = vmatpush1.bf16.msra.mxu0 %v1500
      %1521 = vmatprep.subr.bf16.mxu0 0
      %1522 = vmatpush1.bf16.msra.mxu0 %v1501
      %1523 = vmatprep.subr.bf16.mxu0 0
      %1524 = vmatpush1.bf16.msra.mxu0 %v1502
      %1525 = vmatprep.subr.bf16.mxu0 0
      %1526 = vmatpush1.bf16.msra.mxu0 %v1503
      %1527 = vmatprep.subr.bf16.mxu0 0
      %1528 = vmatpush1.bf16.msra.mxu0 %v1504
      %1529 = vmatprep.subr.bf16.mxu0 0
      %1530 = vmatpush1.bf16.msra.mxu0 0
      %1531 = vmatprep.subr.bf16.mxu0 0
      %1532 = vmatpush1.bf16.msra.mxu0 0
      %1533 = vmatprep.subr.bf16.mxu0 0
      %1534 = vmatpush1.bf16.msra.mxu0 0
      %1535 = vmatprep.subr.bf16.mxu0 0
      %1536 = vmatpush1.bf16.msra.mxu0 0
      %1537 = vmatprep.subr.bf16.mxu0 0
      %1538 = vmatpush1.bf16.msra.mxu0 0
      %1539 = vmatprep.subr.bf16.mxu0 0
      %1540 = vmatpush1.bf16.msra.mxu0 0
      %1541 = vmatprep.subr.bf16.mxu0 0
      %1542 = vmatpush1.bf16.msra.mxu0 0
      %1543 = vmatprep.subr.bf16.mxu0 0
      %1544 = vmatpush1.bf16.msra.mxu0 0
      %1545 = vmatprep.mubr.bf16.mxu0 0
      %1546 = vmatmul.mubr.bf16.gmra.mrb[0].mxu0 %v881
      %v1547 = vpop.f32.mrb[0].mxu0
      %v1548 = vadd.f32 %v1463, %v1547
      %v1549 = vpop.f32.mrb[0].mxu0
      %v1550 = vpop.f32.mrb[0].mxu0
      %v1551 = vadd.f32 %v1463, %v1550
      %v1552 = vpop.f32.mrb[0].mxu0
      %1553 = vmatprep.mubr.bf16.mxu0 0
      %1554 = vmatmul.mubr.bf16.gmra.mrb[0].mxu0 %v882
      %v1555 = vpop.f32.mrb[0].mxu0
      %v1556 = vadd.f32 %v1463, %v1555
      %v1557 = vpop.f32.mrb[0].mxu0
      %v1558 = vpop.f32.mrb[0].mxu0
      %v1559 = vadd.f32 %v1463, %v1558
      %v1560 = vpop.f32.mrb[0].mxu0
      %1561 = vdwg.mxu0
      %s1562 = scalar_lea.vmem %s639, 64
      %v1563 = vld [vmem:[%s1562] sm:$0xf]
      %v1564 = vld [vmem:[%s1562 + $0x4] sm:$0xf]
      %v1565 = vld [vmem:[%s1562 + $0x8] sm:$0xf]
      %v1566 = vld [vmem:[%s1562 + $0xc] sm:$0xf]
      %v1567 = vld [vmem:[%s1562 + $0x10] sm:$0xf]
      %v1568 = vld [vmem:[%s1562 + $0x14] sm:$0xf]
      %v1569 = vld [vmem:[%s1562 + $0x18] sm:$0xf]
      %v1570 = vld [vmem:[%s1562 + $0x1c] sm:$0xf]
      %v1571 = vld [vmem:[%s1562 + $0x20] sm:$0xf]
      %v1572 = vld [vmem:[%s1562 + $0x24] sm:$0xf]
      %v1573 = vld [vmem:[%s1562 + $0x28] sm:$0xf]
      %v1574 = vld [vmem:[%s1562 + $0x2c] sm:$0xf]
      %v1575 = vld [vmem:[%s1562 + $0x30] sm:$0xf]
      %v1576 = vld [vmem:[%s1562 + $0x34] sm:$0xf]
      %v1577 = vld [vmem:[%s1562 + $0x38] sm:$0xf]
      %v1578 = vld [vmem:[%s1562 + $0x3c] sm:$0xf]
      %s1579 = scalar_lea.vmem %s648, 5
      %v1580 = vld [vmem:[%s1579] sm:$0x1]
      %v1582 = vlaneseq
      %v1583 = vshrl.u32 %v1582, 7
      %v1584 = vsub.s32 0, %v1583
      %v1585 = vrot.slane %v1580, %v1584
      %v1603 = vunpack.c.l.b16 %v1563
      %v1604 = vunpack.c.l.b16 %v1564
      %v1605 = vunpack.c.l.b16 %v1565
      %v1606 = vunpack.c.l.b16 %v1566
      %v1607 = vunpack.c.l.b16 %v1567
      %v1608 = vunpack.c.l.b16 %v1568
      %v1609 = vunpack.c.l.b16 %v1569
      %v1610 = vunpack.c.l.b16 %v1570
      %v1611 = vunpack.c.l.b16 %v1571
      %v1612 = vunpack.c.l.b16 %v1572
      %v1613 = vunpack.c.l.b16 %v1573
      %v1614 = vunpack.c.l.b16 %v1574
      %v1615 = vunpack.c.l.b16 %v1575
      %v1616 = vunpack.c.l.b16 %v1576
      %v1617 = vunpack.c.l.b16 %v1577
      %v1618 = vunpack.c.l.b16 %v1578
      %v1619 = vpack.c.b16 %v1604, %v1603
      %v1620 = vpack.c.b16 %v1606, %v1605
      %v1621 = vpack.c.b16 %v1608, %v1607
      %v1622 = vpack.c.b16 %v1610, %v1609
      %v1623 = vpack.c.b16 %v1612, %v1611
      %v1624 = vpack.c.b16 %v1614, %v1613
      %v1625 = vpack.c.b16 %v1616, %v1615
      %v1626 = vpack.c.b16 %v1618, %v1617
      %1635 = vmatprep.subr.bf16.mxu0 0
      %1636 = vmatpush1.bf16.msra.mxu0 %v1619
      %1637 = vmatprep.subr.bf16.mxu0 0
      %1638 = vmatpush1.bf16.msra.mxu0 %v1620
      %1639 = vmatprep.subr.bf16.mxu0 0
      %1640 = vmatpush1.bf16.msra.mxu0 %v1621
      %1641 = vmatprep.subr.bf16.mxu0 0
      %1642 = vmatpush1.bf16.msra.mxu0 %v1622
      %1643 = vmatprep.subr.bf16.mxu0 0
      %1644 = vmatpush1.bf16.msra.mxu0 %v1623
      %1645 = vmatprep.subr.bf16.mxu0 0
      %1646 = vmatpush1.bf16.msra.mxu0 %v1624
      %1647 = vmatprep.subr.bf16.mxu0 0
      %1648 = vmatpush1.bf16.msra.mxu0 %v1625
      %1649 = vmatprep.subr.bf16.mxu0 0
      %1650 = vmatpush1.bf16.msra.mxu0 %v1626
      %1651 = vmatprep.subr.bf16.mxu0 0
      %1652 = vmatpush1.bf16.msra.mxu0 0
      %1653 = vmatprep.subr.bf16.mxu0 0
      %1654 = vmatpush1.bf16.msra.mxu0 0
      %1655 = vmatprep.subr.bf16.mxu0 0
      %1656 = vmatpush1.bf16.msra.mxu0 0
      %1657 = vmatprep.subr.bf16.mxu0 0
      %1658 = vmatpush1.bf16.msra.mxu0 0
      %1659 = vmatprep.subr.bf16.mxu0 0
      %1660 = vmatpush1.bf16.msra.mxu0 0
      %1661 = vmatprep.subr.bf16.mxu0 0
      %1662 = vmatpush1.bf16.msra.mxu0 0
      %1663 = vmatprep.subr.bf16.mxu0 0
      %1664 = vmatpush1.bf16.msra.mxu0 0
      %1665 = vmatprep.subr.bf16.mxu0 0
      %1666 = vmatpush1.bf16.msra.mxu0 0
      %1667 = vmatprep.mubr.bf16.mxu0 0
      %1668 = vmatmul.mubr.bf16.gmra.mrb[0].mxu0 %v881
      %v1669 = vpop.f32.mrb[0].mxu0
      %v1670 = vadd.f32 %v1585, %v1669
      %v1671 = vpop.f32.mrb[0].mxu0
      %v1672 = vpop.f32.mrb[0].mxu0
      %v1673 = vadd.f32 %v1585, %v1672
      %v1674 = vpop.f32.mrb[0].mxu0
      %1675 = vmatprep.mubr.bf16.mxu0 0
      %1676 = vmatmul.mubr.bf16.gmra.mrb[0].mxu0 %v882
      %v1677 = vpop.f32.mrb[0].mxu0
      %v1678 = vadd.f32 %v1585, %v1677
      %v1679 = vpop.f32.mrb[0].mxu0
      %v1680 = vpop.f32.mrb[0].mxu0
      %v1681 = vadd.f32 %v1585, %v1680
      %v1682 = vpop.f32.mrb[0].mxu0
      %1683 = vdwg.mxu0
      %s1684 = scalar_lea.vmem %s644, 64
      %v1685 = vld [vmem:[%s1684] sm:$0xf]
      %v1686 = vld [vmem:[%s1684 + $0x4] sm:$0xf]
      %v1687 = vld [vmem:[%s1684 + $0x8] sm:$0xf]
      %v1688 = vld [vmem:[%s1684 + $0xc] sm:$0xf]
      %v1689 = vld [vmem:[%s1684 + $0x10] sm:$0xf]
      %v1690 = vld [vmem:[%s1684 + $0x14] sm:$0xf]
      %v1691 = vld [vmem:[%s1684 + $0x18] sm:$0xf]
      %v1692 = vld [vmem:[%s1684 + $0x1c] sm:$0xf]
      %v1693 = vld [vmem:[%s1684 + $0x20] sm:$0xf]
      %v1694 = vld [vmem:[%s1684 + $0x24] sm:$0xf]
      %v1695 = vld [vmem:[%s1684 + $0x28] sm:$0xf]
      %v1696 = vld [vmem:[%s1684 + $0x2c] sm:$0xf]
      %v1697 = vld [vmem:[%s1684 + $0x30] sm:$0xf]
      %v1698 = vld [vmem:[%s1684 + $0x34] sm:$0xf]
      %v1699 = vld [vmem:[%s1684 + $0x38] sm:$0xf]
      %v1700 = vld [vmem:[%s1684 + $0x3c] sm:$0xf]
      %s1701 = scalar_lea.vmem %s648, 9
      %v1702 = vld [vmem:[%s1701] sm:$0x1]
      %v1704 = vlaneseq
      %v1705 = vshrl.u32 %v1704, 7
      %v1706 = vsub.s32 0, %v1705
      %v1707 = vrot.slane %v1702, %v1706
      %v1725 = vunpack.c.l.b16 %v1685
      %v1726 = vunpack.c.l.b16 %v1686
      %v1727 = vunpack.c.l.b16 %v1687
      %v1728 = vunpack.c.l.b16 %v1688
      %v1729 = vunpack.c.l.b16 %v1689
      %v1730 = vunpack.c.l.b16 %v1690
      %v1731 = vunpack.c.l.b16 %v1691
      %v1732 = vunpack.c.l.b16 %v1692
      %v1733 = vunpack.c.l.b16 %v1693
      %v1734 = vunpack.c.l.b16 %v1694
      %v1735 = vunpack.c.l.b16 %v1695
      %v1736 = vunpack.c.l.b16 %v1696
      %v1737 = vunpack.c.l.b16 %v1697
      %v1738 = vunpack.c.l.b16 %v1698
      %v1739 = vunpack.c.l.b16 %v1699
      %v1740 = vunpack.c.l.b16 %v1700
      %v1741 = vpack.c.b16 %v1726, %v1725
      %v1742 = vpack.c.b16 %v1728, %v1727
      %v1743 = vpack.c.b16 %v1730, %v1729
      %v1744 = vpack.c.b16 %v1732, %v1731
      %v1745 = vpack.c.b16 %v1734, %v1733
      %v1746 = vpack.c.b16 %v1736, %v1735
      %v1747 = vpack.c.b16 %v1738, %v1737
      %v1748 = vpack.c.b16 %v1740, %v1739
      %1757 = vmatprep.subr.bf16.mxu0 0
      %1758 = vmatpush1.bf16.msra.mxu0 %v1741
      %1759 = vmatprep.subr.bf16.mxu0 0
      %1760 = vmatpush1.bf16.msra.mxu0 %v1742
      %1761 = vmatprep.subr.bf16.mxu0 0
      %1762 = vmatpush1.bf16.msra.mxu0 %v1743
      %1763 = vmatprep.subr.bf16.mxu0 0
      %1764 = vmatpush1.bf16.msra.mxu0 %v1744
      %1765 = vmatprep.subr.bf16.mxu0 0
      %1766 = vmatpush1.bf16.msra.mxu0 %v1745
      %1767 = vmatprep.subr.bf16.mxu0 0
      %1768 = vmatpush1.bf16.msra.mxu0 %v1746
      %1769 = vmatprep.subr.bf16.mxu0 0
      %1770 = vmatpush1.bf16.msra.mxu0 %v1747
      %1771 = vmatprep.subr.bf16.mxu0 0
      %1772 = vmatpush1.bf16.msra.mxu0 %v1748
      %1773 = vmatprep.subr.bf16.mxu0 0
      %1774 = vmatpush1.bf16.msra.mxu0 0
      %1775 = vmatprep.subr.bf16.mxu0 0
      %1776 = vmatpush1.bf16.msra.mxu0 0
      %1777 = vmatprep.subr.bf16.mxu0 0
      %1778 = vmatpush1.bf16.msra.mxu0 0
      %1779 = vmatprep.subr.bf16.mxu0 0
      %1780 = vmatpush1.bf16.msra.mxu0 0
      %1781 = vmatprep.subr.bf16.mxu0 0
      %1782 = vmatpush1.bf16.msra.mxu0 0
      %1783 = vmatprep.subr.bf16.mxu0 0
      %1784 = vmatpush1.bf16.msra.mxu0 0
      %1785 = vmatprep.subr.bf16.mxu0 0
      %1786 = vmatpush1.bf16.msra.mxu0 0
      %1787 = vmatprep.subr.bf16.mxu0 0
      %1788 = vmatpush1.bf16.msra.mxu0 0
      %1789 = vmatprep.mubr.bf16.mxu0 0
      %1790 = vmatmul.mubr.bf16.gmra.mrb[0].mxu0 %v881
      %v1791 = vpop.f32.mrb[0].mxu0
      %v1792 = vadd.f32 %v1707, %v1791
      %v1793 = vpop.f32.mrb[0].mxu0
      %v1794 = vpop.f32.mrb[0].mxu0
      %v1795 = vadd.f32 %v1707, %v1794
      %v1796 = vpop.f32.mrb[0].mxu0
      %1797 = vmatprep.mubr.bf16.mxu0 0
      %1798 = vmatmul.mubr.bf16.gmra.mrb[0].mxu0 %v882
      %v1799 = vpop.f32.mrb[0].mxu0
      %v1800 = vadd.f32 %v1707, %v1799
      %v1801 = vpop.f32.mrb[0].mxu0
      %v1802 = vpop.f32.mrb[0].mxu0
      %v1803 = vadd.f32 %v1707, %v1802
      %v1804 = vpop.f32.mrb[0].mxu0
      %1805 = vdwg.mxu0
      %v1806 = vpack.c.bf16 %v1551, %v1548
      %v1807 = vpack.c.bf16 %v1559, %v1556
      %v1808 = vpack.c.bf16 %v1673, %v1670
      %v1809 = vpack.c.bf16 %v1681, %v1678
      %v1811 = vsel %vm1249, %v1806, 0
      %v1814 = vsel %vm1249, %v1807, 0
      %v1817 = vsel %vm1249, %v1808, 0
      %v1820 = vsel %vm1249, %v1809, 0
      %1822 = vmatprep.subr.bf16.mxu0 0
      %1823 = vmatpush1.bf16.xpose.msra.mxu0 %v1817
      %1824 = vmatprep.subr.bf16.mxu0 0
      %1825 = vmatpush1.bf16.xpose.msra.mxu0 %v1820
      %1826 = vmatprep.subr.bf16.mxu0 0
      %1827 = vmatpush1.bf16.xpose.msra.mxu0 0
      %1828 = vmatprep.subr.bf16.mxu0 0
      %1829 = vmatpush1.bf16.xpose.msra.mxu0 0
      %1830 = vmatprep.subr.bf16.mxu0 0
      %1831 = vmatpush1.bf16.xpose.msra.mxu0 0
      %1832 = vmatprep.subr.bf16.mxu0 0
      %1833 = vmatpush1.bf16.xpose.msra.mxu0 0
      %1834 = vmatprep.subr.bf16.mxu0 0
      %1835 = vmatpush1.bf16.xpose.msra.mxu0 0
      %1836 = vmatprep.subr.bf16.mxu0 0
      %1837 = vmatpush1.bf16.xpose.msra.mxu0 0
      %1838 = vmatprep.subr.bf16.mxu0 0
      %1839 = vmatpush1.bf16.xpose.msra.mxu0 0
      %1840 = vmatprep.subr.bf16.mxu0 0
      %1841 = vmatpush1.bf16.xpose.msra.mxu0 0
      %1842 = vmatprep.subr.bf16.mxu0 0
      %1843 = vmatpush1.bf16.xpose.msra.mxu0 0
      %1844 = vmatprep.subr.bf16.mxu0 0
      %1845 = vmatpush1.bf16.xpose.msra.mxu0 0
      %1846 = vmatprep.subr.bf16.mxu0 0
      %1847 = vmatpush1.bf16.xpose.msra.mxu0 0
      %1848 = vmatprep.subr.bf16.mxu0 0
      %1849 = vmatpush1.bf16.xpose.msra.mxu0 0
      %1850 = vmatprep.subr.bf16.mxu0 0
      %1851 = vmatpush1.bf16.xpose.msra.mxu0 0
      %1852 = vmatprep.subr.bf16.mxu0 0
      %1853 = vmatpush1.bf16.xpose.msra.mxu0 0
      %1854 = vmatprep.mubr.bf16.mxu0 0
      %1855 = vmatmul.mubr.bf16.gmra.mrb[0].mxu0 %v1811
      %v1856 = vpop.f32.mrb[0].mxu0
      %v1857 = vadd.f32 0.0, %v1856
      %v1858 = vpop.f32.mrb[0].mxu0
      %v1859 = vpop.f32.mrb[0].mxu0
      %v1860 = vadd.f32 0.0, %v1859
      %v1861 = vpop.f32.mrb[0].mxu0
      %1862 = vmatprep.mubr.bf16.mxu0 0
      %1863 = vmatmul.mubr.bf16.gmra.mrb[0].mxu0 %v1814
      %v1864 = vpop.f32.mrb[0].mxu0
      %v1865 = vadd.f32 0.0, %v1864
      %v1866 = vpop.f32.mrb[0].mxu0
      %v1867 = vpop.f32.mrb[0].mxu0
      %v1868 = vadd.f32 0.0, %v1867
      %v1869 = vpop.f32.mrb[0].mxu0
      %1870 = vdwg.mxu0
      %v1871 = vmul.f32 %v1857, 0.17677669
      %v1872 = vmul.f32 %v1860, 0.17677669
      %v1873 = vmul.f32 %v1865, 0.17677669
      %v1874 = vmul.f32 %v1868, 0.17677669
      %v1875 = vadd.f32 %v1871, %v818
      %v1876 = vadd.f32 %v1872, %v818
      %v1877 = vadd.f32 %v1873, %v818
      %v1878 = vadd.f32 %v1874, %v818
      %v1879 = vsel %vm1249, %v1875, -inf
      %1880 = vmax.xlane.f32.xlu0 %v1879
      %v1881 = vpop.xlane.xlu0 %1880
      %v1882 = vsel %vm1249, %v1876, -inf
      %1883 = vmax.xlane.f32.xlu0 %v1882
      %v1884 = vpop.xlane.xlu0 %1883
      %v1885 = vsel %vm1249, %v1877, -inf
      %1886 = vmax.xlane.f32.xlu0 %v1885
      %v1887 = vpop.xlane.xlu0 %1886
      %v1888 = vsel %vm1249, %v1878, -inf
      %1889 = vmax.xlane.f32.xlu0 %v1888
      %v1890 = vpop.xlane.xlu0 %1889
      %v1891 = vsub.f32 %v1875, %v1881
      %v1892 = vsub.f32 %v1876, %v1884
      %v1893 = vsub.f32 %v1877, %v1887
      %v1894 = vsub.f32 %v1878, %v1890
      %v1895 = vmul.f32 %v1891, 1.442695
      %v1896 = vpow.pop %v1895
      %v1897 = vmul.f32 %v1892, 1.442695
      %v1898 = vpow.pop %v1897
      %v1899 = vmul.f32 %v1893, 1.442695
      %v1900 = vpow.pop %v1899
      %v1901 = vmul.f32 %v1894, 1.442695
      %v1902 = vpow.pop %v1901
      %v1903 = vsel %vm1249, %v1896, 0.0
      %1904 = vadd.xlane.f32.xlu0 %v1903
      %v1905 = vpop.xlane.xlu0 %1904
      %v1906 = vsel %vm1249, %v1898, 0.0
      %1907 = vadd.xlane.f32.xlu0 %v1906
      %v1908 = vpop.xlane.xlu0 %1907
      %v1909 = vsel %vm1249, %v1900, 0.0
      %1910 = vadd.xlane.f32.xlu0 %v1909
      %v1911 = vpop.xlane.xlu0 %1910
      %v1912 = vsel %vm1249, %v1902, 0.0
      %1913 = vadd.xlane.f32.xlu0 %v1912
      %v1914 = vpop.xlane.xlu0 %1913
      %v1915 = vrcp.pop %v1905
      %v1916 = vrcp.pop %v1908
      %v1917 = vrcp.pop %v1911
      %v1918 = vrcp.pop %v1914
      %v1919 = vmul.f32 %v1905, %v1915
      %v1920 = vmul.f32 %v1908, %v1916
      %v1921 = vmul.f32 %v1911, %v1917
      %v1922 = vmul.f32 %v1914, %v1918
      %v1923 = vsub.f32 2.0, %v1919
      %v1924 = vsub.f32 2.0, %v1920
      %v1925 = vsub.f32 2.0, %v1921
      %v1926 = vsub.f32 2.0, %v1922
      %v1927 = vmul.f32 %v1915, %v1923
      %v1928 = vmul.f32 %v1916, %v1924
      %v1929 = vmul.f32 %v1917, %v1925
      %v1930 = vmul.f32 %v1918, %v1926
      %v1931 = vmul.f32 %v1896, %v1927
      %v1932 = vmul.f32 %v1898, %v1928
      %v1933 = vmul.f32 %v1900, %v1929
      %v1934 = vmul.f32 %v1902, %v1930
      %v1935 = vpack.c.bf16 %v1932, %v1931
      %v1936 = vpack.c.bf16 %v1934, %v1933
      %v1937 = vpack.c.bf16 %v1795, %v1792
      %v1938 = vpack.c.bf16 %v1803, %v1800
      %v1940 = vsel %vm1249, %v1935, 0
      %v1943 = vsel %vm1249, %v1936, 0
      %1945 = vmatprep.subr.bf16.mxu0 0
      %1946 = vmatpush1.bf16.msra.mxu0 %v1937
      %1947 = vmatprep.subr.bf16.mxu0 0
      %1948 = vmatpush1.bf16.msra.mxu0 %v1938
      %1949 = vmatprep.subr.bf16.mxu0 0
      %1950 = vmatpush1.bf16.msra.mxu0 0
      %1951 = vmatprep.subr.bf16.mxu0 0
      %1952 = vmatpush1.bf16.msra.mxu0 0
      %1953 = vmatprep.subr.bf16.mxu0 0
      %1954 = vmatpush1.bf16.msra.mxu0 0
      %1955 = vmatprep.subr.bf16.mxu0 0
      %1956 = vmatpush1.bf16.msra.mxu0 0
      %1957 = vmatprep.subr.bf16.mxu0 0
      %1958 = vmatpush1.bf16.msra.mxu0 0
      %1959 = vmatprep.subr.bf16.mxu0 0
      %1960 = vmatpush1.bf16.msra.mxu0 0
      %1961 = vmatprep.subr.bf16.mxu0 0
      %1962 = vmatpush1.bf16.msra.mxu0 0
      %1963 = vmatprep.subr.bf16.mxu0 0
      %1964 = vmatpush1.bf16.msra.mxu0 0
      %1965 = vmatprep.subr.bf16.mxu0 0
      %1966 = vmatpush1.bf16.msra.mxu0 0
      %1967 = vmatprep.subr.bf16.mxu0 0
      %1968 = vmatpush1.bf16.msra.mxu0 0
      %1969 = vmatprep.subr.bf16.mxu0 0
      %1970 = vmatpush1.bf16.msra.mxu0 0
      %1971 = vmatprep.subr.bf16.mxu0 0
      %1972 = vmatpush1.bf16.msra.mxu0 0
      %1973 = vmatprep.subr.bf16.mxu0 0
      %1974 = vmatpush1.bf16.msra.mxu0 0
      %1975 = vmatprep.subr.bf16.mxu0 0
      %1976 = vmatpush1.bf16.msra.mxu0 0
      %1977 = vmatprep.mubr.bf16.mxu0 0
      %1978 = vmatmul.mubr.bf16.gmra.mrb[0].mxu0 %v1940
      %v1979 = vpop.f32.mrb[0].mxu0
      %v1980 = vadd.f32 0.0, %v1979
      %v1981 = vpop.f32.mrb[0].mxu0
      %v1982 = vpop.f32.mrb[0].mxu0
      %v1983 = vadd.f32 0.0, %v1982
      %v1984 = vpop.f32.mrb[0].mxu0
      %1985 = vmatprep.mubr.bf16.mxu0 0
      %1986 = vmatmul.mubr.bf16.gmra.mrb[0].mxu0 %v1943
      %v1987 = vpop.f32.mrb[0].mxu0
      %v1988 = vadd.f32 0.0, %v1987
      %v1989 = vpop.f32.mrb[0].mxu0
      %v1990 = vpop.f32.mrb[0].mxu0
      %v1991 = vadd.f32 0.0, %v1990
      %v1992 = vpop.f32.mrb[0].mxu0
      %1993 = vdwg.mxu0
      %v1994 = vpack.c.bf16 %v1983, %v1980
      %v1995 = vpack.c.bf16 %v1991, %v1988
      %s1996 = scalar_lea.vmem %s653, 16
      %v1997 = vld [vmem:[%s1996] sm:$0xf]
      %v1998 = vld [vmem:[%s1996 + $0x4] sm:$0xf]
      %v1999 = vld [vmem:[%s1996 + $0x8] sm:$0xf]
      %v2000 = vld [vmem:[%s1996 + $0xc] sm:$0xf]
      %v2005 = vunpack.c.l.b16 %v1997
      %v2006 = vunpack.c.l.b16 %v1998
      %v2007 = vunpack.c.l.b16 %v1999
      %v2008 = vunpack.c.l.b16 %v2000
      %v2009 = vpack.c.b16 %v2006, %v2005
      %v2010 = vpack.c.b16 %v2008, %v2007
      %v2014 = vsel %vm1249, %v1994, 0
      %v2017 = vsel %vm1249, %v1995, 0
      %2019 = vmatprep.subr.bf16.mxu0 0
      %2020 = vmatpush1.bf16.msra.mxu0 %v2009
      %2021 = vmatprep.subr.bf16.mxu0 0
      %2022 = vmatpush1.bf16.msra.mxu0 %v2010
      %2023 = vmatprep.subr.bf16.mxu0 0
      %2024 = vmatpush1.bf16.msra.mxu0 0
      %2025 = vmatprep.subr.bf16.mxu0 0
      %2026 = vmatpush1.bf16.msra.mxu0 0
      %2027 = vmatprep.subr.bf16.mxu0 0
      %2028 = vmatpush1.bf16.msra.mxu0 0
      %2029 = vmatprep.subr.bf16.mxu0 0
      %2030 = vmatpush1.bf16.msra.mxu0 0
      %2031 = vmatprep.subr.bf16.mxu0 0
      %2032 = vmatpush1.bf16.msra.mxu0 0
      %2033 = vmatprep.subr.bf16.mxu0 0
      %2034 = vmatpush1.bf16.msra.mxu0 0
      %2035 = vmatprep.subr.bf16.mxu0 0
      %2036 = vmatpush1.bf16.msra.mxu0 0
      %2037 = vmatprep.subr.bf16.mxu0 0
      %2038 = vmatpush1.bf16.msra.mxu0 0
      %2039 = vmatprep.subr.bf16.mxu0 0
      %2040 = vmatpush1.bf16.msra.mxu0 0
      %2041 = vmatprep.subr.bf16.mxu0 0
      %2042 = vmatpush1.bf16.msra.mxu0 0
      %2043 = vmatprep.subr.bf16.mxu0 0
      %2044 = vmatpush1.bf16.msra.mxu0 0
      %2045 = vmatprep.subr.bf16.mxu0 0
      %2046 = vmatpush1.bf16.msra.mxu0 0
      %2047 = vmatprep.subr.bf16.mxu0 0
      %2048 = vmatpush1.bf16.msra.mxu0 0
      %2049 = vmatprep.subr.bf16.mxu0 0
      %2050 = vmatpush1.bf16.msra.mxu0 0
      %2051 = vmatprep.mubr.bf16.mxu0 0
      %2052 = vmatmul.mubr.bf16.gmra.mrb[0].mxu0 %v2014
      %v2053 = vpop.f32.mrb[0].mxu0
      %v2054 = vadd.f32 0.0, %v2053
      %v2055 = vpop.f32.mrb[0].mxu0
      %v2056 = vpop.f32.mrb[0].mxu0
      %v2057 = vadd.f32 0.0, %v2056
      %v2058 = vpop.f32.mrb[0].mxu0
      %2059 = vmatprep.mubr.bf16.mxu0 0
      %2060 = vmatmul.mubr.bf16.gmra.mrb[0].mxu0 %v2017
      %v2061 = vpop.f32.mrb[0].mxu0
      %v2062 = vadd.f32 0.0, %v2061
      %v2063 = vpop.f32.mrb[0].mxu0
      %v2064 = vpop.f32.mrb[0].mxu0
      %v2065 = vadd.f32 0.0, %v2064
      %v2066 = vpop.f32.mrb[0].mxu0
      %2067 = vdwg.mxu0
      %v2072 = vunpack.c.l.b16 %v1436
      %v2073 = vunpack.c.l.b16 %v1437
      %v2074 = vunpack.c.l.b16 %v1438
      %v2075 = vunpack.c.l.b16 %v1439
      %v2076 = vpack.c.b16 %v2073, %v2072
      %v2077 = vpack.c.b16 %v2075, %v2074
      %v2081 = vsel %vm1249, %v1434, 0
      %v2084 = vsel %vm1249, %v1435, 0
      %2086 = vmatprep.subr.bf16.mxu0 0
      %2087 = vmatpush1.bf16.msra.mxu0 %v2076
      %2088 = vmatprep.subr.bf16.mxu0 0
      %2089 = vmatpush1.bf16.msra.mxu0 %v2077
      %2090 = vmatprep.subr.bf16.mxu0 0
      %2091 = vmatpush1.bf16.msra.mxu0 0
      %2092 = vmatprep.subr.bf16.mxu0 0
      %2093 = vmatpush1.bf16.msra.mxu0 0
      %2094 = vmatprep.subr.bf16.mxu0 0
      %2095 = vmatpush1.bf16.msra.mxu0 0
      %2096 = vmatprep.subr.bf16.mxu0 0
      %2097 = vmatpush1.bf16.msra.mxu0 0
      %2098 = vmatprep.subr.bf16.mxu0 0
      %2099 = vmatpush1.bf16.msra.mxu0 0
      %2100 = vmatprep.subr.bf16.mxu0 0
      %2101 = vmatpush1.bf16.msra.mxu0 0
      %2102 = vmatprep.subr.bf16.mxu0 0
      %2103 = vmatpush1.bf16.msra.mxu0 0
      %2104 = vmatprep.subr.bf16.mxu0 0
      %2105 = vmatpush1.bf16.msra.mxu0 0
      %2106 = vmatprep.subr.bf16.mxu0 0
      %2107 = vmatpush1.bf16.msra.mxu0 0
      %2108 = vmatprep.subr.bf16.mxu0 0
      %2109 = vmatpush1.bf16.msra.mxu0 0
      %2110 = vmatprep.subr.bf16.mxu0 0
      %2111 = vmatpush1.bf16.msra.mxu0 0
      %2112 = vmatprep.subr.bf16.mxu0 0
      %2113 = vmatpush1.bf16.msra.mxu0 0
      %2114 = vmatprep.subr.bf16.mxu0 0
      %2115 = vmatpush1.bf16.msra.mxu0 0
      %2116 = vmatprep.subr.bf16.mxu0 0
      %2117 = vmatpush1.bf16.msra.mxu0 0
      %2118 = vmatprep.mubr.bf16.mxu0 0
      %2119 = vmatmul.mubr.bf16.gmra.mrb[0].mxu0 %v2081
      %v2120 = vpop.f32.mrb[0].mxu0
      %v2121 = vadd.f32 %v2054, %v2120
      %v2122 = vpop.f32.mrb[0].mxu0
      %v2123 = vpop.f32.mrb[0].mxu0
      %v2124 = vadd.f32 %v2057, %v2123
      %v2125 = vpop.f32.mrb[0].mxu0
      %2126 = vmatprep.mubr.bf16.mxu0 0
      %2127 = vmatmul.mubr.bf16.gmra.mrb[0].mxu0 %v2084
      %v2128 = vpop.f32.mrb[0].mxu0
      %v2129 = vadd.f32 %v2062, %v2128
      %v2130 = vpop.f32.mrb[0].mxu0
      %v2131 = vpop.f32.mrb[0].mxu0
      %v2132 = vadd.f32 %v2065, %v2131
      %v2133 = vpop.f32.mrb[0].mxu0
      %2134 = vdwg.mxu0
      %s2135 = scalar_lea.vmem %s634, 128
      %v2136 = vld [vmem:[%s2135] sm:$0xf]
      %v2137 = vld [vmem:[%s2135 + $0x4] sm:$0xf]
      %v2138 = vld [vmem:[%s2135 + $0x8] sm:$0xf]
      %v2139 = vld [vmem:[%s2135 + $0xc] sm:$0xf]
      %v2140 = vld [vmem:[%s2135 + $0x10] sm:$0xf]
      %v2141 = vld [vmem:[%s2135 + $0x14] sm:$0xf]
      %v2142 = vld [vmem:[%s2135 + $0x18] sm:$0xf]
      %v2143 = vld [vmem:[%s2135 + $0x1c] sm:$0xf]
      %v2144 = vld [vmem:[%s2135 + $0x20] sm:$0xf]
      %v2145 = vld [vmem:[%s2135 + $0x24] sm:$0xf]
      %v2146 = vld [vmem:[%s2135 + $0x28] sm:$0xf]
      %v2147 = vld [vmem:[%s2135 + $0x2c] sm:$0xf]
      %v2148 = vld [vmem:[%s2135 + $0x30] sm:$0xf]
      %v2149 = vld [vmem:[%s2135 + $0x34] sm:$0xf]
      %v2150 = vld [vmem:[%s2135 + $0x38] sm:$0xf]
      %v2151 = vld [vmem:[%s2135 + $0x3c] sm:$0xf]
      %s2152 = scalar_lea.vmem %s648, 2
      %v2153 = vld [vmem:[%s2152] sm:$0x1]
      %v2155 = vlaneseq
      %v2156 = vshrl.u32 %v2155, 7
      %v2157 = vsub.s32 0, %v2156
      %v2158 = vrot.slane %v2153, %v2157
      %v2176 = vunpack.c.l.b16 %v2136
      %v2177 = vunpack.c.l.b16 %v2137
      %v2178 = vunpack.c.l.b16 %v2138
      %v2179 = vunpack.c.l.b16 %v2139
      %v2180 = vunpack.c.l.b16 %v2140
      %v2181 = vunpack.c.l.b16 %v2141
      %v2182 = vunpack.c.l.b16 %v2142
      %v2183 = vunpack.c.l.b16 %v2143
      %v2184 = vunpack.c.l.b16 %v2144
      %v2185 = vunpack.c.l.b16 %v2145
      %v2186 = vunpack.c.l.b16 %v2146
      %v2187 = vunpack.c.l.b16 %v2147
      %v2188 = vunpack.c.l.b16 %v2148
      %v2189 = vunpack.c.l.b16 %v2149
      %v2190 = vunpack.c.l.b16 %v2150
      %v2191 = vunpack.c.l.b16 %v2151
      %v2192 = vpack.c.b16 %v2177, %v2176
      %v2193 = vpack.c.b16 %v2179, %v2178
      %v2194 = vpack.c.b16 %v2181, %v2180
      %v2195 = vpack.c.b16 %v2183, %v2182
      %v2196 = vpack.c.b16 %v2185, %v2184
      %v2197 = vpack.c.b16 %v2187, %v2186
      %v2198 = vpack.c.b16 %v2189, %v2188
      %v2199 = vpack.c.b16 %v2191, %v2190
      %2208 = vmatprep.subr.bf16.mxu0 0
      %2209 = vmatpush1.bf16.msra.mxu0 %v2192
      %2210 = vmatprep.subr.bf16.mxu0 0
      %2211 = vmatpush1.bf16.msra.mxu0 %v2193
      %2212 = vmatprep.subr.bf16.mxu0 0
      %2213 = vmatpush1.bf16.msra.mxu0 %v2194
      %2214 = vmatprep.subr.bf16.mxu0 0
      %2215 = vmatpush1.bf16.msra.mxu0 %v2195
      %2216 = vmatprep.subr.bf16.mxu0 0
      %2217 = vmatpush1.bf16.msra.mxu0 %v2196
      %2218 = vmatprep.subr.bf16.mxu0 0
      %2219 = vmatpush1.bf16.msra.mxu0 %v2197
      %2220 = vmatprep.subr.bf16.mxu0 0
      %2221 = vmatpush1.bf16.msra.mxu0 %v2198
      %2222 = vmatprep.subr.bf16.mxu0 0
      %2223 = vmatpush1.bf16.msra.mxu0 %v2199
      %2224 = vmatprep.subr.bf16.mxu0 0
      %2225 = vmatpush1.bf16.msra.mxu0 0
      %2226 = vmatprep.subr.bf16.mxu0 0
      %2227 = vmatpush1.bf16.msra.mxu0 0
      %2228 = vmatprep.subr.bf16.mxu0 0
      %2229 = vmatpush1.bf16.msra.mxu0 0
      %2230 = vmatprep.subr.bf16.mxu0 0
      %2231 = vmatpush1.bf16.msra.mxu0 0
      %2232 = vmatprep.subr.bf16.mxu0 0
      %2233 = vmatpush1.bf16.msra.mxu0 0
      %2234 = vmatprep.subr.bf16.mxu0 0
      %2235 = vmatpush1.bf16.msra.mxu0 0
      %2236 = vmatprep.subr.bf16.mxu0 0
      %2237 = vmatpush1.bf16.msra.mxu0 0
      %2238 = vmatprep.subr.bf16.mxu0 0
      %2239 = vmatpush1.bf16.msra.mxu0 0
      %2240 = vmatprep.mubr.bf16.mxu0 0
      %2241 = vmatmul.mubr.bf16.gmra.mrb[0].mxu0 %v881
      %v2242 = vpop.f32.mrb[0].mxu0
      %v2243 = vadd.f32 %v2158, %v2242
      %v2244 = vpop.f32.mrb[0].mxu0
      %v2245 = vpop.f32.mrb[0].mxu0
      %v2246 = vadd.f32 %v2158, %v2245
      %v2247 = vpop.f32.mrb[0].mxu0
      %2248 = vmatprep.mubr.bf16.mxu0 0
      %2249 = vmatmul.mubr.bf16.gmra.mrb[0].mxu0 %v882
      %v2250 = vpop.f32.mrb[0].mxu0
      %v2251 = vadd.f32 %v2158, %v2250
      %v2252 = vpop.f32.mrb[0].mxu0
      %v2253 = vpop.f32.mrb[0].mxu0
      %v2254 = vadd.f32 %v2158, %v2253
      %v2255 = vpop.f32.mrb[0].mxu0
      %2256 = vdwg.mxu0
      %s2257 = scalar_lea.vmem %s639, 128
      %v2258 = vld [vmem:[%s2257] sm:$0xf]
      %v2259 = vld [vmem:[%s2257 + $0x4] sm:$0xf]
      %v2260 = vld [vmem:[%s2257 + $0x8] sm:$0xf]
      %v2261 = vld [vmem:[%s2257 + $0xc] sm:$0xf]
      %v2262 = vld [vmem:[%s2257 + $0x10] sm:$0xf]
      %v2263 = vld [vmem:[%s2257 + $0x14] sm:$0xf]
      %v2264 = vld [vmem:[%s2257 + $0x18] sm:$0xf]
      %v2265 = vld [vmem:[%s2257 + $0x1c] sm:$0xf]
      %v2266 = vld [vmem:[%s2257 + $0x20] sm:$0xf]
      %v2267 = vld [vmem:[%s2257 + $0x24] sm:$0xf]
      %v2268 = vld [vmem:[%s2257 + $0x28] sm:$0xf]
      %v2269 = vld [vmem:[%s2257 + $0x2c] sm:$0xf]
      %v2270 = vld [vmem:[%s2257 + $0x30] sm:$0xf]
      %v2271 = vld [vmem:[%s2257 + $0x34] sm:$0xf]
      %v2272 = vld [vmem:[%s2257 + $0x38] sm:$0xf]
      %v2273 = vld [vmem:[%s2257 + $0x3c] sm:$0xf]
      %s2274 = scalar_lea.vmem %s648, 6
      %v2275 = vld [vmem:[%s2274] sm:$0x1]
      %v2277 = vlaneseq
      %v2278 = vshrl.u32 %v2277, 7
      %v2279 = vsub.s32 0, %v2278
      %v2280 = vrot.slane %v2275, %v2279
      %v2298 = vunpack.c.l.b16 %v2258
      %v2299 = vunpack.c.l.b16 %v2259
      %v2300 = vunpack.c.l.b16 %v2260
      %v2301 = vunpack.c.l.b16 %v2261
      %v2302 = vunpack.c.l.b16 %v2262
      %v2303 = vunpack.c.l.b16 %v2263
      %v2304 = vunpack.c.l.b16 %v2264
      %v2305 = vunpack.c.l.b16 %v2265
      %v2306 = vunpack.c.l.b16 %v2266
      %v2307 = vunpack.c.l.b16 %v2267
      %v2308 = vunpack.c.l.b16 %v2268
      %v2309 = vunpack.c.l.b16 %v2269
      %v2310 = vunpack.c.l.b16 %v2270
      %v2311 = vunpack.c.l.b16 %v2271
      %v2312 = vunpack.c.l.b16 %v2272
      %v2313 = vunpack.c.l.b16 %v2273
      %v2314 = vpack.c.b16 %v2299, %v2298
      %v2315 = vpack.c.b16 %v2301, %v2300
      %v2316 = vpack.c.b16 %v2303, %v2302
      %v2317 = vpack.c.b16 %v2305, %v2304
      %v2318 = vpack.c.b16 %v2307, %v2306
      %v2319 = vpack.c.b16 %v2309, %v2308
      %v2320 = vpack.c.b16 %v2311, %v2310
      %v2321 = vpack.c.b16 %v2313, %v2312
      %2330 = vmatprep.subr.bf16.mxu0 0
      %2331 = vmatpush1.bf16.msra.mxu0 %v2314
      %2332 = vmatprep.subr.bf16.mxu0 0
      %2333 = vmatpush1.bf16.msra.mxu0 %v2315
      %2334 = vmatprep.subr.bf16.mxu0 0
      %2335 = vmatpush1.bf16.msra.mxu0 %v2316
      %2336 = vmatprep.subr.bf16.mxu0 0
      %2337 = vmatpush1.bf16.msra.mxu0 %v2317
      %2338 = vmatprep.subr.bf16.mxu0 0
      %2339 = vmatpush1.bf16.msra.mxu0 %v2318
      %2340 = vmatprep.subr.bf16.mxu0 0
      %2341 = vmatpush1.bf16.msra.mxu0 %v2319
      %2342 = vmatprep.subr.bf16.mxu0 0
      %2343 = vmatpush1.bf16.msra.mxu0 %v2320
      %2344 = vmatprep.subr.bf16.mxu0 0
      %2345 = vmatpush1.bf16.msra.mxu0 %v2321
      %2346 = vmatprep.subr.bf16.mxu0 0
      %2347 = vmatpush1.bf16.msra.mxu0 0
      %2348 = vmatprep.subr.bf16.mxu0 0
      %2349 = vmatpush1.bf16.msra.mxu0 0
      %2350 = vmatprep.subr.bf16.mxu0 0
      %2351 = vmatpush1.bf16.msra.mxu0 0
      %2352 = vmatprep.subr.bf16.mxu0 0
      %2353 = vmatpush1.bf16.msra.mxu0 0
      %2354 = vmatprep.subr.bf16.mxu0 0
      %2355 = vmatpush1.bf16.msra.mxu0 0
      %2356 = vmatprep.subr.bf16.mxu0 0
      %2357 = vmatpush1.bf16.msra.mxu0 0
      %2358 = vmatprep.subr.bf16.mxu0 0
      %2359 = vmatpush1.bf16.msra.mxu0 0
      %2360 = vmatprep.subr.bf16.mxu0 0
      %2361 = vmatpush1.bf16.msra.mxu0 0
      %2362 = vmatprep.mubr.bf16.mxu0 0
      %2363 = vmatmul.mubr.bf16.gmra.mrb[0].mxu0 %v881
      %v2364 = vpop.f32.mrb[0].mxu0
      %v2365 = vadd.f32 %v2280, %v2364
      %v2366 = vpop.f32.mrb[0].mxu0
      %v2367 = vpop.f32.mrb[0].mxu0
      %v2368 = vadd.f32 %v2280, %v2367
      %v2369 = vpop.f32.mrb[0].mxu0
      %2370 = vmatprep.mubr.bf16.mxu0 0
      %2371 = vmatmul.mubr.bf16.gmra.mrb[0].mxu0 %v882
      %v2372 = vpop.f32.mrb[0].mxu0
      %v2373 = vadd.f32 %v2280, %v2372
      %v2374 = vpop.f32.mrb[0].mxu0
      %v2375 = vpop.f32.mrb[0].mxu0
      %v2376 = vadd.f32 %v2280, %v2375
      %v2377 = vpop.f32.mrb[0].mxu0
      %2378 = vdwg.mxu0
      %s2379 = scalar_lea.vmem %s644, 128
      %v2380 = vld [vmem:[%s2379] sm:$0xf]
      %v2381 = vld [vmem:[%s2379 + $0x4] sm:$0xf]
      %v2382 = vld [vmem:[%s2379 + $0x8] sm:$0xf]
      %v2383 = vld [vmem:[%s2379 + $0xc] sm:$0xf]
      %v2384 = vld [vmem:[%s2379 + $0x10] sm:$0xf]
      %v2385 = vld [vmem:[%s2379 + $0x14] sm:$0xf]
      %v2386 = vld [vmem:[%s2379 + $0x18] sm:$0xf]
      %v2387 = vld [vmem:[%s2379 + $0x1c] sm:$0xf]
      %v2388 = vld [vmem:[%s2379 + $0x20] sm:$0xf]
      %v2389 = vld [vmem:[%s2379 + $0x24] sm:$0xf]
      %v2390 = vld [vmem:[%s2379 + $0x28] sm:$0xf]
      %v2391 = vld [vmem:[%s2379 + $0x2c] sm:$0xf]
      %v2392 = vld [vmem:[%s2379 + $0x30] sm:$0xf]
      %v2393 = vld [vmem:[%s2379 + $0x34] sm:$0xf]
      %v2394 = vld [vmem:[%s2379 + $0x38] sm:$0xf]
      %v2395 = vld [vmem:[%s2379 + $0x3c] sm:$0xf]
      %s2396 = scalar_lea.vmem %s648, 10
      %v2397 = vld [vmem:[%s2396] sm:$0x1]
      %v2399 = vlaneseq
      %v2400 = vshrl.u32 %v2399, 7
      %v2401 = vsub.s32 0, %v2400
      %v2402 = vrot.slane %v2397, %v2401
      %v2420 = vunpack.c.l.b16 %v2380
      %v2421 = vunpack.c.l.b16 %v2381
      %v2422 = vunpack.c.l.b16 %v2382
      %v2423 = vunpack.c.l.b16 %v2383
      %v2424 = vunpack.c.l.b16 %v2384
      %v2425 = vunpack.c.l.b16 %v2385
      %v2426 = vunpack.c.l.b16 %v2386
      %v2427 = vunpack.c.l.b16 %v2387
      %v2428 = vunpack.c.l.b16 %v2388
      %v2429 = vunpack.c.l.b16 %v2389
      %v2430 = vunpack.c.l.b16 %v2390
      %v2431 = vunpack.c.l.b16 %v2391
      %v2432 = vunpack.c.l.b16 %v2392
      %v2433 = vunpack.c.l.b16 %v2393
      %v2434 = vunpack.c.l.b16 %v2394
      %v2435 = vunpack.c.l.b16 %v2395
      %v2436 = vpack.c.b16 %v2421, %v2420
      %v2437 = vpack.c.b16 %v2423, %v2422
      %v2438 = vpack.c.b16 %v2425, %v2424
      %v2439 = vpack.c.b16 %v2427, %v2426
      %v2440 = vpack.c.b16 %v2429, %v2428
      %v2441 = vpack.c.b16 %v2431, %v2430
      %v2442 = vpack.c.b16 %v2433, %v2432
      %v2443 = vpack.c.b16 %v2435, %v2434
      %2452 = vmatprep.subr.bf16.mxu0 0
      %2453 = vmatpush1.bf16.msra.mxu0 %v2436
      %2454 = vmatprep.subr.bf16.mxu0 0
      %2455 = vmatpush1.bf16.msra.mxu0 %v2437
      %2456 = vmatprep.subr.bf16.mxu0 0
      %2457 = vmatpush1.bf16.msra.mxu0 %v2438
      %2458 = vmatprep.subr.bf16.mxu0 0
      %2459 = vmatpush1.bf16.msra.mxu0 %v2439
      %2460 = vmatprep.subr.bf16.mxu0 0
      %2461 = vmatpush1.bf16.msra.mxu0 %v2440
      %2462 = vmatprep.subr.bf16.mxu0 0
      %2463 = vmatpush1.bf16.msra.mxu0 %v2441
      %2464 = vmatprep.subr.bf16.mxu0 0
      %2465 = vmatpush1.bf16.msra.mxu0 %v2442
      %2466 = vmatprep.subr.bf16.mxu0 0
      %2467 = vmatpush1.bf16.msra.mxu0 %v2443
      %2468 = vmatprep.subr.bf16.mxu0 0
      %2469 = vmatpush1.bf16.msra.mxu0 0
      %2470 = vmatprep.subr.bf16.mxu0 0
      %2471 = vmatpush1.bf16.msra.mxu0 0
      %2472 = vmatprep.subr.bf16.mxu0 0
      %2473 = vmatpush1.bf16.msra.mxu0 0
      %2474 = vmatprep.subr.bf16.mxu0 0
      %2475 = vmatpush1.bf16.msra.mxu0 0
      %2476 = vmatprep.subr.bf16.mxu0 0
      %2477 = vmatpush1.bf16.msra.mxu0 0
      %2478 = vmatprep.subr.bf16.mxu0 0
      %2479 = vmatpush1.bf16.msra.mxu0 0
      %2480 = vmatprep.subr.bf16.mxu0 0
      %2481 = vmatpush1.bf16.msra.mxu0 0
      %2482 = vmatprep.subr.bf16.mxu0 0
      %2483 = vmatpush1.bf16.msra.mxu0 0
      %2484 = vmatprep.mubr.bf16.mxu0 0
      %2485 = vmatmul.mubr.bf16.gmra.mrb[0].mxu0 %v881
      %v2486 = vpop.f32.mrb[0].mxu0
      %v2487 = vadd.f32 %v2402, %v2486
      %v2488 = vpop.f32.mrb[0].mxu0
      %v2489 = vpop.f32.mrb[0].mxu0
      %v2490 = vadd.f32 %v2402, %v2489
      %v2491 = vpop.f32.mrb[0].mxu0
      %2492 = vmatprep.mubr.bf16.mxu0 0
      %2493 = vmatmul.mubr.bf16.gmra.mrb[0].mxu0 %v882
      %v2494 = vpop.f32.mrb[0].mxu0
      %v2495 = vadd.f32 %v2402, %v2494
      %v2496 = vpop.f32.mrb[0].mxu0
      %v2497 = vpop.f32.mrb[0].mxu0
      %v2498 = vadd.f32 %v2402, %v2497
      %v2499 = vpop.f32.mrb[0].mxu0
      %2500 = vdwg.mxu0
      %v2501 = vpack.c.bf16 %v2246, %v2243
      %v2502 = vpack.c.bf16 %v2254, %v2251
      %v2503 = vpack.c.bf16 %v2368, %v2365
      %v2504 = vpack.c.bf16 %v2376, %v2373
      %v2506 = vsel %vm1249, %v2501, 0
      %v2509 = vsel %vm1249, %v2502, 0
      %v2512 = vsel %vm1249, %v2503, 0
      %v2515 = vsel %vm1249, %v2504, 0
      %2517 = vmatprep.subr.bf16.mxu0 0
      %2518 = vmatpush1.bf16.xpose.msra.mxu0 %v2512
      %2519 = vmatprep.subr.bf16.mxu0 0
      %2520 = vmatpush1.bf16.xpose.msra.mxu0 %v2515
      %2521 = vmatprep.subr.bf16.mxu0 0
      %2522 = vmatpush1.bf16.xpose.msra.mxu0 0
      %2523 = vmatprep.subr.bf16.mxu0 0
      %2524 = vmatpush1.bf16.xpose.msra.mxu0 0
      %2525 = vmatprep.subr.bf16.mxu0 0
      %2526 = vmatpush1.bf16.xpose.msra.mxu0 0
      %2527 = vmatprep.subr.bf16.mxu0 0
      %2528 = vmatpush1.bf16.xpose.msra.mxu0 0
      %2529 = vmatprep.subr.bf16.mxu0 0
      %2530 = vmatpush1.bf16.xpose.msra.mxu0 0
      %2531 = vmatprep.subr.bf16.mxu0 0
      %2532 = vmatpush1.bf16.xpose.msra.mxu0 0
      %2533 = vmatprep.subr.bf16.mxu0 0
      %2534 = vmatpush1.bf16.xpose.msra.mxu0 0
      %2535 = vmatprep.subr.bf16.mxu0 0
      %2536 = vmatpush1.bf16.xpose.msra.mxu0 0
      %2537 = vmatprep.subr.bf16.mxu0 0
      %2538 = vmatpush1.bf16.xpose.msra.mxu0 0
      %2539 = vmatprep.subr.bf16.mxu0 0
      %2540 = vmatpush1.bf16.xpose.msra.mxu0 0
      %2541 = vmatprep.subr.bf16.mxu0 0
      %2542 = vmatpush1.bf16.xpose.msra.mxu0 0
      %2543 = vmatprep.subr.bf16.mxu0 0
      %2544 = vmatpush1.bf16.xpose.msra.mxu0 0
      %2545 = vmatprep.subr.bf16.mxu0 0
      %2546 = vmatpush1.bf16.xpose.msra.mxu0 0
      %2547 = vmatprep.subr.bf16.mxu0 0
      %2548 = vmatpush1.bf16.xpose.msra.mxu0 0
      %2549 = vmatprep.mubr.bf16.mxu0 0
      %2550 = vmatmul.mubr.bf16.gmra.mrb[0].mxu0 %v2506
      %v2551 = vpop.f32.mrb[0].mxu0
      %v2552 = vadd.f32 0.0, %v2551
      %v2553 = vpop.f32.mrb[0].mxu0
      %v2554 = vpop.f32.mrb[0].mxu0
      %v2555 = vadd.f32 0.0, %v2554
      %v2556 = vpop.f32.mrb[0].mxu0
      %2557 = vmatprep.mubr.bf16.mxu0 0
      %2558 = vmatmul.mubr.bf16.gmra.mrb[0].mxu0 %v2509
      %v2559 = vpop.f32.mrb[0].mxu0
      %v2560 = vadd.f32 0.0, %v2559
      %v2561 = vpop.f32.mrb[0].mxu0
      %v2562 = vpop.f32.mrb[0].mxu0
      %v2563 = vadd.f32 0.0, %v2562
      %v2564 = vpop.f32.mrb[0].mxu0
      %2565 = vdwg.mxu0
      %v2566 = vmul.f32 %v2552, 0.17677669
      %v2567 = vmul.f32 %v2555, 0.17677669
      %v2568 = vmul.f32 %v2560, 0.17677669
      %v2569 = vmul.f32 %v2563, 0.17677669
      %v2570 = vadd.f32 %v2566, %v818
      %v2571 = vadd.f32 %v2567, %v818
      %v2572 = vadd.f32 %v2568, %v818
      %v2573 = vadd.f32 %v2569, %v818
      %v2574 = vsel %vm1249, %v2570, -inf
      %2575 = vmax.xlane.f32.xlu0 %v2574
      %v2576 = vpop.xlane.xlu0 %2575
      %v2577 = vsel %vm1249, %v2571, -inf
      %2578 = vmax.xlane.f32.xlu0 %v2577
      %v2579 = vpop.xlane.xlu0 %2578
      %v2580 = vsel %vm1249, %v2572, -inf
      %2581 = vmax.xlane.f32.xlu0 %v2580
      %v2582 = vpop.xlane.xlu0 %2581
      %v2583 = vsel %vm1249, %v2573, -inf
      %2584 = vmax.xlane.f32.xlu0 %v2583
      %v2585 = vpop.xlane.xlu0 %2584
      %v2586 = vsub.f32 %v2570, %v2576
      %v2587 = vsub.f32 %v2571, %v2579
      %v2588 = vsub.f32 %v2572, %v2582
      %v2589 = vsub.f32 %v2573, %v2585
      %v2590 = vmul.f32 %v2586, 1.442695
      %v2591 = vpow.pop %v2590
      %v2592 = vmul.f32 %v2587, 1.442695
      %v2593 = vpow.pop %v2592
      %v2594 = vmul.f32 %v2588, 1.442695
      %v2595 = vpow.pop %v2594
      %v2596 = vmul.f32 %v2589, 1.442695
      %v2597 = vpow.pop %v2596
      %v2598 = vsel %vm1249, %v2591, 0.0
      %2599 = vadd.xlane.f32.xlu0 %v2598
      %v2600 = vpop.xlane.xlu0 %2599
      %v2601 = vsel %vm1249, %v2593, 0.0
      %2602 = vadd.xlane.f32.xlu0 %v2601
      %v2603 = vpop.xlane.xlu0 %2602
      %v2604 = vsel %vm1249, %v2595, 0.0
      %2605 = vadd.xlane.f32.xlu0 %v2604
      %v2606 = vpop.xlane.xlu0 %2605
      %v2607 = vsel %vm1249, %v2597, 0.0
      %2608 = vadd.xlane.f32.xlu0 %v2607
      %v2609 = vpop.xlane.xlu0 %2608
      %v2610 = vrcp.pop %v2600
      %v2611 = vrcp.pop %v2603
      %v2612 = vrcp.pop %v2606
      %v2613 = vrcp.pop %v2609
      %v2614 = vmul.f32 %v2600, %v2610
      %v2615 = vmul.f32 %v2603, %v2611
      %v2616 = vmul.f32 %v2606, %v2612
      %v2617 = vmul.f32 %v2609, %v2613
      %v2618 = vsub.f32 2.0, %v2614
      %v2619 = vsub.f32 2.0, %v2615
      %v2620 = vsub.f32 2.0, %v2616
      %v2621 = vsub.f32 2.0, %v2617
      %v2622 = vmul.f32 %v2610, %v2618
      %v2623 = vmul.f32 %v2611, %v2619
      %v2624 = vmul.f32 %v2612, %v2620
      %v2625 = vmul.f32 %v2613, %v2621
      %v2626 = vmul.f32 %v2591, %v2622
      %v2627 = vmul.f32 %v2593, %v2623
      %v2628 = vmul.f32 %v2595, %v2624
      %v2629 = vmul.f32 %v2597, %v2625
      %v2630 = vpack.c.bf16 %v2627, %v2626
      %v2631 = vpack.c.bf16 %v2629, %v2628
      %v2632 = vpack.c.bf16 %v2490, %v2487
      %v2633 = vpack.c.bf16 %v2498, %v2495
      %v2635 = vsel %vm1249, %v2630, 0
      %v2638 = vsel %vm1249, %v2631, 0
      %2640 = vmatprep.subr.bf16.mxu0 0
      %2641 = vmatpush1.bf16.msra.mxu0 %v2632
      %2642 = vmatprep.subr.bf16.mxu0 0
      %2643 = vmatpush1.bf16.msra.mxu0 %v2633
      %2644 = vmatprep.subr.bf16.mxu0 0
      %2645 = vmatpush1.bf16.msra.mxu0 0
      %2646 = vmatprep.subr.bf16.mxu0 0
      %2647 = vmatpush1.bf16.msra.mxu0 0
      %2648 = vmatprep.subr.bf16.mxu0 0
      %2649 = vmatpush1.bf16.msra.mxu0 0
      %2650 = vmatprep.subr.bf16.mxu0 0
      %2651 = vmatpush1.bf16.msra.mxu0 0
      %2652 = vmatprep.subr.bf16.mxu0 0
      %2653 = vmatpush1.bf16.msra.mxu0 0
      %2654 = vmatprep.subr.bf16.mxu0 0
      %2655 = vmatpush1.bf16.msra.mxu0 0
      %2656 = vmatprep.subr.bf16.mxu0 0
      %2657 = vmatpush1.bf16.msra.mxu0 0
      %2658 = vmatprep.subr.bf16.mxu0 0
      %2659 = vmatpush1.bf16.msra.mxu0 0
      %2660 = vmatprep.subr.bf16.mxu0 0
      %2661 = vmatpush1.bf16.msra.mxu0 0
      %2662 = vmatprep.subr.bf16.mxu0 0
      %2663 = vmatpush1.bf16.msra.mxu0 0
      %2664 = vmatprep.subr.bf16.mxu0 0
      %2665 = vmatpush1.bf16.msra.mxu0 0
      %2666 = vmatprep.subr.bf16.mxu0 0
      %2667 = vmatpush1.bf16.msra.mxu0 0
      %2668 = vmatprep.subr.bf16.mxu0 0
      %2669 = vmatpush1.bf16.msra.mxu0 0
      %2670 = vmatprep.subr.bf16.mxu0 0
      %2671 = vmatpush1.bf16.msra.mxu0 0
      %2672 = vmatprep.mubr.bf16.mxu0 0
      %2673 = vmatmul.mubr.bf16.gmra.mrb[0].mxu0 %v2635
      %v2674 = vpop.f32.mrb[0].mxu0
      %v2675 = vadd.f32 0.0, %v2674
      %v2676 = vpop.f32.mrb[0].mxu0
      %v2677 = vpop.f32.mrb[0].mxu0
      %v2678 = vadd.f32 0.0, %v2677
      %v2679 = vpop.f32.mrb[0].mxu0
      %2680 = vmatprep.mubr.bf16.mxu0 0
      %2681 = vmatmul.mubr.bf16.gmra.mrb[0].mxu0 %v2638
      %v2682 = vpop.f32.mrb[0].mxu0
      %v2683 = vadd.f32 0.0, %v2682
      %v2684 = vpop.f32.mrb[0].mxu0
      %v2685 = vpop.f32.mrb[0].mxu0
      %v2686 = vadd.f32 0.0, %v2685
      %v2687 = vpop.f32.mrb[0].mxu0
      %2688 = vdwg.mxu0
      %v2689 = vpack.c.bf16 %v2678, %v2675
      %v2690 = vpack.c.bf16 %v2686, %v2683
      %s2691 = scalar_lea.vmem %s653, 32
      %v2692 = vld [vmem:[%s2691] sm:$0xf]
      %v2693 = vld [vmem:[%s2691 + $0x4] sm:$0xf]
      %v2694 = vld [vmem:[%s2691 + $0x8] sm:$0xf]
      %v2695 = vld [vmem:[%s2691 + $0xc] sm:$0xf]
      %v2700 = vunpack.c.l.b16 %v2692
      %v2701 = vunpack.c.l.b16 %v2693
      %v2702 = vunpack.c.l.b16 %v2694
      %v2703 = vunpack.c.l.b16 %v2695
      %v2704 = vpack.c.b16 %v2701, %v2700
      %v2705 = vpack.c.b16 %v2703, %v2702
      %v2709 = vsel %vm1249, %v2689, 0
      %v2712 = vsel %vm1249, %v2690, 0
      %2714 = vmatprep.subr.bf16.mxu0 0
      %2715 = vmatpush1.bf16.msra.mxu0 %v2704
      %2716 = vmatprep.subr.bf16.mxu0 0
      %2717 = vmatpush1.bf16.msra.mxu0 %v2705
      %2718 = vmatprep.subr.bf16.mxu0 0
      %2719 = vmatpush1.bf16.msra.mxu0 0
      %2720 = vmatprep.subr.bf16.mxu0 0
      %2721 = vmatpush1.bf16.msra.mxu0 0
      %2722 = vmatprep.subr.bf16.mxu0 0
      %2723 = vmatpush1.bf16.msra.mxu0 0
      %2724 = vmatprep.subr.bf16.mxu0 0
      %2725 = vmatpush1.bf16.msra.mxu0 0
      %2726 = vmatprep.subr.bf16.mxu0 0
      %2727 = vmatpush1.bf16.msra.mxu0 0
      %2728 = vmatprep.subr.bf16.mxu0 0
      %2729 = vmatpush1.bf16.msra.mxu0 0
      %2730 = vmatprep.subr.bf16.mxu0 0
      %2731 = vmatpush1.bf16.msra.mxu0 0
      %2732 = vmatprep.subr.bf16.mxu0 0
      %2733 = vmatpush1.bf16.msra.mxu0 0
      %2734 = vmatprep.subr.bf16.mxu0 0
      %2735 = vmatpush1.bf16.msra.mxu0 0
      %2736 = vmatprep.subr.bf16.mxu0 0
      %2737 = vmatpush1.bf16.msra.mxu0 0
      %2738 = vmatprep.subr.bf16.mxu0 0
      %2739 = vmatpush1.bf16.msra.mxu0 0
      %2740 = vmatprep.subr.bf16.mxu0 0
      %2741 = vmatpush1.bf16.msra.mxu0 0
      %2742 = vmatprep.subr.bf16.mxu0 0
      %2743 = vmatpush1.bf16.msra.mxu0 0
      %2744 = vmatprep.subr.bf16.mxu0 0
      %2745 = vmatpush1.bf16.msra.mxu0 0
      %2746 = vmatprep.mubr.bf16.mxu0 0
      %2747 = vmatmul.mubr.bf16.gmra.mrb[0].mxu0 %v2709
      %v2748 = vpop.f32.mrb[0].mxu0
      %v2749 = vadd.f32 0.0, %v2748
      %v2750 = vpop.f32.mrb[0].mxu0
      %v2751 = vpop.f32.mrb[0].mxu0
      %v2752 = vadd.f32 0.0, %v2751
      %v2753 = vpop.f32.mrb[0].mxu0
      %2754 = vmatprep.mubr.bf16.mxu0 0
      %2755 = vmatmul.mubr.bf16.gmra.mrb[0].mxu0 %v2712
      %v2756 = vpop.f32.mrb[0].mxu0
      %v2757 = vadd.f32 0.0, %v2756
      %v2758 = vpop.f32.mrb[0].mxu0
      %v2759 = vpop.f32.mrb[0].mxu0
      %v2760 = vadd.f32 0.0, %v2759
      %v2761 = vpop.f32.mrb[0].mxu0
      %2762 = vdwg.mxu0
      %v2763 = vadd.f32 %v2121, %v2749
      %v2764 = vadd.f32 %v2124, %v2752
      %v2765 = vadd.f32 %v2129, %v2757
      %v2766 = vadd.f32 %v2132, %v2760
      %s2767 = scalar_lea.vmem %s634, 192
      %v2768 = vld [vmem:[%s2767] sm:$0xf]
      %v2769 = vld [vmem:[%s2767 + $0x4] sm:$0xf]
      %v2770 = vld [vmem:[%s2767 + $0x8] sm:$0xf]
      %v2771 = vld [vmem:[%s2767 + $0xc] sm:$0xf]
      %v2772 = vld [vmem:[%s2767 + $0x10] sm:$0xf]
      %v2773 = vld [vmem:[%s2767 + $0x14] sm:$0xf]
      %v2774 = vld [vmem:[%s2767 + $0x18] sm:$0xf]
      %v2775 = vld [vmem:[%s2767 + $0x1c] sm:$0xf]
      %v2776 = vld [vmem:[%s2767 + $0x20] sm:$0xf]
      %v2777 = vld [vmem:[%s2767 + $0x24] sm:$0xf]
      %v2778 = vld [vmem:[%s2767 + $0x28] sm:$0xf]
      %v2779 = vld [vmem:[%s2767 + $0x2c] sm:$0xf]
      %v2780 = vld [vmem:[%s2767 + $0x30] sm:$0xf]
      %v2781 = vld [vmem:[%s2767 + $0x34] sm:$0xf]
      %v2782 = vld [vmem:[%s2767 + $0x38] sm:$0xf]
      %v2783 = vld [vmem:[%s2767 + $0x3c] sm:$0xf]
      %s2784 = scalar_lea.vmem %s648, 3
      %v2785 = vld [vmem:[%s2784] sm:$0x1]
      %v2787 = vlaneseq
      %v2788 = vshrl.u32 %v2787, 7
      %v2789 = vsub.s32 0, %v2788
      %v2790 = vrot.slane %v2785, %v2789
      %v2808 = vunpack.c.l.b16 %v2768
      %v2809 = vunpack.c.l.b16 %v2769
      %v2810 = vunpack.c.l.b16 %v2770
      %v2811 = vunpack.c.l.b16 %v2771
      %v2812 = vunpack.c.l.b16 %v2772
      %v2813 = vunpack.c.l.b16 %v2773
      %v2814 = vunpack.c.l.b16 %v2774
      %v2815 = vunpack.c.l.b16 %v2775
      %v2816 = vunpack.c.l.b16 %v2776
      %v2817 = vunpack.c.l.b16 %v2777
      %v2818 = vunpack.c.l.b16 %v2778
      %v2819 = vunpack.c.l.b16 %v2779
      %v2820 = vunpack.c.l.b16 %v2780
      %v2821 = vunpack.c.l.b16 %v2781
      %v2822 = vunpack.c.l.b16 %v2782
      %v2823 = vunpack.c.l.b16 %v2783
      %v2824 = vpack.c.b16 %v2809, %v2808
      %v2825 = vpack.c.b16 %v2811, %v2810
      %v2826 = vpack.c.b16 %v2813, %v2812
      %v2827 = vpack.c.b16 %v2815, %v2814
      %v2828 = vpack.c.b16 %v2817, %v2816
      %v2829 = vpack.c.b16 %v2819, %v2818
      %v2830 = vpack.c.b16 %v2821, %v2820
      %v2831 = vpack.c.b16 %v2823, %v2822
      %2840 = vmatprep.subr.bf16.mxu0 0
      %2841 = vmatpush1.bf16.msra.mxu0 %v2824
      %2842 = vmatprep.subr.bf16.mxu0 0
      %2843 = vmatpush1.bf16.msra.mxu0 %v2825
      %2844 = vmatprep.subr.bf16.mxu0 0
      %2845 = vmatpush1.bf16.msra.mxu0 %v2826
      %2846 = vmatprep.subr.bf16.mxu0 0
      %2847 = vmatpush1.bf16.msra.mxu0 %v2827
      %2848 = vmatprep.subr.bf16.mxu0 0
      %2849 = vmatpush1.bf16.msra.mxu0 %v2828
      %2850 = vmatprep.subr.bf16.mxu0 0
      %2851 = vmatpush1.bf16.msra.mxu0 %v2829
      %2852 = vmatprep.subr.bf16.mxu0 0
      %2853 = vmatpush1.bf16.msra.mxu0 %v2830
      %2854 = vmatprep.subr.bf16.mxu0 0
      %2855 = vmatpush1.bf16.msra.mxu0 %v2831
      %2856 = vmatprep.subr.bf16.mxu0 0
      %2857 = vmatpush1.bf16.msra.mxu0 0
      %2858 = vmatprep.subr.bf16.mxu0 0
      %2859 = vmatpush1.bf16.msra.mxu0 0
      %2860 = vmatprep.subr.bf16.mxu0 0
      %2861 = vmatpush1.bf16.msra.mxu0 0
      %2862 = vmatprep.subr.bf16.mxu0 0
      %2863 = vmatpush1.bf16.msra.mxu0 0
      %2864 = vmatprep.subr.bf16.mxu0 0
      %2865 = vmatpush1.bf16.msra.mxu0 0
      %2866 = vmatprep.subr.bf16.mxu0 0
      %2867 = vmatpush1.bf16.msra.mxu0 0
      %2868 = vmatprep.subr.bf16.mxu0 0
      %2869 = vmatpush1.bf16.msra.mxu0 0
      %2870 = vmatprep.subr.bf16.mxu0 0
      %2871 = vmatpush1.bf16.msra.mxu0 0
      %2872 = vmatprep.mubr.bf16.mxu0 0
      %2873 = vmatmul.mubr.bf16.gmra.mrb[0].mxu0 %v881
      %v2874 = vpop.f32.mrb[0].mxu0
      %v2875 = vadd.f32 %v2790, %v2874
      %v2876 = vpop.f32.mrb[0].mxu0
      %v2877 = vpop.f32.mrb[0].mxu0
      %v2878 = vadd.f32 %v2790, %v2877
      %v2879 = vpop.f32.mrb[0].mxu0
      %2880 = vmatprep.mubr.bf16.mxu0 0
      %2881 = vmatmul.mubr.bf16.gmra.mrb[0].mxu0 %v882
      %v2882 = vpop.f32.mrb[0].mxu0
      %v2883 = vadd.f32 %v2790, %v2882
      %v2884 = vpop.f32.mrb[0].mxu0
      %v2885 = vpop.f32.mrb[0].mxu0
      %v2886 = vadd.f32 %v2790, %v2885
      %v2887 = vpop.f32.mrb[0].mxu0
      %2888 = vdwg.mxu0
      %s2889 = scalar_lea.vmem %s639, 192
      %v2890 = vld [vmem:[%s2889] sm:$0xf]
      %v2891 = vld [vmem:[%s2889 + $0x4] sm:$0xf]
      %v2892 = vld [vmem:[%s2889 + $0x8] sm:$0xf]
      %v2893 = vld [vmem:[%s2889 + $0xc] sm:$0xf]
      %v2894 = vld [vmem:[%s2889 + $0x10] sm:$0xf]
      %v2895 = vld [vmem:[%s2889 + $0x14] sm:$0xf]
      %v2896 = vld [vmem:[%s2889 + $0x18] sm:$0xf]
      %v2897 = vld [vmem:[%s2889 + $0x1c] sm:$0xf]
      %v2898 = vld [vmem:[%s2889 + $0x20] sm:$0xf]
      %v2899 = vld [vmem:[%s2889 + $0x24] sm:$0xf]
      %v2900 = vld [vmem:[%s2889 + $0x28] sm:$0xf]
      %v2901 = vld [vmem:[%s2889 + $0x2c] sm:$0xf]
      %v2902 = vld [vmem:[%s2889 + $0x30] sm:$0xf]
      %v2903 = vld [vmem:[%s2889 + $0x34] sm:$0xf]
      %v2904 = vld [vmem:[%s2889 + $0x38] sm:$0xf]
      %v2905 = vld [vmem:[%s2889 + $0x3c] sm:$0xf]
      %s2906 = scalar_lea.vmem %s648, 7
      %v2907 = vld [vmem:[%s2906] sm:$0x1]
      %v2909 = vlaneseq
      %v2910 = vshrl.u32 %v2909, 7
      %v2911 = vsub.s32 0, %v2910
      %v2912 = vrot.slane %v2907, %v2911
      %v2930 = vunpack.c.l.b16 %v2890
      %v2931 = vunpack.c.l.b16 %v2891
      %v2932 = vunpack.c.l.b16 %v2892
      %v2933 = vunpack.c.l.b16 %v2893
      %v2934 = vunpack.c.l.b16 %v2894
      %v2935 = vunpack.c.l.b16 %v2895
      %v2936 = vunpack.c.l.b16 %v2896
      %v2937 = vunpack.c.l.b16 %v2897
      %v2938 = vunpack.c.l.b16 %v2898
      %v2939 = vunpack.c.l.b16 %v2899
      %v2940 = vunpack.c.l.b16 %v2900
      %v2941 = vunpack.c.l.b16 %v2901
      %v2942 = vunpack.c.l.b16 %v2902
      %v2943 = vunpack.c.l.b16 %v2903
      %v2944 = vunpack.c.l.b16 %v2904
      %v2945 = vunpack.c.l.b16 %v2905
      %v2946 = vpack.c.b16 %v2931, %v2930
      %v2947 = vpack.c.b16 %v2933, %v2932
      %v2948 = vpack.c.b16 %v2935, %v2934
      %v2949 = vpack.c.b16 %v2937, %v2936
      %v2950 = vpack.c.b16 %v2939, %v2938
      %v2951 = vpack.c.b16 %v2941, %v2940
      %v2952 = vpack.c.b16 %v2943, %v2942
      %v2953 = vpack.c.b16 %v2945, %v2944
      %2962 = vmatprep.subr.bf16.mxu0 0
      %2963 = vmatpush1.bf16.msra.mxu0 %v2946
      %2964 = vmatprep.subr.bf16.mxu0 0
      %2965 = vmatpush1.bf16.msra.mxu0 %v2947
      %2966 = vmatprep.subr.bf16.mxu0 0
      %2967 = vmatpush1.bf16.msra.mxu0 %v2948
      %2968 = vmatprep.subr.bf16.mxu0 0
      %2969 = vmatpush1.bf16.msra.mxu0 %v2949
      %2970 = vmatprep.subr.bf16.mxu0 0
      %2971 = vmatpush1.bf16.msra.mxu0 %v2950
      %2972 = vmatprep.subr.bf16.mxu0 0
      %2973 = vmatpush1.bf16.msra.mxu0 %v2951
      %2974 = vmatprep.subr.bf16.mxu0 0
      %2975 = vmatpush1.bf16.msra.mxu0 %v2952
      %2976 = vmatprep.subr.bf16.mxu0 0
      %2977 = vmatpush1.bf16.msra.mxu0 %v2953
      %2978 = vmatprep.subr.bf16.mxu0 0
      %2979 = vmatpush1.bf16.msra.mxu0 0
      %2980 = vmatprep.subr.bf16.mxu0 0
      %2981 = vmatpush1.bf16.msra.mxu0 0
      %2982 = vmatprep.subr.bf16.mxu0 0
      %2983 = vmatpush1.bf16.msra.mxu0 0
      %2984 = vmatprep.subr.bf16.mxu0 0
      %2985 = vmatpush1.bf16.msra.mxu0 0
      %2986 = vmatprep.subr.bf16.mxu0 0
      %2987 = vmatpush1.bf16.msra.mxu0 0
      %2988 = vmatprep.subr.bf16.mxu0 0
      %2989 = vmatpush1.bf16.msra.mxu0 0
      %2990 = vmatprep.subr.bf16.mxu0 0
      %2991 = vmatpush1.bf16.msra.mxu0 0
      %2992 = vmatprep.subr.bf16.mxu0 0
      %2993 = vmatpush1.bf16.msra.mxu0 0
      %2994 = vmatprep.mubr.bf16.mxu0 0
      %2995 = vmatmul.mubr.bf16.gmra.mrb[0].mxu0 %v881
      %v2996 = vpop.f32.mrb[0].mxu0
      %v2997 = vadd.f32 %v2912, %v2996
      %v2998 = vpop.f32.mrb[0].mxu0
      %v2999 = vpop.f32.mrb[0].mxu0
      %v3000 = vadd.f32 %v2912, %v2999
      %v3001 = vpop.f32.mrb[0].mxu0
      %3002 = vmatprep.mubr.bf16.mxu0 0
      %3003 = vmatmul.mubr.bf16.gmra.mrb[0].mxu0 %v882
      %v3004 = vpop.f32.mrb[0].mxu0
      %v3005 = vadd.f32 %v2912, %v3004
      %v3006 = vpop.f32.mrb[0].mxu0
      %v3007 = vpop.f32.mrb[0].mxu0
      %v3008 = vadd.f32 %v2912, %v3007
      %v3009 = vpop.f32.mrb[0].mxu0
      %3010 = vdwg.mxu0
      %s3011 = scalar_lea.vmem %s644, 192
      %v3012 = vld [vmem:[%s3011] sm:$0xf]
      %v3013 = vld [vmem:[%s3011 + $0x4] sm:$0xf]
      %v3014 = vld [vmem:[%s3011 + $0x8] sm:$0xf]
      %v3015 = vld [vmem:[%s3011 + $0xc] sm:$0xf]
      %v3016 = vld [vmem:[%s3011 + $0x10] sm:$0xf]
      %v3017 = vld [vmem:[%s3011 + $0x14] sm:$0xf]
      %v3018 = vld [vmem:[%s3011 + $0x18] sm:$0xf]
      %v3019 = vld [vmem:[%s3011 + $0x1c] sm:$0xf]
      %v3020 = vld [vmem:[%s3011 + $0x20] sm:$0xf]
      %v3021 = vld [vmem:[%s3011 + $0x24] sm:$0xf]
      %v3022 = vld [vmem:[%s3011 + $0x28] sm:$0xf]
      %v3023 = vld [vmem:[%s3011 + $0x2c] sm:$0xf]
      %v3024 = vld [vmem:[%s3011 + $0x30] sm:$0xf]
      %v3025 = vld [vmem:[%s3011 + $0x34] sm:$0xf]
      %v3026 = vld [vmem:[%s3011 + $0x38] sm:$0xf]
      %v3027 = vld [vmem:[%s3011 + $0x3c] sm:$0xf]
      %s3028 = scalar_lea.vmem %s648, 11
      %v3029 = vld [vmem:[%s3028] sm:$0x1]
      %v3031 = vlaneseq
      %v3032 = vshrl.u32 %v3031, 7
      %v3033 = vsub.s32 0, %v3032
      %v3034 = vrot.slane %v3029, %v3033
      %v3052 = vunpack.c.l.b16 %v3012
      %v3053 = vunpack.c.l.b16 %v3013
      %v3054 = vunpack.c.l.b16 %v3014
      %v3055 = vunpack.c.l.b16 %v3015
      %v3056 = vunpack.c.l.b16 %v3016
      %v3057 = vunpack.c.l.b16 %v3017
      %v3058 = vunpack.c.l.b16 %v3018
      %v3059 = vunpack.c.l.b16 %v3019
      %v3060 = vunpack.c.l.b16 %v3020
      %v3061 = vunpack.c.l.b16 %v3021
      %v3062 = vunpack.c.l.b16 %v3022
      %v3063 = vunpack.c.l.b16 %v3023
      %v3064 = vunpack.c.l.b16 %v3024
      %v3065 = vunpack.c.l.b16 %v3025
      %v3066 = vunpack.c.l.b16 %v3026
      %v3067 = vunpack.c.l.b16 %v3027
      %v3068 = vpack.c.b16 %v3053, %v3052
      %v3069 = vpack.c.b16 %v3055, %v3054
      %v3070 = vpack.c.b16 %v3057, %v3056
      %v3071 = vpack.c.b16 %v3059, %v3058
      %v3072 = vpack.c.b16 %v3061, %v3060
      %v3073 = vpack.c.b16 %v3063, %v3062
      %v3074 = vpack.c.b16 %v3065, %v3064
      %v3075 = vpack.c.b16 %v3067, %v3066
      %3084 = vmatprep.subr.bf16.mxu0 0
      %3085 = vmatpush1.bf16.msra.mxu0 %v3068
      %3086 = vmatprep.subr.bf16.mxu0 0
      %3087 = vmatpush1.bf16.msra.mxu0 %v3069
      %3088 = vmatprep.subr.bf16.mxu0 0
      %3089 = vmatpush1.bf16.msra.mxu0 %v3070
      %3090 = vmatprep.subr.bf16.mxu0 0
      %3091 = vmatpush1.bf16.msra.mxu0 %v3071
      %3092 = vmatprep.subr.bf16.mxu0 0
      %3093 = vmatpush1.bf16.msra.mxu0 %v3072
      %3094 = vmatprep.subr.bf16.mxu0 0
      %3095 = vmatpush1.bf16.msra.mxu0 %v3073
      %3096 = vmatprep.subr.bf16.mxu0 0
      %3097 = vmatpush1.bf16.msra.mxu0 %v3074
      %3098 = vmatprep.subr.bf16.mxu0 0
      %3099 = vmatpush1.bf16.msra.mxu0 %v3075
      %3100 = vmatprep.subr.bf16.mxu0 0
      %3101 = vmatpush1.bf16.msra.mxu0 0
      %3102 = vmatprep.subr.bf16.mxu0 0
      %3103 = vmatpush1.bf16.msra.mxu0 0
      %3104 = vmatprep.subr.bf16.mxu0 0
      %3105 = vmatpush1.bf16.msra.mxu0 0
      %3106 = vmatprep.subr.bf16.mxu0 0
      %3107 = vmatpush1.bf16.msra.mxu0 0
      %3108 = vmatprep.subr.bf16.mxu0 0
      %3109 = vmatpush1.bf16.msra.mxu0 0
      %3110 = vmatprep.subr.bf16.mxu0 0
      %3111 = vmatpush1.bf16.msra.mxu0 0
      %3112 = vmatprep.subr.bf16.mxu0 0
      %3113 = vmatpush1.bf16.msra.mxu0 0
      %3114 = vmatprep.subr.bf16.mxu0 0
      %3115 = vmatpush1.bf16.msra.mxu0 0
      %3116 = vmatprep.mubr.bf16.mxu0 0
      %3117 = vmatmul.mubr.bf16.gmra.mrb[0].mxu0 %v881
      %v3118 = vpop.f32.mrb[0].mxu0
      %v3119 = vadd.f32 %v3034, %v3118
      %v3120 = vpop.f32.mrb[0].mxu0
      %v3121 = vpop.f32.mrb[0].mxu0
      %v3122 = vadd.f32 %v3034, %v3121
      %v3123 = vpop.f32.mrb[0].mxu0
      %3124 = vmatprep.mubr.bf16.mxu0 0
      %3125 = vmatmul.mubr.bf16.gmra.mrb[0].mxu0 %v882
      %v3126 = vpop.f32.mrb[0].mxu0
      %v3127 = vadd.f32 %v3034, %v3126
      %v3128 = vpop.f32.mrb[0].mxu0
      %v3129 = vpop.f32.mrb[0].mxu0
      %v3130 = vadd.f32 %v3034, %v3129
      %v3131 = vpop.f32.mrb[0].mxu0
      %3132 = vdwg.mxu0
      %v3133 = vpack.c.bf16 %v2878, %v2875
      %v3134 = vpack.c.bf16 %v2886, %v2883
      %v3135 = vpack.c.bf16 %v3000, %v2997
      %v3136 = vpack.c.bf16 %v3008, %v3005
      %v3138 = vsel %vm1249, %v3133, 0
      %v3141 = vsel %vm1249, %v3134, 0
      %v3144 = vsel %vm1249, %v3135, 0
      %v3147 = vsel %vm1249, %v3136, 0
      %3149 = vmatprep.subr.bf16.mxu0 0
      %3150 = vmatpush1.bf16.xpose.msra.mxu0 %v3144
      %3151 = vmatprep.subr.bf16.mxu0 0
      %3152 = vmatpush1.bf16.xpose.msra.mxu0 %v3147
      %3153 = vmatprep.subr.bf16.mxu0 0
      %3154 = vmatpush1.bf16.xpose.msra.mxu0 0
      %3155 = vmatprep.subr.bf16.mxu0 0
      %3156 = vmatpush1.bf16.xpose.msra.mxu0 0
      %3157 = vmatprep.subr.bf16.mxu0 0
      %3158 = vmatpush1.bf16.xpose.msra.mxu0 0
      %3159 = vmatprep.subr.bf16.mxu0 0
      %3160 = vmatpush1.bf16.xpose.msra.mxu0 0
      %3161 = vmatprep.subr.bf16.mxu0 0
      %3162 = vmatpush1.bf16.xpose.msra.mxu0 0
      %3163 = vmatprep.subr.bf16.mxu0 0
      %3164 = vmatpush1.bf16.xpose.msra.mxu0 0
      %3165 = vmatprep.subr.bf16.mxu0 0
      %3166 = vmatpush1.bf16.xpose.msra.mxu0 0
      %3167 = vmatprep.subr.bf16.mxu0 0
      %3168 = vmatpush1.bf16.xpose.msra.mxu0 0
      %3169 = vmatprep.subr.bf16.mxu0 0
      %3170 = vmatpush1.bf16.xpose.msra.mxu0 0
      %3171 = vmatprep.subr.bf16.mxu0 0
      %3172 = vmatpush1.bf16.xpose.msra.mxu0 0
      %3173 = vmatprep.subr.bf16.mxu0 0
      %3174 = vmatpush1.bf16.xpose.msra.mxu0 0
      %3175 = vmatprep.subr.bf16.mxu0 0
      %3176 = vmatpush1.bf16.xpose.msra.mxu0 0
      %3177 = vmatprep.subr.bf16.mxu0 0
      %3178 = vmatpush1.bf16.xpose.msra.mxu0 0
      %3179 = vmatprep.subr.bf16.mxu0 0
      %3180 = vmatpush1.bf16.xpose.msra.mxu0 0
      %3181 = vmatprep.mubr.bf16.mxu0 0
      %3182 = vmatmul.mubr.bf16.gmra.mrb[0].mxu0 %v3138
      %v3183 = vpop.f32.mrb[0].mxu0
      %v3184 = vadd.f32 0.0, %v3183
      %v3185 = vpop.f32.mrb[0].mxu0
      %v3186 = vpop.f32.mrb[0].mxu0
      %v3187 = vadd.f32 0.0, %v3186
      %v3188 = vpop.f32.mrb[0].mxu0
      %3189 = vmatprep.mubr.bf16.mxu0 0
      %3190 = vmatmul.mubr.bf16.gmra.mrb[0].mxu0 %v3141
      %v3191 = vpop.f32.mrb[0].mxu0
      %v3192 = vadd.f32 0.0, %v3191
      %v3193 = vpop.f32.mrb[0].mxu0
      %v3194 = vpop.f32.mrb[0].mxu0
      %v3195 = vadd.f32 0.0, %v3194
      %v3196 = vpop.f32.mrb[0].mxu0
      %3197 = vdwg.mxu0
      %v3198 = vmul.f32 %v3184, 0.17677669
      %v3199 = vmul.f32 %v3187, 0.17677669
      %v3200 = vmul.f32 %v3192, 0.17677669
      %v3201 = vmul.f32 %v3195, 0.17677669
      %v3202 = vadd.f32 %v3198, %v818
      %v3203 = vadd.f32 %v3199, %v818
      %v3204 = vadd.f32 %v3200, %v818
      %v3205 = vadd.f32 %v3201, %v818
      %v3206 = vsel %vm1249, %v3202, -inf
      %3207 = vmax.xlane.f32.xlu0 %v3206
      %v3208 = vpop.xlane.xlu0 %3207
      %v3209 = vsel %vm1249, %v3203, -inf
      %3210 = vmax.xlane.f32.xlu0 %v3209
      %v3211 = vpop.xlane.xlu0 %3210
      %v3212 = vsel %vm1249, %v3204, -inf
      %3213 = vmax.xlane.f32.xlu0 %v3212
      %v3214 = vpop.xlane.xlu0 %3213
      %v3215 = vsel %vm1249, %v3205, -inf
      %3216 = vmax.xlane.f32.xlu0 %v3215
      %v3217 = vpop.xlane.xlu0 %3216
      %v3218 = vsub.f32 %v3202, %v3208
      %v3219 = vsub.f32 %v3203, %v3211
      %v3220 = vsub.f32 %v3204, %v3214
      %v3221 = vsub.f32 %v3205, %v3217
      %v3222 = vmul.f32 %v3218, 1.442695
      %v3223 = vpow.pop %v3222
      %v3224 = vmul.f32 %v3219, 1.442695
      %v3225 = vpow.pop %v3224
      %v3226 = vmul.f32 %v3220, 1.442695
      %v3227 = vpow.pop %v3226
      %v3228 = vmul.f32 %v3221, 1.442695
      %v3229 = vpow.pop %v3228
      %v3230 = vsel %vm1249, %v3223, 0.0
      %3231 = vadd.xlane.f32.xlu0 %v3230
      %v3232 = vpop.xlane.xlu0 %3231
      %v3233 = vsel %vm1249, %v3225, 0.0
      %3234 = vadd.xlane.f32.xlu0 %v3233
      %v3235 = vpop.xlane.xlu0 %3234
      %v3236 = vsel %vm1249, %v3227, 0.0
      %3237 = vadd.xlane.f32.xlu0 %v3236
      %v3238 = vpop.xlane.xlu0 %3237
      %v3239 = vsel %vm1249, %v3229, 0.0
      %3240 = vadd.xlane.f32.xlu0 %v3239
      %v3241 = vpop.xlane.xlu0 %3240
      %v3242 = vrcp.pop %v3232
      %v3243 = vrcp.pop %v3235
      %v3244 = vrcp.pop %v3238
      %v3245 = vrcp.pop %v3241
      %v3246 = vmul.f32 %v3232, %v3242
      %v3247 = vmul.f32 %v3235, %v3243
      %v3248 = vmul.f32 %v3238, %v3244
      %v3249 = vmul.f32 %v3241, %v3245
      %v3250 = vsub.f32 2.0, %v3246
      %v3251 = vsub.f32 2.0, %v3247
      %v3252 = vsub.f32 2.0, %v3248
      %v3253 = vsub.f32 2.0, %v3249
      %v3254 = vmul.f32 %v3242, %v3250
      %v3255 = vmul.f32 %v3243, %v3251
      %v3256 = vmul.f32 %v3244, %v3252
      %v3257 = vmul.f32 %v3245, %v3253
      %v3258 = vmul.f32 %v3223, %v3254
      %v3259 = vmul.f32 %v3225, %v3255
      %v3260 = vmul.f32 %v3227, %v3256
      %v3261 = vmul.f32 %v3229, %v3257
      %v3262 = vpack.c.bf16 %v3259, %v3258
      %v3263 = vpack.c.bf16 %v3261, %v3260
      %v3264 = vpack.c.bf16 %v3122, %v3119
      %v3265 = vpack.c.bf16 %v3130, %v3127
      %v3267 = vsel %vm1249, %v3262, 0
      %v3270 = vsel %vm1249, %v3263, 0
      %3272 = vmatprep.subr.bf16.mxu0 0
      %3273 = vmatpush1.bf16.msra.mxu0 %v3264
      %3274 = vmatprep.subr.bf16.mxu0 0
      %3275 = vmatpush1.bf16.msra.mxu0 %v3265
      %3276 = vmatprep.subr.bf16.mxu0 0
      %3277 = vmatpush1.bf16.msra.mxu0 0
      %3278 = vmatprep.subr.bf16.mxu0 0
      %3279 = vmatpush1.bf16.msra.mxu0 0
      %3280 = vmatprep.subr.bf16.mxu0 0
      %3281 = vmatpush1.bf16.msra.mxu0 0
      %3282 = vmatprep.subr.bf16.mxu0 0
      %3283 = vmatpush1.bf16.msra.mxu0 0
      %3284 = vmatprep.subr.bf16.mxu0 0
      %3285 = vmatpush1.bf16.msra.mxu0 0
      %3286 = vmatprep.subr.bf16.mxu0 0
      %3287 = vmatpush1.bf16.msra.mxu0 0
      %3288 = vmatprep.subr.bf16.mxu0 0
      %3289 = vmatpush1.bf16.msra.mxu0 0
      %3290 = vmatprep.subr.bf16.mxu0 0
      %3291 = vmatpush1.bf16.msra.mxu0 0
      %3292 = vmatprep.subr.bf16.mxu0 0
      %3293 = vmatpush1.bf16.msra.mxu0 0
      %3294 = vmatprep.subr.bf16.mxu0 0
      %3295 = vmatpush1.bf16.msra.mxu0 0
      %3296 = vmatprep.subr.bf16.mxu0 0
      %3297 = vmatpush1.bf16.msra.mxu0 0
      %3298 = vmatprep.subr.bf16.mxu0 0
      %3299 = vmatpush1.bf16.msra.mxu0 0
      %3300 = vmatprep.subr.bf16.mxu0 0
      %3301 = vmatpush1.bf16.msra.mxu0 0
      %3302 = vmatprep.subr.bf16.mxu0 0
      %3303 = vmatpush1.bf16.msra.mxu0 0
      %3304 = vmatprep.mubr.bf16.mxu0 0
      %3305 = vmatmul.mubr.bf16.gmra.mrb[0].mxu0 %v3267
      %v3306 = vpop.f32.mrb[0].mxu0
      %v3307 = vadd.f32 0.0, %v3306
      %v3308 = vpop.f32.mrb[0].mxu0
      %v3309 = vpop.f32.mrb[0].mxu0
      %v3310 = vadd.f32 0.0, %v3309
      %v3311 = vpop.f32.mrb[0].mxu0
      %3312 = vmatprep.mubr.bf16.mxu0 0
      %3313 = vmatmul.mubr.bf16.gmra.mrb[0].mxu0 %v3270
      %v3314 = vpop.f32.mrb[0].mxu0
      %v3315 = vadd.f32 0.0, %v3314
      %v3316 = vpop.f32.mrb[0].mxu0
      %v3317 = vpop.f32.mrb[0].mxu0
      %v3318 = vadd.f32 0.0, %v3317
      %v3319 = vpop.f32.mrb[0].mxu0
      %3320 = vdwg.mxu0
      %v3321 = vpack.c.bf16 %v3310, %v3307
      %v3322 = vpack.c.bf16 %v3318, %v3315
      %s3323 = scalar_lea.vmem %s653, 48
      %v3324 = vld [vmem:[%s3323] sm:$0xf]
      %v3325 = vld [vmem:[%s3323 + $0x4] sm:$0xf]
      %v3326 = vld [vmem:[%s3323 + $0x8] sm:$0xf]
      %v3327 = vld [vmem:[%s3323 + $0xc] sm:$0xf]
      %v3332 = vunpack.c.l.b16 %v3324
      %v3333 = vunpack.c.l.b16 %v3325
      %v3334 = vunpack.c.l.b16 %v3326
      %v3335 = vunpack.c.l.b16 %v3327
      %v3336 = vpack.c.b16 %v3333, %v3332
      %v3337 = vpack.c.b16 %v3335, %v3334
      %v3341 = vsel %vm1249, %v3321, 0
      %v3344 = vsel %vm1249, %v3322, 0
      %3346 = vmatprep.subr.bf16.mxu0 0
      %3347 = vmatpush1.bf16.msra.mxu0 %v3336
      %3348 = vmatprep.subr.bf16.mxu0 0
      %3349 = vmatpush1.bf16.msra.mxu0 %v3337
      %3350 = vmatprep.subr.bf16.mxu0 0
      %3351 = vmatpush1.bf16.msra.mxu0 0
      %3352 = vmatprep.subr.bf16.mxu0 0
      %3353 = vmatpush1.bf16.msra.mxu0 0
      %3354 = vmatprep.subr.bf16.mxu0 0
      %3355 = vmatpush1.bf16.msra.mxu0 0
      %3356 = vmatprep.subr.bf16.mxu0 0
      %3357 = vmatpush1.bf16.msra.mxu0 0
      %3358 = vmatprep.subr.bf16.mxu0 0
      %3359 = vmatpush1.bf16.msra.mxu0 0
      %3360 = vmatprep.subr.bf16.mxu0 0
      %3361 = vmatpush1.bf16.msra.mxu0 0
      %3362 = vmatprep.subr.bf16.mxu0 0
      %3363 = vmatpush1.bf16.msra.mxu0 0
      %3364 = vmatprep.subr.bf16.mxu0 0
      %3365 = vmatpush1.bf16.msra.mxu0 0
      %3366 = vmatprep.subr.bf16.mxu0 0
      %3367 = vmatpush1.bf16.msra.mxu0 0
      %3368 = vmatprep.subr.bf16.mxu0 0
      %3369 = vmatpush1.bf16.msra.mxu0 0
      %3370 = vmatprep.subr.bf16.mxu0 0
      %3371 = vmatpush1.bf16.msra.mxu0 0
      %3372 = vmatprep.subr.bf16.mxu0 0
      %3373 = vmatpush1.bf16.msra.mxu0 0
      %3374 = vmatprep.subr.bf16.mxu0 0
      %3375 = vmatpush1.bf16.msra.mxu0 0
      %3376 = vmatprep.subr.bf16.mxu0 0
      %3377 = vmatpush1.bf16.msra.mxu0 0
      %3378 = vmatprep.mubr.bf16.mxu0 0
      %3379 = vmatmul.mubr.bf16.gmra.mrb[0].mxu0 %v3341
      %v3380 = vpop.f32.mrb[0].mxu0
      %v3381 = vadd.f32 0.0, %v3380
      %v3382 = vpop.f32.mrb[0].mxu0
      %v3383 = vpop.f32.mrb[0].mxu0
      %v3384 = vadd.f32 0.0, %v3383
      %v3385 = vpop.f32.mrb[0].mxu0
      %3386 = vmatprep.mubr.bf16.mxu0 0
      %3387 = vmatmul.mubr.bf16.gmra.mrb[0].mxu0 %v3344
      %v3388 = vpop.f32.mrb[0].mxu0
      %v3389 = vadd.f32 0.0, %v3388
      %v3390 = vpop.f32.mrb[0].mxu0
      %v3391 = vpop.f32.mrb[0].mxu0
      %v3392 = vadd.f32 0.0, %v3391
      %v3393 = vpop.f32.mrb[0].mxu0
      %3394 = vdwg.mxu0
      %v3395 = vadd.f32 %v2763, %v3381
      %v3396 = vadd.f32 %v2764, %v3384
      %v3397 = vadd.f32 %v2765, %v3389
      %v3398 = vadd.f32 %v2766, %v3392
      %v3399 = vadd.f32 %v811, %v3395
      %v3400 = vadd.f32 %v812, %v3396
      %v3401 = vadd.f32 %v813, %v3397
      %v3402 = vadd.f32 %v814, %v3398
      %v3403 = vld [vmem:[%s656] sm:$0x1]
      %v3405 = vlaneseq
      %v3406 = vshrl.u32 %v3405, 7
      %v3407 = vsub.s32 0, %v3406
      %v3408 = vrot.slane %v3403, %v3407
      %v3410 = vadd.f32 %v3399, %v3408
      %v3411 = vadd.f32 %v3400, %v3408
      %v3412 = vadd.f32 %v3401, %v3408
      %v3413 = vadd.f32 %v3402, %v3408
      %3414 = vadd.xlane.f32.xlu0 %v3410
      %v3415 = vpop.xlane.xlu0 %3414
      %3416 = vadd.xlane.f32.xlu0 %v3411
      %v3417 = vpop.xlane.xlu0 %3416
      %3418 = vadd.xlane.f32.xlu0 %v3412
      %v3419 = vpop.xlane.xlu0 %3418
      %3420 = vadd.xlane.f32.xlu0 %v3413
      %v3421 = vpop.xlane.xlu0 %3420
      %v3422 = vmul.f32 %v3415, %v828
      %v3423 = vmul.f32 %v3417, %v828
      %v3424 = vmul.f32 %v3419, %v828
      %v3425 = vmul.f32 %v3421, %v828
      %v3426 = vsub.f32 %v3410, %v3422
      %v3427 = vsub.f32 %v3411, %v3423
      %v3428 = vsub.f32 %v3412, %v3424
      %v3429 = vsub.f32 %v3413, %v3425
      %v3430 = vmul.f32 %v3426, %v3426
      %v3431 = vmul.f32 %v3427, %v3427
      %v3432 = vmul.f32 %v3428, %v3428
      %v3433 = vmul.f32 %v3429, %v3429
      %3434 = vadd.xlane.f32.xlu0 %v3430
      %v3435 = vpop.xlane.xlu0 %3434
      %3436 = vadd.xlane.f32.xlu0 %v3431
      %v3437 = vpop.xlane.xlu0 %3436
      %3438 = vadd.xlane.f32.xlu0 %v3432
      %v3439 = vpop.xlane.xlu0 %3438
      %3440 = vadd.xlane.f32.xlu0 %v3433
      %v3441 = vpop.xlane.xlu0 %3440
      %v3442 = vmul.f32 %v3435, %v828
      %v3443 = vmul.f32 %v3437, %v828
      %v3444 = vmul.f32 %v3439, %v828
      %v3445 = vmul.f32 %v3441, %v828
      %v3446 = vadd.f32 %v3442, 1e-12
      %v3447 = vadd.f32 %v3443, 1e-12
      %v3448 = vadd.f32 %v3444, 1e-12
      %v3449 = vadd.f32 %v3445, 1e-12
      %v3450 = vrsqrt.pop %v3446
      %v3451 = vrsqrt.pop %v3447
      %v3452 = vrsqrt.pop %v3448
      %v3453 = vrsqrt.pop %v3449
      %v3454 = vmul.f32 %v3426, %v3450
      %v3455 = vmul.f32 %v3427, %v3451
      %v3456 = vmul.f32 %v3428, %v3452
      %v3457 = vmul.f32 %v3429, %v3453
      %v3458 = vlaneseq
      %v3459 = vshrl.u32 %v3458, 7
      %v3460 = vsub.s32 2, %v3459
      %v3461 = vrot.slane %v819, %v3460
      %v3462 = vmul.f32 %v3454, %v3461
      %v3463 = vmul.f32 %v3455, %v3461
      %v3464 = vmul.f32 %v3456, %v3461
      %v3465 = vmul.f32 %v3457, %v3461
      %v3466 = vlaneseq
      %v3467 = vshrl.u32 %v3466, 7
      %v3468 = vsub.s32 3, %v3467
      %v3469 = vrot.slane %v819, %v3468
      %v3470 = vadd.f32 %v3462, %v3469
      %v3471 = vadd.f32 %v3463, %v3469
      %v3472 = vadd.f32 %v3464, %v3469
      %v3473 = vadd.f32 %v3465, %v3469
      %v3474 = vpack.c.bf16 %v3471, %v3470
      %v3475 = vpack.c.bf16 %v3473, %v3472
      %v3476 = vld [vmem:[%s661] sm:$0xff]
      %v3477 = vld [vmem:[%s661 + $0x8] sm:$0xff]
      %v3478 = vld [vmem:[%s661 + $0x10] sm:$0xff]
      %v3479 = vld [vmem:[%s661 + $0x18] sm:$0xff]
      %v3480 = vld [vmem:[%s661 + $0x20] sm:$0xff]
      %v3481 = vld [vmem:[%s661 + $0x28] sm:$0xff]
      %v3482 = vld [vmem:[%s661 + $0x30] sm:$0xff]
      %v3483 = vld [vmem:[%s661 + $0x38] sm:$0xff]
      %v3484 = vld [vmem:[%s661 + $0x40] sm:$0xff]
      %v3485 = vld [vmem:[%s661 + $0x48] sm:$0xff]
      %v3486 = vld [vmem:[%s661 + $0x50] sm:$0xff]
      %v3487 = vld [vmem:[%s661 + $0x58] sm:$0xff]
      %v3488 = vld [vmem:[%s661 + $0x60] sm:$0xff]
      %v3489 = vld [vmem:[%s661 + $0x68] sm:$0xff]
      %v3490 = vld [vmem:[%s661 + $0x70] sm:$0xff]
      %v3491 = vld [vmem:[%s661 + $0x78] sm:$0xff]
      %v3492 = vld [vmem:[%s661 + $0x80] sm:$0xff]
      %v3493 = vld [vmem:[%s661 + $0x88] sm:$0xff]
      %v3494 = vld [vmem:[%s661 + $0x90] sm:$0xff]
      %v3495 = vld [vmem:[%s661 + $0x98] sm:$0xff]
      %v3496 = vld [vmem:[%s661 + $0xa0] sm:$0xff]
      %v3497 = vld [vmem:[%s661 + $0xa8] sm:$0xff]
      %v3498 = vld [vmem:[%s661 + $0xb0] sm:$0xff]
      %v3499 = vld [vmem:[%s661 + $0xb8] sm:$0xff]
      %v3500 = vld [vmem:[%s661 + $0xc0] sm:$0xff]
      %v3501 = vld [vmem:[%s661 + $0xc8] sm:$0xff]
      %v3502 = vld [vmem:[%s661 + $0xd0] sm:$0xff]
      %v3503 = vld [vmem:[%s661 + $0xd8] sm:$0xff]
      %v3504 = vld [vmem:[%s661 + $0xe0] sm:$0xff]
      %v3505 = vld [vmem:[%s661 + $0xe8] sm:$0xff]
      %v3506 = vld [vmem:[%s661 + $0xf0] sm:$0xff]
      %v3507 = vld [vmem:[%s661 + $0xf8] sm:$0xff]
      %v3508 = vld [vmem:[%s665] sm:$0xf]
      %v3510 = vlaneseq
      %v3511 = vshrl.u32 %v3510, 7
      %v3512 = vsub.s32 0, %v3511
      %v3513 = vrot.slane %v3508, %v3512
      %v3514 = vlaneseq
      %v3515 = vshrl.u32 %v3514, 7
      %v3516 = vsub.s32 1, %v3515
      %v3517 = vrot.slane %v3508, %v3516
      %v3518 = vlaneseq
      %v3519 = vshrl.u32 %v3518, 7
      %v3520 = vsub.s32 2, %v3519
      %v3521 = vrot.slane %v3508, %v3520
      %v3522 = vlaneseq
      %v3523 = vshrl.u32 %v3522, 7
      %v3524 = vsub.s32 3, %v3523
      %v3525 = vrot.slane %v3508, %v3524
      %v3562 = vunpack.c.l.b16 %v3476
      %v3563 = vunpack.c.h.b16 %v3476
      %v3564 = vunpack.c.l.b16 %v3477
      %v3565 = vunpack.c.h.b16 %v3477
      %v3566 = vunpack.c.l.b16 %v3478
      %v3567 = vunpack.c.h.b16 %v3478
      %v3568 = vunpack.c.l.b16 %v3479
      %v3569 = vunpack.c.h.b16 %v3479
      %v3570 = vunpack.c.l.b16 %v3480
      %v3571 = vunpack.c.h.b16 %v3480
      %v3572 = vunpack.c.l.b16 %v3481
      %v3573 = vunpack.c.h.b16 %v3481
      %v3574 = vunpack.c.l.b16 %v3482
      %v3575 = vunpack.c.h.b16 %v3482
      %v3576 = vunpack.c.l.b16 %v3483
      %v3577 = vunpack.c.h.b16 %v3483
      %v3578 = vunpack.c.l.b16 %v3484
      %v3579 = vunpack.c.h.b16 %v3484
      %v3580 = vunpack.c.l.b16 %v3485
      %v3581 = vunpack.c.h.b16 %v3485
      %v3582 = vunpack.c.l.b16 %v3486
      %v3583 = vunpack.c.h.b16 %v3486
      %v3584 = vunpack.c.l.b16 %v3487
      %v3585 = vunpack.c.h.b16 %v3487
      %v3586 = vunpack.c.l.b16 %v3488
      %v3587 = vunpack.c.h.b16 %v3488
      %v3588 = vunpack.c.l.b16 %v3489
      %v3589 = vunpack.c.h.b16 %v3489
      %v3590 = vunpack.c.l.b16 %v3490
      %v3591 = vunpack.c.h.b16 %v3490
      %v3592 = vunpack.c.l.b16 %v3491
      %v3593 = vunpack.c.h.b16 %v3491
      %v3594 = vunpack.c.l.b16 %v3492
      %v3595 = vunpack.c.h.b16 %v3492
      %v3596 = vunpack.c.l.b16 %v3493
      %v3597 = vunpack.c.h.b16 %v3493
      %v3598 = vunpack.c.l.b16 %v3494
      %v3599 = vunpack.c.h.b16 %v3494
      %v3600 = vunpack.c.l.b16 %v3495
      %v3601 = vunpack.c.h.b16 %v3495
      %v3602 = vunpack.c.l.b16 %v3496
      %v3603 = vunpack.c.h.b16 %v3496
      %v3604 = vunpack.c.l.b16 %v3497
      %v3605 = vunpack.c.h.b16 %v3497
      %v3606 = vunpack.c.l.b16 %v3498
      %v3607 = vunpack.c.h.b16 %v3498
      %v3608 = vunpack.c.l.b16 %v3499
      %v3609 = vunpack.c.h.b16 %v3499
      %v3610 = vunpack.c.l.b16 %v3500
      %v3611 = vunpack.c.h.b16 %v3500
      %v3612 = vunpack.c.l.b16 %v3501
      %v3613 = vunpack.c.h.b16 %v3501
      %v3614 = vunpack.c.l.b16 %v3502
      %v3615 = vunpack.c.h.b16 %v3502
      %v3616 = vunpack.c.l.b16 %v3503
      %v3617 = vunpack.c.h.b16 %v3503
      %v3618 = vunpack.c.l.b16 %v3504
      %v3619 = vunpack.c.h.b16 %v3504
      %v3620 = vunpack.c.l.b16 %v3505
      %v3621 = vunpack.c.h.b16 %v3505
      %v3622 = vunpack.c.l.b16 %v3506
      %v3623 = vunpack.c.h.b16 %v3506
      %v3624 = vunpack.c.l.b16 %v3507
      %v3625 = vunpack.c.h.b16 %v3507
      %v3626 = vpack.c.b16 %v3566, %v3562
      %v3627 = vpack.c.b16 %v3567, %v3563
      %v3628 = vpack.c.b16 %v3568, %v3564
      %v3629 = vpack.c.b16 %v3569, %v3565
      %v3630 = vpack.c.b16 %v3574, %v3570
      %v3631 = vpack.c.b16 %v3575, %v3571
      %v3632 = vpack.c.b16 %v3576, %v3572
      %v3633 = vpack.c.b16 %v3577, %v3573
      %v3634 = vpack.c.b16 %v3582, %v3578
      %v3635 = vpack.c.b16 %v3583, %v3579
      %v3636 = vpack.c.b16 %v3584, %v3580
      %v3637 = vpack.c.b16 %v3585, %v3581
      %v3638 = vpack.c.b16 %v3590, %v3586
      %v3639 = vpack.c.b16 %v3591, %v3587
      %v3640 = vpack.c.b16 %v3592, %v3588
      %v3641 = vpack.c.b16 %v3593, %v3589
      %v3642 = vpack.c.b16 %v3598, %v3594
      %v3643 = vpack.c.b16 %v3599, %v3595
      %v3644 = vpack.c.b16 %v3600, %v3596
      %v3645 = vpack.c.b16 %v3601, %v3597
      %v3646 = vpack.c.b16 %v3606, %v3602
      %v3647 = vpack.c.b16 %v3607, %v3603
      %v3648 = vpack.c.b16 %v3608, %v3604
      %v3649 = vpack.c.b16 %v3609, %v3605
      %v3650 = vpack.c.b16 %v3614, %v3610
      %v3651 = vpack.c.b16 %v3615, %v3611
      %v3652 = vpack.c.b16 %v3616, %v3612
      %v3653 = vpack.c.b16 %v3617, %v3613
      %v3654 = vpack.c.b16 %v3622, %v3618
      %v3655 = vpack.c.b16 %v3623, %v3619
      %v3656 = vpack.c.b16 %v3624, %v3620
      %v3657 = vpack.c.b16 %v3625, %v3621
      %3690 = vmatprep.subr.bf16.mxu0 %v3627
      %3691 = vmatpush1.bf16.msra.mxu0 %v3626
      %3692 = vmatprep.subr.bf16.mxu0 %v3631
      %3693 = vmatpush1.bf16.msra.mxu0 %v3630
      %3694 = vmatprep.subr.bf16.mxu0 %v3635
      %3695 = vmatpush1.bf16.msra.mxu0 %v3634
      %3696 = vmatprep.subr.bf16.mxu0 %v3639
      %3697 = vmatpush1.bf16.msra.mxu0 %v3638
      %3698 = vmatprep.subr.bf16.mxu0 %v3643
      %3699 = vmatpush1.bf16.msra.mxu0 %v3642
      %3700 = vmatprep.subr.bf16.mxu0 %v3647
      %3701 = vmatpush1.bf16.msra.mxu0 %v3646
      %3702 = vmatprep.subr.bf16.mxu0 %v3651
      %3703 = vmatpush1.bf16.msra.mxu0 %v3650
      %3704 = vmatprep.subr.bf16.mxu0 %v3655
      %3705 = vmatpush1.bf16.msra.mxu0 %v3654
      %3706 = vmatprep.subr.bf16.mxu0 0
      %3707 = vmatpush1.bf16.msra.mxu0 0
      %3708 = vmatprep.subr.bf16.mxu0 0
      %3709 = vmatpush1.bf16.msra.mxu0 0
      %3710 = vmatprep.subr.bf16.mxu0 0
      %3711 = vmatpush1.bf16.msra.mxu0 0
      %3712 = vmatprep.subr.bf16.mxu0 0
      %3713 = vmatpush1.bf16.msra.mxu0 0
      %3714 = vmatprep.subr.bf16.mxu0 0
      %3715 = vmatpush1.bf16.msra.mxu0 0
      %3716 = vmatprep.subr.bf16.mxu0 0
      %3717 = vmatpush1.bf16.msra.mxu0 0
      %3718 = vmatprep.subr.bf16.mxu0 0
      %3719 = vmatpush1.bf16.msra.mxu0 0
      %3720 = vmatprep.subr.bf16.mxu0 0
      %3721 = vmatpush1.bf16.msra.mxu0 0
      %3722 = vmatprep.mubr.bf16.mxu0 0
      %3723 = vmatmul.mubr.bf16.gmra.mrb[0].mxu0 %v3474
      %v3724 = vpop.f32.mrb[0].mxu0
      %v3725 = vadd.f32 %v3513, %v3724
      %v3726 = vpop.f32.mrb[0].mxu0
      %v3727 = vadd.f32 %v3517, %v3726
      %v3728 = vpop.f32.mrb[0].mxu0
      %v3729 = vadd.f32 %v3513, %v3728
      %v3730 = vpop.f32.mrb[0].mxu0
      %v3731 = vadd.f32 %v3517, %v3730
      %3732 = vmatprep.mubr.bf16.mxu0 0
      %3733 = vmatmul.mubr.bf16.gmra.mrb[0].mxu0 %v3475
      %v3734 = vpop.f32.mrb[0].mxu0
      %v3735 = vadd.f32 %v3513, %v3734
      %v3736 = vpop.f32.mrb[0].mxu0
      %v3737 = vadd.f32 %v3517, %v3736
      %v3738 = vpop.f32.mrb[0].mxu0
      %v3739 = vadd.f32 %v3513, %v3738
      %v3740 = vpop.f32.mrb[0].mxu0
      %v3741 = vadd.f32 %v3517, %v3740
      %3742 = vdwg.mxu0
      %3743 = vmatprep.subr.bf16.mxu0 %v3629
      %3744 = vmatpush1.bf16.msra.mxu0 %v3628
      %3745 = vmatprep.subr.bf16.mxu0 %v3633
      %3746 = vmatpush1.bf16.msra.mxu0 %v3632
      %3747 = vmatprep.subr.bf16.mxu0 %v3637
      %3748 = vmatpush1.bf16.msra.mxu0 %v3636
      %3749 = vmatprep.subr.bf16.mxu0 %v3641
      %3750 = vmatpush1.bf16.msra.mxu0 %v3640
      %3751 = vmatprep.subr.bf16.mxu0 %v3645
      %3752 = vmatpush1.bf16.msra.mxu0 %v3644
      %3753 = vmatprep.subr.bf16.mxu0 %v3649
      %3754 = vmatpush1.bf16.msra.mxu0 %v3648
      %3755 = vmatprep.subr.bf16.mxu0 %v3653
      %3756 = vmatpush1.bf16.msra.mxu0 %v3652
      %3757 = vmatprep.subr.bf16.mxu0 %v3657
      %3758 = vmatpush1.bf16.msra.mxu0 %v3656
      %3759 = vmatprep.subr.bf16.mxu0 0
      %3760 = vmatpush1.bf16.msra.mxu0 0
      %3761 = vmatprep.subr.bf16.mxu0 0
      %3762 = vmatpush1.bf16.msra.mxu0 0
      %3763 = vmatprep.subr.bf16.mxu0 0
      %3764 = vmatpush1.bf16.msra.mxu0 0
      %3765 = vmatprep.subr.bf16.mxu0 0
      %3766 = vmatpush1.bf16.msra.mxu0 0
      %3767 = vmatprep.subr.bf16.mxu0 0
      %3768 = vmatpush1.bf16.msra.mxu0 0
      %3769 = vmatprep.subr.bf16.mxu0 0
      %3770 = vmatpush1.bf16.msra.mxu0 0
      %3771 = vmatprep.subr.bf16.mxu0 0
      %3772 = vmatpush1.bf16.msra.mxu0 0
      %3773 = vmatprep.subr.bf16.mxu0 0
      %3774 = vmatpush1.bf16.msra.mxu0 0
      %3775 = vmatprep.mubr.bf16.mxu0 0
      %3776 = vmatmul.mubr.bf16.gmra.mrb[0].mxu0 %v3474
      %v3777 = vpop.f32.mrb[0].mxu0
      %v3778 = vadd.f32 %v3521, %v3777
      %v3779 = vpop.f32.mrb[0].mxu0
      %v3780 = vadd.f32 %v3525, %v3779
      %v3781 = vpop.f32.mrb[0].mxu0
      %v3782 = vadd.f32 %v3521, %v3781
      %v3783 = vpop.f32.mrb[0].mxu0
      %v3784 = vadd.f32 %v3525, %v3783
      %3785 = vmatprep.mubr.bf16.mxu0 0
      %3786 = vmatmul.mubr.bf16.gmra.mrb[0].mxu0 %v3475
      %v3787 = vpop.f32.mrb[0].mxu0
      %v3788 = vadd.f32 %v3521, %v3787
      %v3789 = vpop.f32.mrb[0].mxu0
      %v3790 = vadd.f32 %v3525, %v3789
      %v3791 = vpop.f32.mrb[0].mxu0
      %v3792 = vadd.f32 %v3521, %v3791
      %v3793 = vpop.f32.mrb[0].mxu0
      %v3794 = vadd.f32 %v3525, %v3793
      %3795 = vdwg.mxu0
      %v3796 = vmul.f32 %v3725, 0.5
      %v3797 = vmul.f32 %v3727, 0.5
      %v3798 = vmul.f32 %v3778, 0.5
      %v3799 = vmul.f32 %v3780, 0.5
      %v3800 = vmul.f32 %v3729, 0.5
      %v3801 = vmul.f32 %v3731, 0.5
      %v3802 = vmul.f32 %v3782, 0.5
      %v3803 = vmul.f32 %v3784, 0.5
      %v3804 = vmul.f32 %v3735, 0.5
      %v3805 = vmul.f32 %v3737, 0.5
      %v3806 = vmul.f32 %v3788, 0.5
      %v3807 = vmul.f32 %v3790, 0.5
      %v3808 = vmul.f32 %v3739, 0.5
      %v3809 = vmul.f32 %v3741, 0.5
      %v3810 = vmul.f32 %v3792, 0.5
      %v3811 = vmul.f32 %v3794, 0.5
      %v3812 = vmul.f32 %v3725, 0.70710677
      %v3813 = vmul.f32 %v3727, 0.70710677
      %v3814 = vmul.f32 %v3778, 0.70710677
      %v3815 = vmul.f32 %v3780, 0.70710677
      %v3816 = vmul.f32 %v3729, 0.70710677
      %v3817 = vmul.f32 %v3731, 0.70710677
      %v3818 = vmul.f32 %v3782, 0.70710677
      %v3819 = vmul.f32 %v3784, 0.70710677
      %v3820 = vmul.f32 %v3735, 0.70710677
      %v3821 = vmul.f32 %v3737, 0.70710677
      %v3822 = vmul.f32 %v3788, 0.70710677
      %v3823 = vmul.f32 %v3790, 0.70710677
      %v3824 = vmul.f32 %v3739, 0.70710677
      %v3825 = vmul.f32 %v3741, 0.70710677
      %v3826 = vmul.f32 %v3792, 0.70710677
      %v3827 = vmul.f32 %v3794, 0.70710677
      %vm3828 = vcmp.ge.f32.partialorder %v3812, 0.0
      %vm3829 = vcmp.ge.f32.partialorder %v3813, 0.0
      %vm3830 = vcmp.ge.f32.partialorder %v3814, 0.0
      %vm3831 = vcmp.ge.f32.partialorder %v3815, 0.0
      %vm3832 = vcmp.ge.f32.partialorder %v3816, 0.0
      %vm3833 = vcmp.ge.f32.partialorder %v3817, 0.0
      %vm3834 = vcmp.ge.f32.partialorder %v3818, 0.0
      %vm3835 = vcmp.ge.f32.partialorder %v3819, 0.0
      %vm3836 = vcmp.ge.f32.partialorder %v3820, 0.0
      %vm3837 = vcmp.ge.f32.partialorder %v3821, 0.0
      %vm3838 = vcmp.ge.f32.partialorder %v3822, 0.0
      %vm3839 = vcmp.ge.f32.partialorder %v3823, 0.0
      %vm3840 = vcmp.ge.f32.partialorder %v3824, 0.0
      %vm3841 = vcmp.ge.f32.partialorder %v3825, 0.0
      %vm3842 = vcmp.ge.f32.partialorder %v3826, 0.0
      %vm3843 = vcmp.ge.f32.partialorder %v3827, 0.0
      %v3844 = vsel %vm3828, 1.0, -1.0
      %v3845 = vsel %vm3829, 1.0, -1.0
      %v3846 = vsel %vm3830, 1.0, -1.0
      %v3847 = vsel %vm3831, 1.0, -1.0
      %v3848 = vsel %vm3832, 1.0, -1.0
      %v3849 = vsel %vm3833, 1.0, -1.0
      %v3850 = vsel %vm3834, 1.0, -1.0
      %v3851 = vsel %vm3835, 1.0, -1.0
      %v3852 = vsel %vm3836, 1.0, -1.0
      %v3853 = vsel %vm3837, 1.0, -1.0
      %v3854 = vsel %vm3838, 1.0, -1.0
      %v3855 = vsel %vm3839, 1.0, -1.0
      %v3856 = vsel %vm3840, 1.0, -1.0
      %v3857 = vsel %vm3841, 1.0, -1.0
      %v3858 = vsel %vm3842, 1.0, -1.0
      %v3859 = vsel %vm3843, 1.0, -1.0
      %v3860 = vmul.f32 %v3812, %v3844
      %v3861 = vmul.f32 %v3813, %v3845
      %v3862 = vmul.f32 %v3814, %v3846
      %v3863 = vmul.f32 %v3815, %v3847
      %v3864 = vmul.f32 %v3816, %v3848
      %v3865 = vmul.f32 %v3817, %v3849
      %v3866 = vmul.f32 %v3818, %v3850
      %v3867 = vmul.f32 %v3819, %v3851
      %v3868 = vmul.f32 %v3820, %v3852
      %v3869 = vmul.f32 %v3821, %v3853
      %v3870 = vmul.f32 %v3822, %v3854
      %v3871 = vmul.f32 %v3823, %v3855
      %v3872 = vmul.f32 %v3824, %v3856
      %v3873 = vmul.f32 %v3825, %v3857
      %v3874 = vmul.f32 %v3826, %v3858
      %v3875 = vmul.f32 %v3827, %v3859
      %v3876 = vmul.f32 %v3860, 0.3275911
      %v3877 = vmul.f32 %v3861, 0.3275911
      %v3878 = vmul.f32 %v3862, 0.3275911
      %v3879 = vmul.f32 %v3863, 0.3275911
      %v3880 = vmul.f32 %v3864, 0.3275911
      %v3881 = vmul.f32 %v3865, 0.3275911
      %v3882 = vmul.f32 %v3866, 0.3275911
      %v3883 = vmul.f32 %v3867, 0.3275911
      %v3884 = vmul.f32 %v3868, 0.3275911
      %v3885 = vmul.f32 %v3869, 0.3275911
      %v3886 = vmul.f32 %v3870, 0.3275911
      %v3887 = vmul.f32 %v3871, 0.3275911
      %v3888 = vmul.f32 %v3872, 0.3275911
      %v3889 = vmul.f32 %v3873, 0.3275911
      %v3890 = vmul.f32 %v3874, 0.3275911
      %v3891 = vmul.f32 %v3875, 0.3275911
      %v3892 = vadd.f32 %v3876, 1.0
      %v3893 = vadd.f32 %v3877, 1.0
      %v3894 = vadd.f32 %v3878, 1.0
      %v3895 = vadd.f32 %v3879, 1.0
      %v3896 = vadd.f32 %v3880, 1.0
      %v3897 = vadd.f32 %v3881, 1.0
      %v3898 = vadd.f32 %v3882, 1.0
      %v3899 = vadd.f32 %v3883, 1.0
      %v3900 = vadd.f32 %v3884, 1.0
      %v3901 = vadd.f32 %v3885, 1.0
      %v3902 = vadd.f32 %v3886, 1.0
      %v3903 = vadd.f32 %v3887, 1.0
      %v3904 = vadd.f32 %v3888, 1.0
      %v3905 = vadd.f32 %v3889, 1.0
      %v3906 = vadd.f32 %v3890, 1.0
      %v3907 = vadd.f32 %v3891, 1.0
      %v3908 = vrcp.pop %v3892
      %v3909 = vmul.f32 1.0, %v3908
      %v3910 = vrcp.pop %v3893
      %v3911 = vmul.f32 1.0, %v3910
      %v3912 = vrcp.pop %v3894
      %v3913 = vmul.f32 1.0, %v3912
      %v3914 = vrcp.pop %v3895
      %v3915 = vmul.f32 1.0, %v3914
      %v3916 = vrcp.pop %v3896
      %v3917 = vmul.f32 1.0, %v3916
      %v3918 = vrcp.pop %v3897
      %v3919 = vmul.f32 1.0, %v3918
      %v3920 = vrcp.pop %v3898
      %v3921 = vmul.f32 1.0, %v3920
      %v3922 = vrcp.pop %v3899
      %v3923 = vmul.f32 1.0, %v3922
      %v3924 = vrcp.pop %v3900
      %v3925 = vmul.f32 1.0, %v3924
      %v3926 = vrcp.pop %v3901
      %v3927 = vmul.f32 1.0, %v3926
      %v3928 = vrcp.pop %v3902
      %v3929 = vmul.f32 1.0, %v3928
      %v3930 = vrcp.pop %v3903
      %v3931 = vmul.f32 1.0, %v3930
      %v3932 = vrcp.pop %v3904
      %v3933 = vmul.f32 1.0, %v3932
      %v3934 = vrcp.pop %v3905
      %v3935 = vmul.f32 1.0, %v3934
      %v3936 = vrcp.pop %v3906
      %v3937 = vmul.f32 1.0, %v3936
      %v3938 = vrcp.pop %v3907
      %v3939 = vmul.f32 1.0, %v3938
      %v3940 = vmul.f32 %v3909, 1.0614054
      %v3941 = vmul.f32 %v3911, 1.0614054
      %v3942 = vmul.f32 %v3913, 1.0614054
      %v3943 = vmul.f32 %v3915, 1.0614054
      %v3944 = vmul.f32 %v3917, 1.0614054
      %v3945 = vmul.f32 %v3919, 1.0614054
      %v3946 = vmul.f32 %v3921, 1.0614054
      %v3947 = vmul.f32 %v3923, 1.0614054
      %v3948 = vmul.f32 %v3925, 1.0614054
      %v3949 = vmul.f32 %v3927, 1.0614054
      %v3950 = vmul.f32 %v3929, 1.0614054
      %v3951 = vmul.f32 %v3931, 1.0614054
      %v3952 = vmul.f32 %v3933, 1.0614054
      %v3953 = vmul.f32 %v3935, 1.0614054
      %v3954 = vmul.f32 %v3937, 1.0614054
      %v3955 = vmul.f32 %v3939, 1.0614054
      %v3956 = vsub.f32 %v3940, 1.4531521
      %v3957 = vsub.f32 %v3941, 1.4531521
      %v3958 = vsub.f32 %v3942, 1.4531521
      %v3959 = vsub.f32 %v3943, 1.4531521
      %v3960 = vsub.f32 %v3944, 1.4531521
      %v3961 = vsub.f32 %v3945, 1.4531521
      %v3962 = vsub.f32 %v3946, 1.4531521
      %v3963 = vsub.f32 %v3947, 1.4531521
      %v3964 = vsub.f32 %v3948, 1.4531521
      %v3965 = vsub.f32 %v3949, 1.4531521
      %v3966 = vsub.f32 %v3950, 1.4531521
      %v3967 = vsub.f32 %v3951, 1.4531521
      %v3968 = vsub.f32 %v3952, 1.4531521
      %v3969 = vsub.f32 %v3953, 1.4531521
      %v3970 = vsub.f32 %v3954, 1.4531521
      %v3971 = vsub.f32 %v3955, 1.4531521
      %v3972 = vmul.f32 %v3956, %v3909
      %v3973 = vmul.f32 %v3957, %v3911
      %v3974 = vmul.f32 %v3958, %v3913
      %v3975 = vmul.f32 %v3959, %v3915
      %v3976 = vmul.f32 %v3960, %v3917
      %v3977 = vmul.f32 %v3961, %v3919
      %v3978 = vmul.f32 %v3962, %v3921
      %v3979 = vmul.f32 %v3963, %v3923
      %v3980 = vmul.f32 %v3964, %v3925
      %v3981 = vmul.f32 %v3965, %v3927
      %v3982 = vmul.f32 %v3966, %v3929
      %v3983 = vmul.f32 %v3967, %v3931
      %v3984 = vmul.f32 %v3968, %v3933
      %v3985 = vmul.f32 %v3969, %v3935
      %v3986 = vmul.f32 %v3970, %v3937
      %v3987 = vmul.f32 %v3971, %v3939
      %v3988 = vadd.f32 %v3972, 1.4214138
      %v3989 = vadd.f32 %v3973, 1.4214138
      %v3990 = vadd.f32 %v3974, 1.4214138
      %v3991 = vadd.f32 %v3975, 1.4214138
      %v3992 = vadd.f32 %v3976, 1.4214138
      %v3993 = vadd.f32 %v3977, 1.4214138
      %v3994 = vadd.f32 %v3978, 1.4214138
      %v3995 = vadd.f32 %v3979, 1.4214138
      %v3996 = vadd.f32 %v3980, 1.4214138
      %v3997 = vadd.f32 %v3981, 1.4214138
      %v3998 = vadd.f32 %v3982, 1.4214138
      %v3999 = vadd.f32 %v3983, 1.4214138
      %v4000 = vadd.f32 %v3984, 1.4214138
      %v4001 = vadd.f32 %v3985, 1.4214138
      %v4002 = vadd.f32 %v3986, 1.4214138
      %v4003 = vadd.f32 %v3987, 1.4214138
      %v4004 = vmul.f32 %v3988, %v3909
      %v4005 = vmul.f32 %v3989, %v3911
      %v4006 = vmul.f32 %v3990, %v3913
      %v4007 = vmul.f32 %v3991, %v3915
      %v4008 = vmul.f32 %v3992, %v3917
      %v4009 = vmul.f32 %v3993, %v3919
      %v4010 = vmul.f32 %v3994, %v3921
      %v4011 = vmul.f32 %v3995, %v3923
      %v4012 = vmul.f32 %v3996, %v3925
      %v4013 = vmul.f32 %v3997, %v3927
      %v4014 = vmul.f32 %v3998, %v3929
      %v4015 = vmul.f32 %v3999, %v3931
      %v4016 = vmul.f32 %v4000, %v3933
      %v4017 = vmul.f32 %v4001, %v3935
      %v4018 = vmul.f32 %v4002, %v3937
      %v4019 = vmul.f32 %v4003, %v3939
      %v4020 = vsub.f32 %v4004, 0.28449672
      %v4021 = vsub.f32 %v4005, 0.28449672
      %v4022 = vsub.f32 %v4006, 0.28449672
      %v4023 = vsub.f32 %v4007, 0.28449672
      %v4024 = vsub.f32 %v4008, 0.28449672
      %v4025 = vsub.f32 %v4009, 0.28449672
      %v4026 = vsub.f32 %v4010, 0.28449672
      %v4027 = vsub.f32 %v4011, 0.28449672
      %v4028 = vsub.f32 %v4012, 0.28449672
      %v4029 = vsub.f32 %v4013, 0.28449672
      %v4030 = vsub.f32 %v4014, 0.28449672
      %v4031 = vsub.f32 %v4015, 0.28449672
      %v4032 = vsub.f32 %v4016, 0.28449672
      %v4033 = vsub.f32 %v4017, 0.28449672
      %v4034 = vsub.f32 %v4018, 0.28449672
      %v4035 = vsub.f32 %v4019, 0.28449672
      %v4036 = vmul.f32 %v4020, %v3909
      %v4037 = vmul.f32 %v4021, %v3911
      %v4038 = vmul.f32 %v4022, %v3913
      %v4039 = vmul.f32 %v4023, %v3915
      %v4040 = vmul.f32 %v4024, %v3917
      %v4041 = vmul.f32 %v4025, %v3919
      %v4042 = vmul.f32 %v4026, %v3921
      %v4043 = vmul.f32 %v4027, %v3923
      %v4044 = vmul.f32 %v4028, %v3925
      %v4045 = vmul.f32 %v4029, %v3927
      %v4046 = vmul.f32 %v4030, %v3929
      %v4047 = vmul.f32 %v4031, %v3931
      %v4048 = vmul.f32 %v4032, %v3933
      %v4049 = vmul.f32 %v4033, %v3935
      %v4050 = vmul.f32 %v4034, %v3937
      %v4051 = vmul.f32 %v4035, %v3939
      %v4052 = vadd.f32 %v4036, 0.2548296
      %v4053 = vadd.f32 %v4037, 0.2548296
      %v4054 = vadd.f32 %v4038, 0.2548296
      %v4055 = vadd.f32 %v4039, 0.2548296
      %v4056 = vadd.f32 %v4040, 0.2548296
      %v4057 = vadd.f32 %v4041, 0.2548296
      %v4058 = vadd.f32 %v4042, 0.2548296
      %v4059 = vadd.f32 %v4043, 0.2548296
      %v4060 = vadd.f32 %v4044, 0.2548296
      %v4061 = vadd.f32 %v4045, 0.2548296
      %v4062 = vadd.f32 %v4046, 0.2548296
      %v4063 = vadd.f32 %v4047, 0.2548296
      %v4064 = vadd.f32 %v4048, 0.2548296
      %v4065 = vadd.f32 %v4049, 0.2548296
      %v4066 = vadd.f32 %v4050, 0.2548296
      %v4067 = vadd.f32 %v4051, 0.2548296
      %v4068 = vmul.f32 %v4052, %v3909
      %v4069 = vmul.f32 %v4053, %v3911
      %v4070 = vmul.f32 %v4054, %v3913
      %v4071 = vmul.f32 %v4055, %v3915
      %v4072 = vmul.f32 %v4056, %v3917
      %v4073 = vmul.f32 %v4057, %v3919
      %v4074 = vmul.f32 %v4058, %v3921
      %v4075 = vmul.f32 %v4059, %v3923
      %v4076 = vmul.f32 %v4060, %v3925
      %v4077 = vmul.f32 %v4061, %v3927
      %v4078 = vmul.f32 %v4062, %v3929
      %v4079 = vmul.f32 %v4063, %v3931
      %v4080 = vmul.f32 %v4064, %v3933
      %v4081 = vmul.f32 %v4065, %v3935
      %v4082 = vmul.f32 %v4066, %v3937
      %v4083 = vmul.f32 %v4067, %v3939
      %v4084 = vsub.f32 0.0, %v3860
      %v4085 = vsub.f32 0.0, %v3861
      %v4086 = vsub.f32 0.0, %v3862
      %v4087 = vsub.f32 0.0, %v3863
      %v4088 = vsub.f32 0.0, %v3864
      %v4089 = vsub.f32 0.0, %v3865
      %v4090 = vsub.f32 0.0, %v3866
      %v4091 = vsub.f32 0.0, %v3867
      %v4092 = vsub.f32 0.0, %v3868
      %v4093 = vsub.f32 0.0, %v3869
      %v4094 = vsub.f32 0.0, %v3870
      %v4095 = vsub.f32 0.0, %v3871
      %v4096 = vsub.f32 0.0, %v3872
      %v4097 = vsub.f32 0.0, %v3873
      %v4098 = vsub.f32 0.0, %v3874
      %v4099 = vsub.f32 0.0, %v3875
      %v4100 = vmul.f32 %v4084, %v3860
      %v4101 = vmul.f32 %v4085, %v3861
      %v4102 = vmul.f32 %v4086, %v3862
      %v4103 = vmul.f32 %v4087, %v3863
      %v4104 = vmul.f32 %v4088, %v3864
      %v4105 = vmul.f32 %v4089, %v3865
      %v4106 = vmul.f32 %v4090, %v3866
      %v4107 = vmul.f32 %v4091, %v3867
      %v4108 = vmul.f32 %v4092, %v3868
      %v4109 = vmul.f32 %v4093, %v3869
      %v4110 = vmul.f32 %v4094, %v3870
      %v4111 = vmul.f32 %v4095, %v3871
      %v4112 = vmul.f32 %v4096, %v3872
      %v4113 = vmul.f32 %v4097, %v3873
      %v4114 = vmul.f32 %v4098, %v3874
      %v4115 = vmul.f32 %v4099, %v3875
      %v4116 = vmul.f32 %v4100, 1.442695
      %v4117 = vpow.pop %v4116
      %v4118 = vmul.f32 %v4101, 1.442695
      %v4119 = vpow.pop %v4118
      %v4120 = vmul.f32 %v4102, 1.442695
      %v4121 = vpow.pop %v4120
      %v4122 = vmul.f32 %v4103, 1.442695
      %v4123 = vpow.pop %v4122
      %v4124 = vmul.f32 %v4104, 1.442695
      %v4125 = vpow.pop %v4124
      %v4126 = vmul.f32 %v4105, 1.442695
      %v4127 = vpow.pop %v4126
      %v4128 = vmul.f32 %v4106, 1.442695
      %v4129 = vpow.pop %v4128
      %v4130 = vmul.f32 %v4107, 1.442695
      %v4131 = vpow.pop %v4130
      %v4132 = vmul.f32 %v4108, 1.442695
      %v4133 = vpow.pop %v4132
      %v4134 = vmul.f32 %v4109, 1.442695
      %v4135 = vpow.pop %v4134
      %v4136 = vmul.f32 %v4110, 1.442695
      %v4137 = vpow.pop %v4136
      %v4138 = vmul.f32 %v4111, 1.442695
      %v4139 = vpow.pop %v4138
      %v4140 = vmul.f32 %v4112, 1.442695
      %v4141 = vpow.pop %v4140
      %v4142 = vmul.f32 %v4113, 1.442695
      %v4143 = vpow.pop %v4142
      %v4144 = vmul.f32 %v4114, 1.442695
      %v4145 = vpow.pop %v4144
      %v4146 = vmul.f32 %v4115, 1.442695
      %v4147 = vpow.pop %v4146
      %v4148 = vmul.f32 %v4068, %v4117
      %v4149 = vmul.f32 %v4069, %v4119
      %v4150 = vmul.f32 %v4070, %v4121
      %v4151 = vmul.f32 %v4071, %v4123
      %v4152 = vmul.f32 %v4072, %v4125
      %v4153 = vmul.f32 %v4073, %v4127
      %v4154 = vmul.f32 %v4074, %v4129
      %v4155 = vmul.f32 %v4075, %v4131
      %v4156 = vmul.f32 %v4076, %v4133
      %v4157 = vmul.f32 %v4077, %v4135
      %v4158 = vmul.f32 %v4078, %v4137
      %v4159 = vmul.f32 %v4079, %v4139
      %v4160 = vmul.f32 %v4080, %v4141
      %v4161 = vmul.f32 %v4081, %v4143
      %v4162 = vmul.f32 %v4082, %v4145
      %v4163 = vmul.f32 %v4083, %v4147
      %v4164 = vsub.f32 1.0, %v4148
      %v4165 = vsub.f32 1.0, %v4149
      %v4166 = vsub.f32 1.0, %v4150
      %v4167 = vsub.f32 1.0, %v4151
      %v4168 = vsub.f32 1.0, %v4152
      %v4169 = vsub.f32 1.0, %v4153
      %v4170 = vsub.f32 1.0, %v4154
      %v4171 = vsub.f32 1.0, %v4155
      %v4172 = vsub.f32 1.0, %v4156
      %v4173 = vsub.f32 1.0, %v4157
      %v4174 = vsub.f32 1.0, %v4158
      %v4175 = vsub.f32 1.0, %v4159
      %v4176 = vsub.f32 1.0, %v4160
      %v4177 = vsub.f32 1.0, %v4161
      %v4178 = vsub.f32 1.0, %v4162
      %v4179 = vsub.f32 1.0, %v4163
      %v4180 = vmul.f32 %v3844, %v4164
      %v4181 = vmul.f32 %v3845, %v4165
      %v4182 = vmul.f32 %v3846, %v4166
      %v4183 = vmul.f32 %v3847, %v4167
      %v4184 = vmul.f32 %v3848, %v4168
      %v4185 = vmul.f32 %v3849, %v4169
      %v4186 = vmul.f32 %v3850, %v4170
      %v4187 = vmul.f32 %v3851, %v4171
      %v4188 = vmul.f32 %v3852, %v4172
      %v4189 = vmul.f32 %v3853, %v4173
      %v4190 = vmul.f32 %v3854, %v4174
      %v4191 = vmul.f32 %v3855, %v4175
      %v4192 = vmul.f32 %v3856, %v4176
      %v4193 = vmul.f32 %v3857, %v4177
      %v4194 = vmul.f32 %v3858, %v4178
      %v4195 = vmul.f32 %v3859, %v4179
      %v4196 = vadd.f32 %v4180, 1.0
      %v4197 = vadd.f32 %v4181, 1.0
      %v4198 = vadd.f32 %v4182, 1.0
      %v4199 = vadd.f32 %v4183, 1.0
      %v4200 = vadd.f32 %v4184, 1.0
      %v4201 = vadd.f32 %v4185, 1.0
      %v4202 = vadd.f32 %v4186, 1.0
      %v4203 = vadd.f32 %v4187, 1.0
      %v4204 = vadd.f32 %v4188, 1.0
      %v4205 = vadd.f32 %v4189, 1.0
      %v4206 = vadd.f32 %v4190, 1.0
      %v4207 = vadd.f32 %v4191, 1.0
      %v4208 = vadd.f32 %v4192, 1.0
      %v4209 = vadd.f32 %v4193, 1.0
      %v4210 = vadd.f32 %v4194, 1.0
      %v4211 = vadd.f32 %v4195, 1.0
      %v4212 = vmul.f32 %v3796, %v4196
      %v4213 = vmul.f32 %v3797, %v4197
      %v4214 = vmul.f32 %v3798, %v4198
      %v4215 = vmul.f32 %v3799, %v4199
      %v4216 = vmul.f32 %v3800, %v4200
      %v4217 = vmul.f32 %v3801, %v4201
      %v4218 = vmul.f32 %v3802, %v4202
      %v4219 = vmul.f32 %v3803, %v4203
      %v4220 = vmul.f32 %v3804, %v4204
      %v4221 = vmul.f32 %v3805, %v4205
      %v4222 = vmul.f32 %v3806, %v4206
      %v4223 = vmul.f32 %v3807, %v4207
      %v4224 = vmul.f32 %v3808, %v4208
      %v4225 = vmul.f32 %v3809, %v4209
      %v4226 = vmul.f32 %v3810, %v4210
      %v4227 = vmul.f32 %v3811, %v4211
      %v4228 = vpack.c.bf16 %v4216, %v4212
      %v4229 = vpack.c.bf16 %v4217, %v4213
      %v4230 = vpack.c.bf16 %v4218, %v4214
      %v4231 = vpack.c.bf16 %v4219, %v4215
      %v4232 = vpack.c.bf16 %v4224, %v4220
      %v4233 = vpack.c.bf16 %v4225, %v4221
      %v4234 = vpack.c.bf16 %v4226, %v4222
      %v4235 = vpack.c.bf16 %v4227, %v4223
      %v4236 = vld [vmem:[%s670] sm:$0xf]
      %v4237 = vld [vmem:[%s670 + $0x4] sm:$0xf]
      %v4238 = vld [vmem:[%s670 + $0x8] sm:$0xf]
      %v4239 = vld [vmem:[%s670 + $0xc] sm:$0xf]
      %v4240 = vld [vmem:[%s670 + $0x10] sm:$0xf]
      %v4241 = vld [vmem:[%s670 + $0x14] sm:$0xf]
      %v4242 = vld [vmem:[%s670 + $0x18] sm:$0xf]
      %v4243 = vld [vmem:[%s670 + $0x1c] sm:$0xf]
      %v4244 = vld [vmem:[%s670 + $0x20] sm:$0xf]
      %v4245 = vld [vmem:[%s670 + $0x24] sm:$0xf]
      %v4246 = vld [vmem:[%s670 + $0x28] sm:$0xf]
      %v4247 = vld [vmem:[%s670 + $0x2c] sm:$0xf]
      %v4248 = vld [vmem:[%s670 + $0x30] sm:$0xf]
      %v4249 = vld [vmem:[%s670 + $0x34] sm:$0xf]
      %v4250 = vld [vmem:[%s670 + $0x38] sm:$0xf]
      %v4251 = vld [vmem:[%s670 + $0x3c] sm:$0xf]
      %v4252 = vld [vmem:[%s670 + $0x40] sm:$0xf]
      %v4253 = vld [vmem:[%s670 + $0x44] sm:$0xf]
      %v4254 = vld [vmem:[%s670 + $0x48] sm:$0xf]
      %v4255 = vld [vmem:[%s670 + $0x4c] sm:$0xf]
      %v4256 = vld [vmem:[%s670 + $0x50] sm:$0xf]
      %v4257 = vld [vmem:[%s670 + $0x54] sm:$0xf]
      %v4258 = vld [vmem:[%s670 + $0x58] sm:$0xf]
      %v4259 = vld [vmem:[%s670 + $0x5c] sm:$0xf]
      %v4260 = vld [vmem:[%s670 + $0x60] sm:$0xf]
      %v4261 = vld [vmem:[%s670 + $0x64] sm:$0xf]
      %v4262 = vld [vmem:[%s670 + $0x68] sm:$0xf]
      %v4263 = vld [vmem:[%s670 + $0x6c] sm:$0xf]
      %v4264 = vld [vmem:[%s670 + $0x70] sm:$0xf]
      %v4265 = vld [vmem:[%s670 + $0x74] sm:$0xf]
      %v4266 = vld [vmem:[%s670 + $0x78] sm:$0xf]
      %v4267 = vld [vmem:[%s670 + $0x7c] sm:$0xf]
      %v4268 = vld [vmem:[%s670 + $0x80] sm:$0xf]
      %v4269 = vld [vmem:[%s670 + $0x84] sm:$0xf]
      %v4270 = vld [vmem:[%s670 + $0x88] sm:$0xf]
      %v4271 = vld [vmem:[%s670 + $0x8c] sm:$0xf]
      %v4272 = vld [vmem:[%s670 + $0x90] sm:$0xf]
      %v4273 = vld [vmem:[%s670 + $0x94] sm:$0xf]
      %v4274 = vld [vmem:[%s670 + $0x98] sm:$0xf]
      %v4275 = vld [vmem:[%s670 + $0x9c] sm:$0xf]
      %v4276 = vld [vmem:[%s670 + $0xa0] sm:$0xf]
      %v4277 = vld [vmem:[%s670 + $0xa4] sm:$0xf]
      %v4278 = vld [vmem:[%s670 + $0xa8] sm:$0xf]
      %v4279 = vld [vmem:[%s670 + $0xac] sm:$0xf]
      %v4280 = vld [vmem:[%s670 + $0xb0] sm:$0xf]
      %v4281 = vld [vmem:[%s670 + $0xb4] sm:$0xf]
      %v4282 = vld [vmem:[%s670 + $0xb8] sm:$0xf]
      %v4283 = vld [vmem:[%s670 + $0xbc] sm:$0xf]
      %v4284 = vld [vmem:[%s670 + $0xc0] sm:$0xf]
      %v4285 = vld [vmem:[%s670 + $0xc4] sm:$0xf]
      %v4286 = vld [vmem:[%s670 + $0xc8] sm:$0xf]
      %v4287 = vld [vmem:[%s670 + $0xcc] sm:$0xf]
      %v4288 = vld [vmem:[%s670 + $0xd0] sm:$0xf]
      %v4289 = vld [vmem:[%s670 + $0xd4] sm:$0xf]
      %v4290 = vld [vmem:[%s670 + $0xd8] sm:$0xf]
      %v4291 = vld [vmem:[%s670 + $0xdc] sm:$0xf]
      %v4292 = vld [vmem:[%s670 + $0xe0] sm:$0xf]
      %v4293 = vld [vmem:[%s670 + $0xe4] sm:$0xf]
      %v4294 = vld [vmem:[%s670 + $0xe8] sm:$0xf]
      %v4295 = vld [vmem:[%s670 + $0xec] sm:$0xf]
      %v4296 = vld [vmem:[%s670 + $0xf0] sm:$0xf]
      %v4297 = vld [vmem:[%s670 + $0xf4] sm:$0xf]
      %v4298 = vld [vmem:[%s670 + $0xf8] sm:$0xf]
      %v4299 = vld [vmem:[%s670 + $0xfc] sm:$0xf]
      %v4364 = vunpack.c.l.b16 %v4236
      %v4365 = vunpack.c.l.b16 %v4237
      %v4366 = vunpack.c.l.b16 %v4238
      %v4367 = vunpack.c.l.b16 %v4239
      %v4368 = vunpack.c.l.b16 %v4240
      %v4369 = vunpack.c.l.b16 %v4241
      %v4370 = vunpack.c.l.b16 %v4242
      %v4371 = vunpack.c.l.b16 %v4243
      %v4372 = vunpack.c.l.b16 %v4244
      %v4373 = vunpack.c.l.b16 %v4245
      %v4374 = vunpack.c.l.b16 %v4246
      %v4375 = vunpack.c.l.b16 %v4247
      %v4376 = vunpack.c.l.b16 %v4248
      %v4377 = vunpack.c.l.b16 %v4249
      %v4378 = vunpack.c.l.b16 %v4250
      %v4379 = vunpack.c.l.b16 %v4251
      %v4380 = vunpack.c.l.b16 %v4252
      %v4381 = vunpack.c.l.b16 %v4253
      %v4382 = vunpack.c.l.b16 %v4254
      %v4383 = vunpack.c.l.b16 %v4255
      %v4384 = vunpack.c.l.b16 %v4256
      %v4385 = vunpack.c.l.b16 %v4257
      %v4386 = vunpack.c.l.b16 %v4258
      %v4387 = vunpack.c.l.b16 %v4259
      %v4388 = vunpack.c.l.b16 %v4260
      %v4389 = vunpack.c.l.b16 %v4261
      %v4390 = vunpack.c.l.b16 %v4262
      %v4391 = vunpack.c.l.b16 %v4263
      %v4392 = vunpack.c.l.b16 %v4264
      %v4393 = vunpack.c.l.b16 %v4265
      %v4394 = vunpack.c.l.b16 %v4266
      %v4395 = vunpack.c.l.b16 %v4267
      %v4396 = vunpack.c.l.b16 %v4268
      %v4397 = vunpack.c.l.b16 %v4269
      %v4398 = vunpack.c.l.b16 %v4270
      %v4399 = vunpack.c.l.b16 %v4271
      %v4400 = vunpack.c.l.b16 %v4272
      %v4401 = vunpack.c.l.b16 %v4273
      %v4402 = vunpack.c.l.b16 %v4274
      %v4403 = vunpack.c.l.b16 %v4275
      %v4404 = vunpack.c.l.b16 %v4276
      %v4405 = vunpack.c.l.b16 %v4277
      %v4406 = vunpack.c.l.b16 %v4278
      %v4407 = vunpack.c.l.b16 %v4279
      %v4408 = vunpack.c.l.b16 %v4280
      %v4409 = vunpack.c.l.b16 %v4281
      %v4410 = vunpack.c.l.b16 %v4282
      %v4411 = vunpack.c.l.b16 %v4283
      %v4412 = vunpack.c.l.b16 %v4284
      %v4413 = vunpack.c.l.b16 %v4285
      %v4414 = vunpack.c.l.b16 %v4286
      %v4415 = vunpack.c.l.b16 %v4287
      %v4416 = vunpack.c.l.b16 %v4288
      %v4417 = vunpack.c.l.b16 %v4289
      %v4418 = vunpack.c.l.b16 %v4290
      %v4419 = vunpack.c.l.b16 %v4291
      %v4420 = vunpack.c.l.b16 %v4292
      %v4421 = vunpack.c.l.b16 %v4293
      %v4422 = vunpack.c.l.b16 %v4294
      %v4423 = vunpack.c.l.b16 %v4295
      %v4424 = vunpack.c.l.b16 %v4296
      %v4425 = vunpack.c.l.b16 %v4297
      %v4426 = vunpack.c.l.b16 %v4298
      %v4427 = vunpack.c.l.b16 %v4299
      %v4428 = vpack.c.b16 %v4365, %v4364
      %v4429 = vpack.c.b16 %v4367, %v4366
      %v4430 = vpack.c.b16 %v4369, %v4368
      %v4431 = vpack.c.b16 %v4371, %v4370
      %v4432 = vpack.c.b16 %v4373, %v4372
      %v4433 = vpack.c.b16 %v4375, %v4374
      %v4434 = vpack.c.b16 %v4377, %v4376
      %v4435 = vpack.c.b16 %v4379, %v4378
      %v4436 = vpack.c.b16 %v4381, %v4380
      %v4437 = vpack.c.b16 %v4383, %v4382
      %v4438 = vpack.c.b16 %v4385, %v4384
      %v4439 = vpack.c.b16 %v4387, %v4386
      %v4440 = vpack.c.b16 %v4389, %v4388
      %v4441 = vpack.c.b16 %v4391, %v4390
      %v4442 = vpack.c.b16 %v4393, %v4392
      %v4443 = vpack.c.b16 %v4395, %v4394
      %v4444 = vpack.c.b16 %v4397, %v4396
      %v4445 = vpack.c.b16 %v4399, %v4398
      %v4446 = vpack.c.b16 %v4401, %v4400
      %v4447 = vpack.c.b16 %v4403, %v4402
      %v4448 = vpack.c.b16 %v4405, %v4404
      %v4449 = vpack.c.b16 %v4407, %v4406
      %v4450 = vpack.c.b16 %v4409, %v4408
      %v4451 = vpack.c.b16 %v4411, %v4410
      %v4452 = vpack.c.b16 %v4413, %v4412
      %v4453 = vpack.c.b16 %v4415, %v4414
      %v4454 = vpack.c.b16 %v4417, %v4416
      %v4455 = vpack.c.b16 %v4419, %v4418
      %v4456 = vpack.c.b16 %v4421, %v4420
      %v4457 = vpack.c.b16 %v4423, %v4422
      %v4458 = vpack.c.b16 %v4425, %v4424
      %v4459 = vpack.c.b16 %v4427, %v4426
      %4492 = vmatprep.subr.bf16.mxu0 0
      %4493 = vmatpush1.bf16.msra.mxu0 %v4428
      %4494 = vmatprep.subr.bf16.mxu0 0
      %4495 = vmatpush1.bf16.msra.mxu0 %v4429
      %4496 = vmatprep.subr.bf16.mxu0 0
      %4497 = vmatpush1.bf16.msra.mxu0 %v4430
      %4498 = vmatprep.subr.bf16.mxu0 0
      %4499 = vmatpush1.bf16.msra.mxu0 %v4431
      %4500 = vmatprep.subr.bf16.mxu0 0
      %4501 = vmatpush1.bf16.msra.mxu0 %v4432
      %4502 = vmatprep.subr.bf16.mxu0 0
      %4503 = vmatpush1.bf16.msra.mxu0 %v4433
      %4504 = vmatprep.subr.bf16.mxu0 0
      %4505 = vmatpush1.bf16.msra.mxu0 %v4434
      %4506 = vmatprep.subr.bf16.mxu0 0
      %4507 = vmatpush1.bf16.msra.mxu0 %v4435
      %4508 = vmatprep.subr.bf16.mxu0 0
      %4509 = vmatpush1.bf16.msra.mxu0 %v4436
      %4510 = vmatprep.subr.bf16.mxu0 0
      %4511 = vmatpush1.bf16.msra.mxu0 %v4437
      %4512 = vmatprep.subr.bf16.mxu0 0
      %4513 = vmatpush1.bf16.msra.mxu0 %v4438
      %4514 = vmatprep.subr.bf16.mxu0 0
      %4515 = vmatpush1.bf16.msra.mxu0 %v4439
      %4516 = vmatprep.subr.bf16.mxu0 0
      %4517 = vmatpush1.bf16.msra.mxu0 %v4440
      %4518 = vmatprep.subr.bf16.mxu0 0
      %4519 = vmatpush1.bf16.msra.mxu0 %v4441
      %4520 = vmatprep.subr.bf16.mxu0 0
      %4521 = vmatpush1.bf16.msra.mxu0 %v4442
      %4522 = vmatprep.subr.bf16.mxu0 0
      %4523 = vmatpush1.bf16.msra.mxu0 %v4443
      %4524 = vmatprep.mubr.bf16.mxu0 %v4229
      %4525 = vmatmul.mubr.bf16.gmra.mrb[0].mxu0 %v4228
      %v4526 = vpop.f32.mrb[0].mxu0
      %v4527 = vadd.f32 0.0, %v4526
      %v4528 = vpop.f32.mrb[0].mxu0
      %v4529 = vpop.f32.mrb[0].mxu0
      %v4530 = vadd.f32 0.0, %v4529
      %v4531 = vpop.f32.mrb[0].mxu0
      %4532 = vmatprep.mubr.bf16.mxu0 %v4233
      %4533 = vmatmul.mubr.bf16.gmra.mrb[0].mxu0 %v4232
      %v4534 = vpop.f32.mrb[0].mxu0
      %v4535 = vadd.f32 0.0, %v4534
      %v4536 = vpop.f32.mrb[0].mxu0
      %v4537 = vpop.f32.mrb[0].mxu0
      %v4538 = vadd.f32 0.0, %v4537
      %v4539 = vpop.f32.mrb[0].mxu0
      %4540 = vdwg.mxu0
      %4541 = vmatprep.subr.bf16.mxu0 0
      %4542 = vmatpush1.bf16.msra.mxu0 %v4444
      %4543 = vmatprep.subr.bf16.mxu0 0
      %4544 = vmatpush1.bf16.msra.mxu0 %v4445
      %4545 = vmatprep.subr.bf16.mxu0 0
      %4546 = vmatpush1.bf16.msra.mxu0 %v4446
      %4547 = vmatprep.subr.bf16.mxu0 0
      %4548 = vmatpush1.bf16.msra.mxu0 %v4447
      %4549 = vmatprep.subr.bf16.mxu0 0
      %4550 = vmatpush1.bf16.msra.mxu0 %v4448
      %4551 = vmatprep.subr.bf16.mxu0 0
      %4552 = vmatpush1.bf16.msra.mxu0 %v4449
      %4553 = vmatprep.subr.bf16.mxu0 0
      %4554 = vmatpush1.bf16.msra.mxu0 %v4450
      %4555 = vmatprep.subr.bf16.mxu0 0
      %4556 = vmatpush1.bf16.msra.mxu0 %v4451
      %4557 = vmatprep.subr.bf16.mxu0 0
      %4558 = vmatpush1.bf16.msra.mxu0 %v4452
      %4559 = vmatprep.subr.bf16.mxu0 0
      %4560 = vmatpush1.bf16.msra.mxu0 %v4453
      %4561 = vmatprep.subr.bf16.mxu0 0
      %4562 = vmatpush1.bf16.msra.mxu0 %v4454
      %4563 = vmatprep.subr.bf16.mxu0 0
      %4564 = vmatpush1.bf16.msra.mxu0 %v4455
      %4565 = vmatprep.subr.bf16.mxu0 0
      %4566 = vmatpush1.bf16.msra.mxu0 %v4456
      %4567 = vmatprep.subr.bf16.mxu0 0
      %4568 = vmatpush1.bf16.msra.mxu0 %v4457
      %4569 = vmatprep.subr.bf16.mxu0 0
      %4570 = vmatpush1.bf16.msra.mxu0 %v4458
      %4571 = vmatprep.subr.bf16.mxu0 0
      %4572 = vmatpush1.bf16.msra.mxu0 %v4459
      %4573 = vmatprep.mubr.bf16.mxu0 %v4231
      %4574 = vmatmul.mubr.bf16.gmra.mrb[0].mxu0 %v4230
      %v4575 = vpop.f32.mrb[0].mxu0
      %v4576 = vadd.f32 %v4527, %v4575
      %v4577 = vpop.f32.mrb[0].mxu0
      %v4578 = vpop.f32.mrb[0].mxu0
      %v4579 = vadd.f32 %v4530, %v4578
      %v4580 = vpop.f32.mrb[0].mxu0
      %4581 = vmatprep.mubr.bf16.mxu0 %v4235
      %4582 = vmatmul.mubr.bf16.gmra.mrb[0].mxu0 %v4234
      %v4583 = vpop.f32.mrb[0].mxu0
      %v4584 = vadd.f32 %v4535, %v4583
      %v4585 = vpop.f32.mrb[0].mxu0
      %v4586 = vpop.f32.mrb[0].mxu0
      %v4587 = vadd.f32 %v4538, %v4586
      %v4588 = vpop.f32.mrb[0].mxu0
      %4589 = vdwg.mxu0
      %v4590 = vadd.f32 %v3410, %v4576
      %v4591 = vadd.f32 %v3411, %v4579
      %v4592 = vadd.f32 %v3412, %v4584
      %v4593 = vadd.f32 %v3413, %v4587
      %v4594 = vld [vmem:[%s673] sm:$0x1]
      %v4596 = vlaneseq
      %v4597 = vshrl.u32 %v4596, 7
      %v4598 = vsub.s32 0, %v4597
      %v4599 = vrot.slane %v4594, %v4598
      %v4601 = vadd.f32 %v4590, %v4599
      %v4602 = vadd.f32 %v4591, %v4599
      %v4603 = vadd.f32 %v4592, %v4599
      %v4604 = vadd.f32 %v4593, %v4599
      %4605 = vst [vmem:[%s678] sm:$0xff] %v4601
      %4606 = vst [vmem:[%s678 + $0x8] sm:$0xff] %v4602
      %4607 = vst [vmem:[%s678 + $0x10] sm:$0xff] %v4603
      %4608 = vst [vmem:[%s678 + $0x18] sm:$0xff] %v4604
      %p4609 = scmp.lt.s32.totalorder %s29, 1
      %s4610 = scalar_select %p4609, %s29, 1
      %s4611 = smul.addr %s4610, 4
      %s4612 = smul.addr %s4611, 8
      %s4613 = scalar_lea.vmem %s14, %s4612
      // Predicated region
      $region81: #{multicls_vit_forward.1} parent=75 // pred_check
        %p4614 = pneg %p409
      $region82: #{multicls_vit_forward.1} parent=75 // pred_check_branch
        %4616 = sbr.rel (%p4614) target = $region84
      $region83: #{multicls_vit_forward.1} parent=75 // pred_region
        _
      $region84: #{multicls_vit_forward.1} parent=75 // pred_fallthru
        _
    $region76: #{multicls_vit_forward.1} parent=5 // pred_fallthru
      _
    %p4617 = scmp.le.s32.totalorder 2, %s20
    // Predicated region
    $region85: #{multicls_vit_forward.1} parent=5 // pred_check
      %p4618 = pneg %p4617
    $region86: #{multicls_vit_forward.1} parent=5 // pred_check_branch
      %4620 = sbr.rel (%p4618) target = $region88
    $region87: #{multicls_vit_forward.1} parent=5 // pred_region
      %s4621 = ssub.s32 %s20, 2
      // Predicated region
      $region89: #{multicls_vit_forward.1} parent=87 // pred_check
        %p4622 = pneg %p415
      $region90: #{multicls_vit_forward.1} parent=87 // pred_check_branch
        %4624 = sbr.rel (%p4622) target = $region92
      $region91: #{multicls_vit_forward.1} parent=87 // pred_region
        %p4625 = scmp.lt.s32.totalorder %s31, 1
        %s4626 = scalar_select %p4625, %s31, 1
        %s4627 = smul.addr %s4626, 4
        %s4628 = smul.addr %s4627, 8
        %s4629 = scalar_lea.vmem %s14, %s4628
      $region92: #{multicls_vit_forward.1} parent=87 // pred_fallthru
        _
    $region88: #{multicls_vit_forward.1} parent=5 // pred_fallthru
      _
  $region6: #{multicls_vit_forward.1} parent=0 // loop_footer
    %s24 = sadd.s32 1, %s20
  $region7: #{multicls_vit_forward.1} parent=0 // loop_footer_branch
    %19 = sbr.rel target = $region3
  $region8: #{multicls_vit_forward.1} parent=0 // loop_exit
    _

</llo_original>
